<compile_context>
chip_gen: v6e
topology: v6e:2x2x1
jax: 0.10.0
libtpu: 0.0.40
codegen_flags: <defaults>
</compile_context>

<pallas_src>
import functools

import jax
import jax.numpy as jnp
from jax.experimental import pallas as pl
from jax.experimental.pallas import tpu as pltpu

BN_EPS = 1e-5
LN_EPS = 1e-5


# --------------------------- in-kernel helpers --------------------------------

def _mxu_dot(a, b):
    """bf16-in / f32-accumulate matmul (MXU-friendly on v5e/v6e/v7x)."""
    return jnp.dot(a.astype(jnp.bfloat16), b.astype(jnp.bfloat16),
                   preferred_element_type=jnp.float32)


def _mxu_dot_t(a, b):
    """a @ b.T without materializing the transpose (contract last dims)."""
    return jax.lax.dot_general(a.astype(jnp.bfloat16), b.astype(jnp.bfloat16),
                               (((1,), (1,)), ((), ())),
                               preferred_element_type=jnp.float32)


def _ln(x, g, b):
    mean = jnp.mean(x, axis=-1, keepdims=True)
    var = jnp.mean(jnp.square(x - mean), axis=-1, keepdims=True)
    return (x - mean) * jax.lax.rsqrt(var + LN_EPS) * g + b


# --------------------------- fused MLP kernel (pos_embed) ----------------------

def _mlp_kernel(*refs, activations):
    x_ref, o_ref = refs[0], refs[-1]
    h = x_ref[...].astype(jnp.float32)
    for i, act in enumerate(activations):
        w_ref, b_ref = refs[1 + 2 * i], refs[2 + 2 * i]
        h = _mxu_dot(h, w_ref[...]) + b_ref[...]
        if act == "relu":
            h = jnp.maximum(h, 0.0)
        elif act == "gelu":
            # TODO(synk): PyTorch nn.GELU default is exact erf; tanh approximation
            # used for Mosaic-safe lowering (difference ~1e-3).
            h = jax.nn.gelu(h, approximate=True)
    o_ref[...] = h.astype(o_ref.dtype)


def mlp(x, layers, tm=512):
    """Fused multi-layer (rows, K) MLP; single grid step at small M (no pad)."""
    M, K = x.shape
    Mt = M if M <= tm else tm
    grid_m = pl.cdiv(M, Mt)
    pad = grid_m * Mt - M
    xp = jnp.pad(x, ((0, pad), (0, 0))) if pad else x   # never triggers here

    in_specs = [pl.BlockSpec((Mt, K), lambda i: (i, 0))]
    args = [xp]
    acts = []
    for (w, b, act) in layers:
        kin, n = w.shape
        in_specs.append(pl.BlockSpec((kin, n), lambda i: (0, 0)))
        in_specs.append(pl.BlockSpec((1, n), lambda i: (0, 0)))
        args += [w, b]
        acts.append(act)
    n_out = layers[-1][0].shape[1]

    out = pl.pallas_call(
        functools.partial(_mlp_kernel, activations=tuple(acts)),
        out_shape=jax.ShapeDtypeStruct((grid_m * Mt, n_out), x.dtype),
        grid=(grid_m,),
        in_specs=in_specs,
        out_specs=pl.BlockSpec((Mt, n_out), lambda i: (i, 0)),
        compiler_params=pltpu.CompilerParams(dimension_semantics=("parallel",)),
    )(*args)
    return out[:M] if pad else out


# --------------------------- fused encoder kernel ------------------------------

def _encoder_kernel(x_ref, w1_ref, b1_ref, w2_ref, b2_ref,
                    w3g_ref, w3l_ref, b3_ref, w4_ref, b4_ref, o_ref, *, gt, s):
    x = x_ref[...].astype(jnp.float32)                          # (GT*S, 8)
    h1 = jnp.maximum(_mxu_dot(x, w1_ref[...]) + b1_ref[...], 0.0)   # conv1+BN+ReLU
    h2 = _mxu_dot(h1, w2_ref[...]) + b2_ref[...]                # conv2 -> (GT*S, 256)
    fglob = jnp.max(h2.reshape(gt, s, 256), axis=1)             # per-group max (GT, 256)
    # cat([global, local]) @ W3 == global @ W3[:256] + local @ W3[256:]
    g = _mxu_dot(fglob, w3g_ref[...])                           # (GT, 512)
    l = _mxu_dot(h2, w3l_ref[...]).reshape(gt, s, 512)          # (GT, S, 512)
    h3 = jnp.maximum(l + g[:, None, :] + b3_ref[...], 0.0)      # conv3+BN+ReLU
    h4 = _mxu_dot(h3.reshape(gt * s, 512), w4_ref[...]) + b4_ref[...]   # conv4
    o_ref[...] = jnp.max(h4.reshape(gt, s, -1), axis=1).astype(o_ref.dtype)


def _pick_gt(bg, s):
    """Groups per grid step: keep >=2 parallel steps (v7x megacore), cap VMEM rows."""
    cap = max(1, min(bg // 2 if bg >= 2 else bg, max(1, 2048 // s)))
    for cand in range(cap, 0, -1):
        if bg % cand == 0:
            return cand
    return 1


def encoder_fwd(neigh, p):
    """Point-MAE Encoder, fully fused: one pallas_call, tiled over groups."""
    B, G, S, _ = neigh.shape
    BG = B * G
    E = p["e_w4"].shape[1]
    x = neigh.reshape(BG * S, 3)
    x = jnp.pad(x, ((0, 0), (0, 5)))                            # xyz 3 -> 8 lanes, once

    GT = _pick_gt(BG, S)

    w_bytes = 2 * (8 * 128 + 128 * 256 + 2 * 256 * 512 + 512 * E) \
        + 4 * (128 + 256 + 512 + E)
    cost = pl.CostEstimate(
        flops=int(2 * BG * S * (8 * 128 + 128 * 256 + 256 * 512 + 512 * E)
                  + 2 * BG * 256 * 512),
        transcendentals=0,
        bytes_accessed=int(4 * (BG * S * 8 + BG * E) + w_bytes))

    const = lambda shape: pl.BlockSpec(shape, lambda i: (0, 0))
    out = pl.pallas_call(
        functools.partial(_encoder_kernel, gt=GT, s=S),
        out_shape=jax.ShapeDtypeStruct((BG, E), jnp.float32),
        grid=(BG // GT,),
        in_specs=[pl.BlockSpec((GT * S, 8), lambda i: (i, 0)),
                  const((8, 128)), const((1, 128)),
                  const((128, 256)), const((1, 256)),
                  const((256, 512)), const((256, 512)), const((1, 512)),
                  const((512, E)), const((1, E))],
        out_specs=pl.BlockSpec((GT, E), lambda i: (i, 0)),
        compiler_params=pltpu.CompilerParams(dimension_semantics=("parallel",)),
        cost_estimate=cost,
    )(x, p["e_w1"], p["e_b1"], p["e_w2"], p["e_b2"],
      p["e_w3g"], p["e_w3l"], p["e_b3"], p["e_w4"], p["e_b4"])
    return out.reshape(B, G, E)


# --------------------------- fused full-depth transformer ----------------------

def _blocks_kernel(x_ref, pos_ref, ln1g_ref, ln1b_ref, wqkv_ref,
                   wproj_ref, bproj_ref, ln2g_ref, ln2b_ref,
                   wfc1_ref, bfc1_ref, wfc2_ref, bfc2_ref, o_ref,
                   *, num_heads, scale, t_real):
    d = pl.program_id(1)

    # Depth 0: seed the resident token block from the input; afterwards x lives in
    # the output VMEM block across the whole depth axis (no HBM round trips).
    @pl.when(d == 0)
    def _():
        o_ref[...] = x_ref[...]

    xin = o_ref[0].astype(jnp.float32) + pos_ref[0].astype(jnp.float32)  # (Tp, D)
    Tp, D = xin.shape
    Dh = D // num_heads

    h = _ln(xin, ln1g_ref[0], ln1b_ref[0])
    qkv = _mxu_dot(h, wqkv_ref[0])                     # (Tp, 3D); qkv_bias=False

    # mask padded key columns out of the softmax
    key_pad = jax.lax.broadcasted_iota(jnp.int32, (Tp, Tp), 1) >= t_real

    heads = []
    for hd in range(num_heads):                        # unrolled; static lane slices
        q = qkv[:, hd * Dh:(hd + 1) * Dh]
        k = qkv[:, D + hd * Dh:D + (hd + 1) * Dh]
        v = qkv[:, 2 * D + hd * Dh:2 * D + (hd + 1) * Dh]
        s = _mxu_dot_t(q, k) * scale                   # (Tp, Tp), no K transpose
        s = jnp.where(key_pad, -1e30, s)
        s = s - jnp.max(s, axis=-1, keepdims=True)
        pr = jnp.exp(s)
        pr = pr * pl.reciprocal(jnp.sum(pr, axis=-1, keepdims=True), approx=True)
        heads.append(_mxu_dot(pr, v))                  # (Tp, Dh)

    # merge heads on the lane axis -> ONE (Tp,D)@(D,D) projection matmul
    attn = jnp.concatenate(heads, axis=-1)             # (Tp, D)
    attn = _mxu_dot(attn, wproj_ref[0]) + bproj_ref[0]

    x1 = xin + attn                                    # DropPath = identity (eval)
    h2 = _ln(x1, ln2g_ref[0], ln2b_ref[0])
    f = jax.nn.gelu(_mxu_dot(h2, wfc1_ref[0]) + bfc1_ref[0], approximate=True)
    f = _mxu_dot(f, wfc2_ref[0]) + bfc2_ref[0]
    o_ref[0] = (x1 + f).astype(o_ref.dtype)


def transformer_blocks(x, pos, bp, num_heads, t_real):
    """All `depth` blocks in one pallas_call; grid=(B, depth)=(parallel, arbitrary)."""
    B, Tp, D = x.shape
    depth = bp["w_qkv"].shape[0]
    scale = float((D // num_heads) ** -0.5)

    tok = lambda: pl.BlockSpec((1, Tp, D), lambda b, d: (b, 0, 0))
    wspec = lambda k, n: pl.BlockSpec((1, k, n), lambda b, d: (d, 0, 0))
    vspec = lambda n: pl.BlockSpec((1, 1, n), lambda b, d: (d, 0, 0))

    w_elems = depth * (3 * D * D + D * D + 8 * D * D)
    cost = pl.CostEstimate(
        flops=int(B * depth * 2 * Tp * (3 * D * D + 2 * Tp * D + D * D + 8 * D * D)),
        transcendentals=int(B * depth * (num_heads * Tp * Tp + Tp * 4 * D)),
        bytes_accessed=int(4 * 3 * B * Tp * D + 2 * w_elems + 4 * depth * 14 * D))

    return pl.pallas_call(
        functools.partial(_blocks_kernel, num_heads=num_heads, scale=scale,
                          t_real=t_real),
        out_shape=jax.ShapeDtypeStruct((B, Tp, D), x.dtype),
        grid=(B, depth),
        in_specs=[tok(), tok(),
                  vspec(D), vspec(D),
                  wspec(D, 3 * D),
                  wspec(D, D), vspec(D),
                  vspec(D), vspec(D),
                  wspec(D, 4 * D), vspec(4 * D),
                  wspec(4 * D, D), vspec(D)],
        out_specs=pl.BlockSpec((1, Tp, D), lambda b, d: (b, 0, 0)),
        compiler_params=pltpu.CompilerParams(
            dimension_semantics=("parallel", "arbitrary")),
        cost_estimate=cost,
    )(x, pos,
      bp["ln1_g"], bp["ln1_b"], bp["w_qkv"],
      bp["w_proj"], bp["b_proj"], bp["ln2_g"], bp["ln2_b"],
      bp["w_fc1"], bp["b_fc1"], bp["w_fc2"], bp["b_fc2"])


# --------------------------- fused tail (LN + pool + cls head) -----------------

def _tail_kernel(x_ref, ng_ref, nb_ref, w1_ref, b1_ref, w2_ref, b2_ref,
                 w3_ref, b3_ref, o_ref, *, t_real):
    x = x_ref[...].astype(jnp.float32)                 # (B, Tp, D)
    B, Tp, D = x.shape
    xf = _ln(x, ng_ref[...], nb_ref[...])              # final LayerNorm

    tok_id = jax.lax.broadcasted_iota(jnp.int32, (B, Tp, D), 1)
    grp_mask = jnp.logical_and(tok_id >= 3, tok_id < t_real)
    gmax = jnp.max(jnp.where(grp_mask, xf, -1e30), axis=1)      # max over group tokens

    f = jnp.concatenate([xf[:, 0], xf[:, 1], xf[:, 2], gmax], axis=-1)   # (B, 4D)
    h = jnp.maximum(_mxu_dot(f, w1_ref[...]) + b1_ref[...], 0.0)   # Linear+BN+ReLU
    h = jnp.maximum(_mxu_dot(h, w2_ref[...]) + b2_ref[...], 0.0)   # Linear+BN+ReLU
    o_ref[...] = (_mxu_dot(h, w3_ref[...]) + b3_ref[...]).astype(o_ref.dtype)


def tail_fwd(x, p, t_real, cls_dim):
    B, Tp, D = x.shape
    cls_pad = p["h_w3"].shape[1]                       # lane-dense (128) output slab
    c2 = lambda s: pl.BlockSpec(s, lambda i: (0, 0))
    c3 = lambda s: pl.BlockSpec(s, lambda i: (0, 0, 0))

    out = pl.pallas_call(
        functools.partial(_tail_kernel, t_real=t_real),
        out_shape=jax.ShapeDtypeStruct((B, cls_pad), x.dtype),
        grid=(1,),
        in_specs=[c3((B, Tp, D)),
                  c2((1, D)), c2((1, D)),
                  c2((4 * D, 256)), c2((1, 256)),
                  c2((256, 256)), c2((1, 256)),
                  c2((256, cls_pad)), c2((1, cls_pad))],
        out_specs=pl.BlockSpec((B, cls_pad), lambda i: (0, 0)),
    )(x, p["norm_g"], p["norm_b"], p["h_w1"], p["h_b1"],
      p["h_w2"], p["h_b2"], p["h_w3"], p["h_b3"])
    return out[:, :cls_dim]                            # slice real logits outside


# --------------------------- Grouping (plain JAX glue) --------------------------
# TODO(synk): FPS + kNN gather are data-dependent indexing; kept in plain JAX.

def fps(xyz, n_samples):
    """Farthest point sampling, seeded at index 0 (matches pointnet2 fps)."""
    B, N, _ = xyz.shape

    def gather(p, i):
        return p[i]

    def body(i, state):
        dists, idxs, last = state
        last_pt = jax.vmap(gather)(xyz, last)                    # (B, 3)
        d = jnp.sum((xyz - last_pt[:, None, :]) ** 2, axis=-1)   # (B, N)
        dists = jnp.minimum(dists, d)
        nxt = jnp.argmax(dists, axis=-1).astype(jnp.int32)
        idxs = idxs.at[:, i].set(nxt)
        return dists, idxs, nxt

    dists = jnp.full((B, N), jnp.inf, dtype=jnp.float32)
    idxs = jnp.zeros((B, n_samples), dtype=jnp.int32)
    last = jnp.zeros((B,), dtype=jnp.int32)
    _, idxs, _ = jax.lax.fori_loop(1, n_samples, body, (dists, idxs, last))
    return jax.vmap(gather)(xyz, idxs)                            # (B, G, 3)


def knn_group(xyz, center, k):
    d = (jnp.sum(center ** 2, -1, keepdims=True)
         + jnp.sum(xyz ** 2, -1)[:, None, :]
         - 2.0 * jnp.einsum("bgc,bnc->bgn", center, xyz))
    _, idx = jax.lax.top_k(-d, k)                                 # (B, G, k)
    neigh = jax.vmap(lambda p, i: p[i])(xyz, idx)                 # (B, G, k, 3)
    return neigh - center[:, :, None, :]


# --------------------------- Model pieces ---------------------------------------

def pos_embed_fwd(center, p):
    B, G, _ = center.shape
    x = jnp.pad(center.reshape(B * G, 3), ((0, 0), (0, 5)))       # 3 -> 8 lanes, once
    x = mlp(x, [(p["p_w1"], p["p_b1"], "gelu"),
                (p["p_w2"], p["p_b2"], "none")])
    return x.reshape(B, G, -1)


def forward(params, pts, *, cfg):
    B = pts.shape[0]
    D = cfg["trans_dim"]
    G = cfg["num_group"]

    center = fps(pts, G)                                          # (B, G, 3)
    neigh = knn_group(pts, center, cfg["group_size"])             # (B, G, S, 3)
    group_tokens = encoder_fwd(neigh, params)                     # (B, G, D)
    pos_g = pos_embed_fwd(center, params)                         # (B, G, D)

    def tok(t):
        return jnp.broadcast_to(t, (B, 1, D))

    x = jnp.concatenate([tok(params["cls_token"]), tok(params["img_token"]),
                         tok(params["text_token"]), group_tokens], axis=1)
    pos = jnp.concatenate([tok(params["cls_pos"]), tok(params["img_pos"]),
                           tok(params["text_pos"]), pos_g], axis=1)

    T = x.shape[1]                                                # 3 + G real tokens
    Tp = ((T + 7) // 8) * 8                                       # sublane-aligned
    if Tp != T:
        x = jnp.pad(x, ((0, 0), (0, Tp - T), (0, 0)))
        pos = jnp.pad(pos, ((0, 0), (0, Tp - T), (0, 0)))

    x = transformer_blocks(x, pos, params["blocks"], cfg["num_heads"], T)
    return tail_fwd(x, params, T, cfg["cls_dim"])


# --------------------------- Parameter init -------------------------------------

def init_params(key, cfg):
    D = cfg["trans_dim"]
    E = cfg["encoder_dims"]
    depth = cfg["depth"]
    cls_pad = -(-cfg["cls_dim"] // 128) * 128
    keys = iter(jax.random.split(key, 64))

    def w(shape, std=0.02):
        return (std * jax.random.normal(next(keys), shape)).astype(jnp.float32)

    def wb(shape, std=0.02):                  # matmul weights stored bf16
        return w(shape, std).astype(jnp.bfloat16)

    def zeros(shape):
        return jnp.zeros(shape, jnp.float32)

    def ones(shape):
        return jnp.ones(shape, jnp.float32)

    def pad_rows(wmat, rows):                 # pre-pad K=3 weights to 8 rows
        return jnp.pad(wmat, ((0, rows - wmat.shape[0]), (0, 0)))

    # TODO(synk): eval-mode BatchNorm1d (gamma=1, beta=0, running mean 0 / var 1)
    # folded into the preceding conv/linear as a scale; loading a real checkpoint
    # needs full per-channel scale+shift folding (bias scaled too).
    bn_s = float(1.0 / jnp.sqrt(1.0 + BN_EPS))

    p = dict(
        # Encoder (Conv1d weights stored transposed as (C_in, C_out), bf16)
        e_w1=(pad_rows(w((3, 128)), 8) * bn_s).astype(jnp.bfloat16), e_b1=zeros((1, 128)),
        e_w2=wb((128, 256)), e_b2=zeros((1, 256)),
        e_w3g=(w((256, 512)) * bn_s).astype(jnp.bfloat16),
        e_w3l=(w((256, 512)) * bn_s).astype(jnp.bfloat16), e_b3=zeros((1, 512)),
        e_w4=wb((512, E)), e_b4=zeros((1, E)),
        # Tokens / positional tokens
        cls_token=zeros((1, 1, D)),
        img_token=w((1, 1, D)), text_token=w((1, 1, D)),
        cls_pos=w((1, 1, D)), img_pos=w((1, 1, D)), text_pos=w((1, 1, D)),
        # pos_embed MLP
        p_w1=pad_rows(w((3, 128)), 8).astype(jnp.bfloat16), p_b1=zeros((1, 128)),
        p_w2=wb((128, D)), p_b2=zeros((1, D)),
        # Final LayerNorm
        norm_g=ones((1, D)), norm_b=zeros((1, D)),
        # cls_head_finetune (BN folded; last layer lane-padded to 128 columns)
        h_w1=(w((D * 4, 256)) * bn_s).astype(jnp.bfloat16), h_b1=zeros((1, 256)),
        h_w2=(w((256, 256)) * bn_s).astype(jnp.bfloat16), h_b2=zeros((1, 256)),
        h_w3=jnp.pad(w((256, cfg["cls_dim"])),
                     ((0, 0), (0, cls_pad - cfg["cls_dim"]))).astype(jnp.bfloat16),
        h_b3=zeros((1, cls_pad)),
    )

    # Transformer blocks: all per-block weights stacked on a leading depth axis so
    # the whole stack runs as a single pallas_call (depth grid axis = "arbitrary").
    p["blocks"] = dict(
        ln1_g=ones((depth, 1, D)), ln1_b=zeros((depth, 1, D)),
        w_qkv=wb((depth, D, 3 * D)),                 # qkv_bias=False -> no bias
        w_proj=wb((depth, D, D)), b_proj=zeros((depth, 1, D)),
        ln2_g=ones((depth, 1, D)), ln2_b=zeros((depth, 1, D)),
        w_fc1=wb((depth, D, 4 * D)), b_fc1=zeros((depth, 1, 4 * D)),
        w_fc2=wb((depth, 4 * D, D)), b_fc2=zeros((depth, 1, D)),
    )
    return p


# --------------------------- Main -------------------------------------------------

if __name__ == "__main__":
    cfg = dict(trans_dim=32, depth=2, num_heads=4, group_size=16, num_group=8,
               encoder_dims=32, cls_dim=10, drop_path_rate=0.1)

    key = jax.random.PRNGKey(0)
    k_params, k_pts = jax.random.split(key)
    params = init_params(k_params, cfg)
    pts = jax.random.normal(k_pts, (2, 128, 3), dtype=jnp.float32)  # (B, N, 3) point cloud

    fwd = jax.jit(functools.partial(forward, cfg=cfg))
    out = fwd(params, pts)
    out = jax.block_until_ready(out)

    assert out.shape == (2, cfg["cls_dim"]), out.shape
    assert jnp.all(jnp.isfinite(out))
    print("KERNEL_OK")
</pallas_src>

<mosaic_0001>
module attributes {stable_mosaic.version = 11 : i64} {
  func.func @_encoder_kernel(%arg0: i32, %arg1: memref<128x8xf32, #tpu.memory_space<vmem>>, %arg2: memref<8x128xbf16, #tpu.memory_space<vmem>>, %arg3: memref<1x128xf32, #tpu.memory_space<vmem>>, %arg4: memref<128x256xbf16, #tpu.memory_space<vmem>>, %arg5: memref<1x256xf32, #tpu.memory_space<vmem>>, %arg6: memref<256x512xbf16, #tpu.memory_space<vmem>>, %arg7: memref<256x512xbf16, #tpu.memory_space<vmem>>, %arg8: memref<1x512xf32, #tpu.memory_space<vmem>>, %arg9: memref<512x32xbf16, #tpu.memory_space<vmem>>, %arg10: memref<1x32xf32, #tpu.memory_space<vmem>>, %arg11: memref<8x32xf32, #tpu.memory_space<vmem>>) attributes {dimension_semantics = [#tpu.dimension_semantics<parallel>], iteration_bounds = array<i64: 2>, scalar_prefetch = 0 : i64, scratch_operands = 0 : i64, tpu.core_type = #tpu.core_type<tc>, window_params = [{transform_indices = @transform_0, window_bounds = array<i64: 128, 8>}, {pipeline_mode = #tpu.pipeline_mode<synchronous>, transform_indices = @transform_1, window_bounds = array<i64: 8, 128>}, {pipeline_mode = #tpu.pipeline_mode<synchronous>, transform_indices = @transform_2, window_bounds = array<i64: 1, 128>}, {pipeline_mode = #tpu.pipeline_mode<synchronous>, transform_indices = @transform_3, window_bounds = array<i64: 128, 256>}, {pipeline_mode = #tpu.pipeline_mode<synchronous>, transform_indices = @transform_4, window_bounds = array<i64: 1, 256>}, {pipeline_mode = #tpu.pipeline_mode<synchronous>, transform_indices = @transform_5, window_bounds = array<i64: 256, 512>}, {pipeline_mode = #tpu.pipeline_mode<synchronous>, transform_indices = @transform_6, window_bounds = array<i64: 256, 512>}, {pipeline_mode = #tpu.pipeline_mode<synchronous>, transform_indices = @transform_7, window_bounds = array<i64: 1, 512>}, {pipeline_mode = #tpu.pipeline_mode<synchronous>, transform_indices = @transform_8, window_bounds = array<i64: 512, 32>}, {pipeline_mode = #tpu.pipeline_mode<synchronous>, transform_indices = @transform_9, window_bounds = array<i64: 1, 32>}, {transform_indices = @transform_10, window_bounds = array<i64: 8, 32>}]} {
    %c0 = arith.constant 0 : index
    %c0_0 = arith.constant 0 : index
    %0 = vector.load %arg1[%c0, %c0_0] : memref<128x8xf32, #tpu.memory_space<vmem>>, vector<128x8xf32>
    %c0_1 = arith.constant 0 : index
    %c0_2 = arith.constant 0 : index
    %1 = vector.load %arg2[%c0_1, %c0_2] : memref<8x128xbf16, #tpu.memory_space<vmem>>, vector<8x128xbf16>
    %2 = arith.truncf %0 : vector<128x8xf32> to vector<128x8xbf16>
    %cst = arith.constant dense<0.000000e+00> : vector<128x128xf32>
    %3 = tpu.matmul %2, %1, %cst {dimension_numbers = #tpu.dot_dimension_numbers<[1], [0], [0], [1], [0, 0, 1, 1], [], []>} : vector<128x8xbf16>, vector<8x128xbf16>, vector<128x128xf32> -> vector<128x128xf32>
    %c0_3 = arith.constant 0 : index
    %c0_4 = arith.constant 0 : index
    %4 = vector.load %arg3[%c0_3, %c0_4] : memref<1x128xf32, #tpu.memory_space<vmem>>, vector<1x128xf32>
    %5 = vector.broadcast %4 : vector<1x128xf32> to vector<128x128xf32>
    %6 = arith.addf %3, %5 : vector<128x128xf32>
    %cst_5 = arith.constant 0.000000e+00 : f32
    %7 = vector.broadcast %cst_5 : f32 to vector<128x128xf32>
    %8 = arith.maximumf %6, %7 : vector<128x128xf32>
    %c0_6 = arith.constant 0 : index
    %c0_7 = arith.constant 0 : index
    %9 = vector.load %arg4[%c0_6, %c0_7] : memref<128x256xbf16, #tpu.memory_space<vmem>>, vector<128x256xbf16>
    %10 = arith.truncf %8 : vector<128x128xf32> to vector<128x128xbf16>
    %cst_8 = arith.constant dense<0.000000e+00> : vector<128x256xf32>
    %11 = tpu.matmul %10, %9, %cst_8 {dimension_numbers = #tpu.dot_dimension_numbers<[1], [0], [0], [1], [0, 0, 1, 1], [], []>} : vector<128x128xbf16>, vector<128x256xbf16>, vector<128x256xf32> -> vector<128x256xf32>
    %c0_9 = arith.constant 0 : index
    %c0_10 = arith.constant 0 : index
    %12 = vector.load %arg5[%c0_9, %c0_10] : memref<1x256xf32, #tpu.memory_space<vmem>>, vector<1x256xf32>
    %13 = vector.broadcast %12 : vector<1x256xf32> to vector<128x256xf32>
    %14 = arith.addf %11, %13 : vector<128x256xf32>
    %15 = vector.shape_cast %14 : vector<128x256xf32> to vector<8x16x256xf32>
    %cst_11 = arith.constant dense<0xFF800000> : vector<8x256xf32>
    %16 = vector.multi_reduction <maximumf>, %15, %cst_11 [1] : vector<8x16x256xf32> to vector<8x256xf32>
    %c0_12 = arith.constant 0 : index
    %c0_13 = arith.constant 0 : index
    %17 = vector.load %arg6[%c0_12, %c0_13] : memref<256x512xbf16, #tpu.memory_space<vmem>>, vector<256x512xbf16>
    %18 = arith.truncf %16 : vector<8x256xf32> to vector<8x256xbf16>
    %cst_14 = arith.constant dense<0.000000e+00> : vector<8x512xf32>
    %19 = tpu.matmul %18, %17, %cst_14 {dimension_numbers = #tpu.dot_dimension_numbers<[1], [0], [0], [1], [0, 0, 1, 1], [], []>} : vector<8x256xbf16>, vector<256x512xbf16>, vector<8x512xf32> -> vector<8x512xf32>
    %c0_15 = arith.constant 0 : index
    %c0_16 = arith.constant 0 : index
    %20 = vector.load %arg7[%c0_15, %c0_16] : memref<256x512xbf16, #tpu.memory_space<vmem>>, vector<256x512xbf16>
    %21 = arith.truncf %14 : vector<128x256xf32> to vector<128x256xbf16>
    %cst_17 = arith.constant dense<0.000000e+00> : vector<128x512xf32>
    %22 = tpu.matmul %21, %20, %cst_17 {dimension_numbers = #tpu.dot_dimension_numbers<[1], [0], [0], [1], [0, 0, 1, 1], [], []>} : vector<128x256xbf16>, vector<256x512xbf16>, vector<128x512xf32> -> vector<128x512xf32>
    %23 = vector.shape_cast %22 : vector<128x512xf32> to vector<8x16x512xf32>
    %24 = vector.shape_cast %19 : vector<8x512xf32> to vector<8x1x512xf32>
    %25 = vector.broadcast %24 : vector<8x1x512xf32> to vector<8x16x512xf32>
    %26 = arith.addf %23, %25 : vector<8x16x512xf32>
    %c0_18 = arith.constant 0 : index
    %c0_19 = arith.constant 0 : index
    %27 = vector.load %arg8[%c0_18, %c0_19] : memref<1x512xf32, #tpu.memory_space<vmem>>, vector<1x512xf32>
    %28 = vector.shape_cast %27 : vector<1x512xf32> to vector<1x1x512xf32>
    %29 = vector.broadcast %28 : vector<1x1x512xf32> to vector<8x16x512xf32>
    %30 = arith.addf %26, %29 : vector<8x16x512xf32>
    %cst_20 = arith.constant 0.000000e+00 : f32
    %31 = vector.broadcast %cst_20 : f32 to vector<8x16x512xf32>
    %32 = arith.maximumf %30, %31 : vector<8x16x512xf32>
    %33 = vector.shape_cast %32 : vector<8x16x512xf32> to vector<128x512xf32>
    %c0_21 = arith.constant 0 : index
    %c0_22 = arith.constant 0 : index
    %34 = vector.load %arg9[%c0_21, %c0_22] : memref<512x32xbf16, #tpu.memory_space<vmem>>, vector<512x32xbf16>
    %35 = arith.truncf %33 : vector<128x512xf32> to vector<128x512xbf16>
    %cst_23 = arith.constant dense<0.000000e+00> : vector<128x32xf32>
    %36 = tpu.matmul %35, %34, %cst_23 {dimension_numbers = #tpu.dot_dimension_numbers<[1], [0], [0], [1], [0, 0, 1, 1], [], []>} : vector<128x512xbf16>, vector<512x32xbf16>, vector<128x32xf32> -> vector<128x32xf32>
    %c0_24 = arith.constant 0 : index
    %c0_25 = arith.constant 0 : index
    %37 = vector.load %arg10[%c0_24, %c0_25] : memref<1x32xf32, #tpu.memory_space<vmem>>, vector<1x32xf32>
    %38 = vector.broadcast %37 : vector<1x32xf32> to vector<128x32xf32>
    %39 = arith.addf %36, %38 : vector<128x32xf32>
    %40 = vector.shape_cast %39 : vector<128x32xf32> to vector<8x16x32xf32>
    %cst_26 = arith.constant dense<0xFF800000> : vector<8x32xf32>
    %41 = vector.multi_reduction <maximumf>, %40, %cst_26 [1] : vector<8x16x32xf32> to vector<8x32xf32>
    %c0_27 = arith.constant 0 : index
    %c0_28 = arith.constant 0 : index
    %42 = vector.load %arg11[%c0_27, %c0_28] : memref<8x32xf32, #tpu.memory_space<vmem>>, vector<8x32xf32>
    tpu.vector_store %arg11[%c0_27, %c0_28], %41 {strides = array<i32>} : memref<8x32xf32, #tpu.memory_space<vmem>>, vector<8x32xf32>,
    return
  }
  func.func @transform_0(%arg0: i32) -> (i32, i32) {
    %c0_i32 = arith.constant 0 : i32
    %c0_i32_0 = arith.constant 0 : i32
    return %arg0, %c0_i32 : i32, i32
  }
  func.func @transform_1(%arg0: i32) -> (i32, i32) {
    %c0_i32 = arith.constant 0 : i32
    %c0_i32_0 = arith.constant 0 : i32
    %c0_i32_1 = arith.constant 0 : i32
    return %c0_i32, %c0_i32_0 : i32, i32
  }
  func.func @transform_2(%arg0: i32) -> (i32, i32) {
    %c0_i32 = arith.constant 0 : i32
    %c0_i32_0 = arith.constant 0 : i32
    %c0_i32_1 = arith.constant 0 : i32
    return %c0_i32, %c0_i32_0 : i32, i32
  }
  func.func @transform_3(%arg0: i32) -> (i32, i32) {
    %c0_i32 = arith.constant 0 : i32
    %c0_i32_0 = arith.constant 0 : i32
    %c0_i32_1 = arith.constant 0 : i32
    return %c0_i32, %c0_i32_0 : i32, i32
  }
  func.func @transform_4(%arg0: i32) -> (i32, i32) {
    %c0_i32 = arith.constant 0 : i32
    %c0_i32_0 = arith.constant 0 : i32
    %c0_i32_1 = arith.constant 0 : i32
    return %c0_i32, %c0_i32_0 : i32, i32
  }
  func.func @transform_5(%arg0: i32) -> (i32, i32) {
    %c0_i32 = arith.constant 0 : i32
    %c0_i32_0 = arith.constant 0 : i32
    %c0_i32_1 = arith.constant 0 : i32
    return %c0_i32, %c0_i32_0 : i32, i32
  }
  func.func @transform_6(%arg0: i32) -> (i32, i32) {
    %c0_i32 = arith.constant 0 : i32
    %c0_i32_0 = arith.constant 0 : i32
    %c0_i32_1 = arith.constant 0 : i32
    return %c0_i32, %c0_i32_0 : i32, i32
  }
  func.func @transform_7(%arg0: i32) -> (i32, i32) {
    %c0_i32 = arith.constant 0 : i32
    %c0_i32_0 = arith.constant 0 : i32
    %c0_i32_1 = arith.constant 0 : i32
    return %c0_i32, %c0_i32_0 : i32, i32
  }
  func.func @transform_8(%arg0: i32) -> (i32, i32) {
    %c0_i32 = arith.constant 0 : i32
    %c0_i32_0 = arith.constant 0 : i32
    %c0_i32_1 = arith.constant 0 : i32
    return %c0_i32, %c0_i32_0 : i32, i32
  }
  func.func @transform_9(%arg0: i32) -> (i32, i32) {
    %c0_i32 = arith.constant 0 : i32
    %c0_i32_0 = arith.constant 0 : i32
    %c0_i32_1 = arith.constant 0 : i32
    return %c0_i32, %c0_i32_0 : i32, i32
  }
  func.func @transform_10(%arg0: i32) -> (i32, i32) {
    %c0_i32 = arith.constant 0 : i32
    %c0_i32_0 = arith.constant 0 : i32
    return %arg0, %c0_i32 : i32, i32
  }
}

module attributes {stable_mosaic.version = 11 : i64} {
  func.func @_mlp_kernel(%arg0: i32, %arg1: memref<16x8xf32, #tpu.memory_space<vmem>>, %arg2: memref<8x128xbf16, #tpu.memory_space<vmem>>, %arg3: memref<1x128xf32, #tpu.memory_space<vmem>>, %arg4: memref<128x32xbf16, #tpu.memory_space<vmem>>, %arg5: memref<1x32xf32, #tpu.memory_space<vmem>>, %arg6: memref<16x32xf32, #tpu.memory_space<vmem>>) attributes {dimension_semantics = [#tpu.dimension_semantics<parallel>], iteration_bounds = array<i64: 1>, scalar_prefetch = 0 : i64, scratch_operands = 0 : i64, tpu.core_type = #tpu.core_type<tc>, window_params = [{transform_indices = @transform_0, window_bounds = array<i64: 16, 8>}, {pipeline_mode = #tpu.pipeline_mode<synchronous>, transform_indices = @transform_1, window_bounds = array<i64: 8, 128>}, {pipeline_mode = #tpu.pipeline_mode<synchronous>, transform_indices = @transform_2, window_bounds = array<i64: 1, 128>}, {pipeline_mode = #tpu.pipeline_mode<synchronous>, transform_indices = @transform_3, window_bounds = array<i64: 128, 32>}, {pipeline_mode = #tpu.pipeline_mode<synchronous>, transform_indices = @transform_4, window_bounds = array<i64: 1, 32>}, {transform_indices = @transform_5, window_bounds = array<i64: 16, 32>}]} {
    %c0 = arith.constant 0 : index
    %c0_0 = arith.constant 0 : index
    %0 = vector.load %arg1[%c0, %c0_0] : memref<16x8xf32, #tpu.memory_space<vmem>>, vector<16x8xf32>
    %c0_1 = arith.constant 0 : index
    %c0_2 = arith.constant 0 : index
    %1 = vector.load %arg2[%c0_1, %c0_2] : memref<8x128xbf16, #tpu.memory_space<vmem>>, vector<8x128xbf16>
    %2 = arith.truncf %0 : vector<16x8xf32> to vector<16x8xbf16>
    %cst = arith.constant dense<0.000000e+00> : vector<16x128xf32>
    %3 = tpu.matmul %2, %1, %cst {dimension_numbers = #tpu.dot_dimension_numbers<[1], [0], [0], [1], [0, 0, 1, 1], [], []>} : vector<16x8xbf16>, vector<8x128xbf16>, vector<16x128xf32> -> vector<16x128xf32>
    %c0_3 = arith.constant 0 : index
    %c0_4 = arith.constant 0 : index
    %4 = vector.load %arg3[%c0_3, %c0_4] : memref<1x128xf32, #tpu.memory_space<vmem>>, vector<1x128xf32>
    %5 = vector.broadcast %4 : vector<1x128xf32> to vector<16x128xf32>
    %6 = arith.addf %3, %5 : vector<16x128xf32>
    %7 = arith.mulf %6, %6 : vector<16x128xf32>
    %8 = arith.mulf %6, %7 : vector<16x128xf32>
    %cst_5 = arith.constant 4.471500e-02 : f32
    %9 = vector.broadcast %cst_5 : f32 to vector<16x128xf32>
    %10 = arith.mulf %9, %8 : vector<16x128xf32>
    %11 = arith.addf %6, %10 : vector<16x128xf32>
    %cst_6 = arith.constant 0.797884583 : f32
    %12 = vector.broadcast %cst_6 : f32 to vector<16x128xf32>
    %13 = arith.mulf %12, %11 : vector<16x128xf32>
    %14 = math.tanh %13 : vector<16x128xf32>
    %cst_7 = arith.constant 1.000000e+00 : f32
    %15 = vector.broadcast %cst_7 : f32 to vector<16x128xf32>
    %16 = arith.addf %15, %14 : vector<16x128xf32>
    %cst_8 = arith.constant 5.000000e-01 : f32
    %17 = vector.broadcast %cst_8 : f32 to vector<16x128xf32>
    %18 = arith.mulf %17, %16 : vector<16x128xf32>
    %19 = arith.mulf %6, %18 : vector<16x128xf32>
    %c0_9 = arith.constant 0 : index
    %c0_10 = arith.constant 0 : index
    %20 = vector.load %arg4[%c0_9, %c0_10] : memref<128x32xbf16, #tpu.memory_space<vmem>>, vector<128x32xbf16>
    %21 = arith.truncf %19 : vector<16x128xf32> to vector<16x128xbf16>
    %cst_11 = arith.constant dense<0.000000e+00> : vector<16x32xf32>
    %22 = tpu.matmul %21, %20, %cst_11 {dimension_numbers = #tpu.dot_dimension_numbers<[1], [0], [0], [1], [0, 0, 1, 1], [], []>} : vector<16x128xbf16>, vector<128x32xbf16>, vector<16x32xf32> -> vector<16x32xf32>
    %c0_12 = arith.constant 0 : index
    %c0_13 = arith.constant 0 : index
    %23 = vector.load %arg5[%c0_12, %c0_13] : memref<1x32xf32, #tpu.memory_space<vmem>>, vector<1x32xf32>
    %24 = vector.broadcast %23 : vector<1x32xf32> to vector<16x32xf32>
    %25 = arith.addf %22, %24 : vector<16x32xf32>
    %c0_14 = arith.constant 0 : index
    %c0_15 = arith.constant 0 : index
    %26 = vector.load %arg6[%c0_14, %c0_15] : memref<16x32xf32, #tpu.memory_space<vmem>>, vector<16x32xf32>
    tpu.vector_store %arg6[%c0_14, %c0_15], %25 {strides = array<i32>} : memref<16x32xf32, #tpu.memory_space<vmem>>, vector<16x32xf32>,
    return
  }
  func.func @transform_0(%arg0: i32) -> (i32, i32) {
    %c0_i32 = arith.constant 0 : i32
    %c0_i32_0 = arith.constant 0 : i32
    return %arg0, %c0_i32 : i32, i32
  }
  func.func @transform_1(%arg0: i32) -> (i32, i32) {
    %c0_i32 = arith.constant 0 : i32
    %c0_i32_0 = arith.constant 0 : i32
    %c0_i32_1 = arith.constant 0 : i32
    return %c0_i32, %c0_i32_0 : i32, i32
  }
  func.func @transform_2(%arg0: i32) -> (i32, i32) {
    %c0_i32 = arith.constant 0 : i32
    %c0_i32_0 = arith.constant 0 : i32
    %c0_i32_1 = arith.constant 0 : i32
    return %c0_i32, %c0_i32_0 : i32, i32
  }
  func.func @transform_3(%arg0: i32) -> (i32, i32) {
    %c0_i32 = arith.constant 0 : i32
    %c0_i32_0 = arith.constant 0 : i32
    %c0_i32_1 = arith.constant 0 : i32
    return %c0_i32, %c0_i32_0 : i32, i32
  }
  func.func @transform_4(%arg0: i32) -> (i32, i32) {
    %c0_i32 = arith.constant 0 : i32
    %c0_i32_0 = arith.constant 0 : i32
    %c0_i32_1 = arith.constant 0 : i32
    return %c0_i32, %c0_i32_0 : i32, i32
  }
  func.func @transform_5(%arg0: i32) -> (i32, i32) {
    %c0_i32 = arith.constant 0 : i32
    %c0_i32_0 = arith.constant 0 : i32
    return %arg0, %c0_i32 : i32, i32
  }
}

module attributes {stable_mosaic.version = 11 : i64} {
  func.func @_tail_kernel(%arg0: i32, %arg1: memref<2x16x32xf32, #tpu.memory_space<vmem>>, %arg2: memref<1x32xf32, #tpu.memory_space<vmem>>, %arg3: memref<1x32xf32, #tpu.memory_space<vmem>>, %arg4: memref<128x256xbf16, #tpu.memory_space<vmem>>, %arg5: memref<1x256xf32, #tpu.memory_space<vmem>>, %arg6: memref<256x256xbf16, #tpu.memory_space<vmem>>, %arg7: memref<1x256xf32, #tpu.memory_space<vmem>>, %arg8: memref<256x128xbf16, #tpu.memory_space<vmem>>, %arg9: memref<1x128xf32, #tpu.memory_space<vmem>>, %arg10: memref<2x128xf32, #tpu.memory_space<vmem>>) attributes {dimension_semantics = [#tpu.dimension_semantics<arbitrary>], iteration_bounds = array<i64: 1>, scalar_prefetch = 0 : i64, scratch_operands = 0 : i64, tpu.core_type = #tpu.core_type<tc>, window_params = [{pipeline_mode = #tpu.pipeline_mode<synchronous>, transform_indices = @transform_0, window_bounds = array<i64: 2, 16, 32>}, {pipeline_mode = #tpu.pipeline_mode<synchronous>, transform_indices = @transform_1, window_bounds = array<i64: 1, 32>}, {pipeline_mode = #tpu.pipeline_mode<synchronous>, transform_indices = @transform_2, window_bounds = array<i64: 1, 32>}, {pipeline_mode = #tpu.pipeline_mode<synchronous>, transform_indices = @transform_3, window_bounds = array<i64: 128, 256>}, {pipeline_mode = #tpu.pipeline_mode<synchronous>, transform_indices = @transform_4, window_bounds = array<i64: 1, 256>}, {pipeline_mode = #tpu.pipeline_mode<synchronous>, transform_indices = @transform_5, window_bounds = array<i64: 256, 256>}, {pipeline_mode = #tpu.pipeline_mode<synchronous>, transform_indices = @transform_6, window_bounds = array<i64: 1, 256>}, {pipeline_mode = #tpu.pipeline_mode<synchronous>, transform_indices = @transform_7, window_bounds = array<i64: 256, 128>}, {pipeline_mode = #tpu.pipeline_mode<synchronous>, transform_indices = @transform_8, window_bounds = array<i64: 1, 128>}, {pipeline_mode = #tpu.pipeline_mode<synchronous>, transform_indices = @transform_9, window_bounds = array<i64: 2, 128>}]} {
    %c0 = arith.constant 0 : index
    %c0_0 = arith.constant 0 : index
    %c0_1 = arith.constant 0 : index
    %0 = vector.load %arg1[%c0, %c0_0, %c0_1] : memref<2x16x32xf32, #tpu.memory_space<vmem>>, vector<2x16x32xf32>
    %c0_2 = arith.constant 0 : index
    %c0_3 = arith.constant 0 : index
    %1 = vector.load %arg2[%c0_2, %c0_3] : memref<1x32xf32, #tpu.memory_space<vmem>>, vector<1x32xf32>
    %c0_4 = arith.constant 0 : index
    %c0_5 = arith.constant 0 : index
    %2 = vector.load %arg3[%c0_4, %c0_5] : memref<1x32xf32, #tpu.memory_space<vmem>>, vector<1x32xf32>
    %cst = arith.constant dense<0.000000e+00> : vector<2x16xf32>
    %3 = vector.multi_reduction <add>, %0, %cst [2] : vector<2x16x32xf32> to vector<2x16xf32>
    %4 = vector.shape_cast %3 : vector<2x16xf32> to vector<2x16x1xf32>
    %cst_6 = arith.constant 3.200000e+01 : f32
    %5 = vector.broadcast %cst_6 : f32 to vector<2x16x1xf32>
    %6 = arith.divf %4, %5 : vector<2x16x1xf32>
    %7 = vector.broadcast %6 : vector<2x16x1xf32> to vector<2x16x32xf32>
    %8 = arith.subf %0, %7 : vector<2x16x32xf32>
    %9 = arith.mulf %8, %8 : vector<2x16x32xf32>
    %cst_7 = arith.constant dense<0.000000e+00> : vector<2x16xf32>
    %10 = vector.multi_reduction <add>, %9, %cst_7 [2] : vector<2x16x32xf32> to vector<2x16xf32>
    %11 = vector.shape_cast %10 : vector<2x16xf32> to vector<2x16x1xf32>
    %cst_8 = arith.constant 3.200000e+01 : f32
    %12 = vector.broadcast %cst_8 : f32 to vector<2x16x1xf32>
    %13 = arith.divf %11, %12 : vector<2x16x1xf32>
    %14 = vector.broadcast %6 : vector<2x16x1xf32> to vector<2x16x32xf32>
    %15 = arith.subf %0, %14 : vector<2x16x32xf32>
    %cst_9 = arith.constant 9.99999974E-6 : f32
    %16 = vector.broadcast %cst_9 : f32 to vector<2x16x1xf32>
    %17 = arith.addf %13, %16 : vector<2x16x1xf32>
    %18 = math.rsqrt %17 : vector<2x16x1xf32>
    %19 = vector.broadcast %18 : vector<2x16x1xf32> to vector<2x16x32xf32>
    %20 = arith.mulf %15, %19 : vector<2x16x32xf32>
    %21 = vector.shape_cast %1 : vector<1x32xf32> to vector<1x1x32xf32>
    %22 = vector.broadcast %21 : vector<1x1x32xf32> to vector<2x16x32xf32>
    %23 = arith.mulf %20, %22 : vector<2x16x32xf32>
    %24 = vector.shape_cast %2 : vector<1x32xf32> to vector<1x1x32xf32>
    %25 = vector.broadcast %24 : vector<1x1x32xf32> to vector<2x16x32xf32>
    %26 = arith.addf %23, %25 : vector<2x16x32xf32>
    %27 = tpu.iota {dimensions = array<i32: 1>} : vector<2x16x32xi32>
    %c3_i32 = arith.constant 3 : i32
    %28 = vector.broadcast %c3_i32 : i32 to vector<2x16x32xi32>
    %29 = arith.cmpi sge, %27, %28 : vector<2x16x32xi32>
    %c11_i32 = arith.constant 11 : i32
    %30 = vector.broadcast %c11_i32 : i32 to vector<2x16x32xi32>
    %31 = arith.cmpi slt, %27, %30 : vector<2x16x32xi32>
    %32 = arith.andi %29, %31 : vector<2x16x32xi1>
    %cst_10 = arith.constant -1.000000e+30 : f32
    %33 = vector.broadcast %cst_10 : f32 to vector<2x16x32xf32>
    %34 = arith.select %32, %26, %33 : vector<2x16x32xi1>, vector<2x16x32xf32>
    %cst_11 = arith.constant dense<0xFF800000> : vector<2x32xf32>
    %35 = vector.multi_reduction <maximumf>, %34, %cst_11 [1] : vector<2x16x32xf32> to vector<2x32xf32>
    %36 = vector.extract_strided_slice %26 {offsets = [0, 0, 0], sizes = [2, 1, 32], strides = [1, 1, 1]} : vector<2x16x32xf32> to vector<2x1x32xf32>
    %37 = vector.shape_cast %36 : vector<2x1x32xf32> to vector<2x32xf32>
    %38 = vector.extract_strided_slice %26 {offsets = [0, 1, 0], sizes = [2, 1, 32], strides = [1, 1, 1]} : vector<2x16x32xf32> to vector<2x1x32xf32>
    %39 = vector.shape_cast %38 : vector<2x1x32xf32> to vector<2x32xf32>
    %40 = vector.extract_strided_slice %26 {offsets = [0, 2, 0], sizes = [2, 1, 32], strides = [1, 1, 1]} : vector<2x16x32xf32> to vector<2x1x32xf32>
    %41 = vector.shape_cast %40 : vector<2x1x32xf32> to vector<2x32xf32>
    %42 = tpu.concatenate %37, %39, %41, %35 in 1 : vector<2x32xf32>, vector<2x32xf32>, vector<2x32xf32>, vector<2x32xf32> -> vector<2x128xf32>
    %c0_12 = arith.constant 0 : index
    %c0_13 = arith.constant 0 : index
    %43 = vector.load %arg4[%c0_12, %c0_13] : memref<128x256xbf16, #tpu.memory_space<vmem>>, vector<128x256xbf16>
    %44 = arith.truncf %42 : vector<2x128xf32> to vector<2x128xbf16>
    %cst_14 = arith.constant dense<0.000000e+00> : vector<2x256xf32>
    %45 = tpu.matmul %44, %43, %cst_14 {dimension_numbers = #tpu.dot_dimension_numbers<[1], [0], [0], [1], [0, 0, 1, 1], [], []>} : vector<2x128xbf16>, vector<128x256xbf16>, vector<2x256xf32> -> vector<2x256xf32>
    %c0_15 = arith.constant 0 : index
    %c0_16 = arith.constant 0 : index
    %46 = vector.load %arg5[%c0_15, %c0_16] : memref<1x256xf32, #tpu.memory_space<vmem>>, vector<1x256xf32>
    %47 = vector.broadcast %46 : vector<1x256xf32> to vector<2x256xf32>
    %48 = arith.addf %45, %47 : vector<2x256xf32>
    %cst_17 = arith.constant 0.000000e+00 : f32
    %49 = vector.broadcast %cst_17 : f32 to vector<2x256xf32>
    %50 = arith.maximumf %48, %49 : vector<2x256xf32>
    %c0_18 = arith.constant 0 : index
    %c0_19 = arith.constant 0 : index
    %51 = vector.load %arg6[%c0_18, %c0_19] : memref<256x256xbf16, #tpu.memory_space<vmem>>, vector<256x256xbf16>
    %52 = arith.truncf %50 : vector<2x256xf32> to vector<2x256xbf16>
    %cst_20 = arith.constant dense<0.000000e+00> : vector<2x256xf32>
    %53 = tpu.matmul %52, %51, %cst_20 {dimension_numbers = #tpu.dot_dimension_numbers<[1], [0], [0], [1], [0, 0, 1, 1], [], []>} : vector<2x256xbf16>, vector<256x256xbf16>, vector<2x256xf32> -> vector<2x256xf32>
    %c0_21 = arith.constant 0 : index
    %c0_22 = arith.constant 0 : index
    %54 = vector.load %arg7[%c0_21, %c0_22] : memref<1x256xf32, #tpu.memory_space<vmem>>, vector<1x256xf32>
    %55 = vector.broadcast %54 : vector<1x256xf32> to vector<2x256xf32>
    %56 = arith.addf %53, %55 : vector<2x256xf32>
    %cst_23 = arith.constant 0.000000e+00 : f32
    %57 = vector.broadcast %cst_23 : f32 to vector<2x256xf32>
    %58 = arith.maximumf %56, %57 : vector<2x256xf32>
    %c0_24 = arith.constant 0 : index
    %c0_25 = arith.constant 0 : index
    %59 = vector.load %arg8[%c0_24, %c0_25] : memref<256x128xbf16, #tpu.memory_space<vmem>>, vector<256x128xbf16>
    %60 = arith.truncf %58 : vector<2x256xf32> to vector<2x256xbf16>
    %cst_26 = arith.constant dense<0.000000e+00> : vector<2x128xf32>
    %61 = tpu.matmul %60, %59, %cst_26 {dimension_numbers = #tpu.dot_dimension_numbers<[1], [0], [0], [1], [0, 0, 1, 1], [], []>} : vector<2x256xbf16>, vector<256x128xbf16>, vector<2x128xf32> -> vector<2x128xf32>
    %c0_27 = arith.constant 0 : index
    %c0_28 = arith.constant 0 : index
    %62 = vector.load %arg9[%c0_27, %c0_28] : memref<1x128xf32, #tpu.memory_space<vmem>>, vector<1x128xf32>
    %63 = vector.broadcast %62 : vector<1x128xf32> to vector<2x128xf32>
    %64 = arith.addf %61, %63 : vector<2x128xf32>
    %c0_29 = arith.constant 0 : index
    %c0_30 = arith.constant 0 : index
    %65 = vector.load %arg10[%c0_29, %c0_30] : memref<2x128xf32, #tpu.memory_space<vmem>>, vector<2x128xf32>
    tpu.vector_store %arg10[%c0_29, %c0_30], %64 {strides = array<i32>} : memref<2x128xf32, #tpu.memory_space<vmem>>, vector<2x128xf32>,
    return
  }
  func.func @transform_0(%arg0: i32) -> (i32, i32, i32) {
    %c0_i32 = arith.constant 0 : i32
    %c0_i32_0 = arith.constant 0 : i32
    %c0_i32_1 = arith.constant 0 : i32
    %c0_i32_2 = arith.constant 0 : i32
    return %c0_i32, %c0_i32_0, %c0_i32_1 : i32, i32, i32
  }
  func.func @transform_1(%arg0: i32) -> (i32, i32) {
    %c0_i32 = arith.constant 0 : i32
    %c0_i32_0 = arith.constant 0 : i32
    %c0_i32_1 = arith.constant 0 : i32
    return %c0_i32, %c0_i32_0 : i32, i32
  }
  func.func @transform_2(%arg0: i32) -> (i32, i32) {
    %c0_i32 = arith.constant 0 : i32
    %c0_i32_0 = arith.constant 0 : i32
    %c0_i32_1 = arith.constant 0 : i32
    return %c0_i32, %c0_i32_0 : i32, i32
  }
  func.func @transform_3(%arg0: i32) -> (i32, i32) {
    %c0_i32 = arith.constant 0 : i32
    %c0_i32_0 = arith.constant 0 : i32
    %c0_i32_1 = arith.constant 0 : i32
    return %c0_i32, %c0_i32_0 : i32, i32
  }
  func.func @transform_4(%arg0: i32) -> (i32, i32) {
    %c0_i32 = arith.constant 0 : i32
    %c0_i32_0 = arith.constant 0 : i32
    %c0_i32_1 = arith.constant 0 : i32
    return %c0_i32, %c0_i32_0 : i32, i32
  }
  func.func @transform_5(%arg0: i32) -> (i32, i32) {
    %c0_i32 = arith.constant 0 : i32
    %c0_i32_0 = arith.constant 0 : i32
    %c0_i32_1 = arith.constant 0 : i32
    return %c0_i32, %c0_i32_0 : i32, i32
  }
  func.func @transform_6(%arg0: i32) -> (i32, i32) {
    %c0_i32 = arith.constant 0 : i32
    %c0_i32_0 = arith.constant 0 : i32
    %c0_i32_1 = arith.constant 0 : i32
    return %c0_i32, %c0_i32_0 : i32, i32
  }
  func.func @transform_7(%arg0: i32) -> (i32, i32) {
    %c0_i32 = arith.constant 0 : i32
    %c0_i32_0 = arith.constant 0 : i32
    %c0_i32_1 = arith.constant 0 : i32
    return %c0_i32, %c0_i32_0 : i32, i32
  }
  func.func @transform_8(%arg0: i32) -> (i32, i32) {
    %c0_i32 = arith.constant 0 : i32
    %c0_i32_0 = arith.constant 0 : i32
    %c0_i32_1 = arith.constant 0 : i32
    return %c0_i32, %c0_i32_0 : i32, i32
  }
  func.func @transform_9(%arg0: i32) -> (i32, i32) {
    %c0_i32 = arith.constant 0 : i32
    %c0_i32_0 = arith.constant 0 : i32
    %c0_i32_1 = arith.constant 0 : i32
    return %c0_i32, %c0_i32_0 : i32, i32
  }
}

module attributes {stable_mosaic.version = 11 : i64} {
  func.func @_blocks_kernel(%arg0: i32, %arg1: i32, %arg2: memref<1x16x32xf32, #tpu.memory_space<vmem>>, %arg3: memref<1x16x32xf32, #tpu.memory_space<vmem>>, %arg4: memref<1x1x32xf32, #tpu.memory_space<vmem>>, %arg5: memref<1x1x32xf32, #tpu.memory_space<vmem>>, %arg6: memref<1x32x96xbf16, #tpu.memory_space<vmem>>, %arg7: memref<1x32x32xbf16, #tpu.memory_space<vmem>>, %arg8: memref<1x1x32xf32, #tpu.memory_space<vmem>>, %arg9: memref<1x1x32xf32, #tpu.memory_space<vmem>>, %arg10: memref<1x1x32xf32, #tpu.memory_space<vmem>>, %arg11: memref<1x32x128xbf16, #tpu.memory_space<vmem>>, %arg12: memref<1x1x128xf32, #tpu.memory_space<vmem>>, %arg13: memref<1x128x32xbf16, #tpu.memory_space<vmem>>, %arg14: memref<1x1x32xf32, #tpu.memory_space<vmem>>, %arg15: memref<1x16x32xf32, #tpu.memory_space<vmem>>) attributes {dimension_semantics = [#tpu.dimension_semantics<parallel>, #tpu.dimension_semantics<arbitrary>], iteration_bounds = array<i64: 2, 2>, scalar_prefetch = 0 : i64, scratch_operands = 0 : i64, tpu.core_type = #tpu.core_type<tc>, window_params = [{transform_indices = @transform_0, window_bounds = array<i64: 1, 16, 32>}, {transform_indices = @transform_1, window_bounds = array<i64: 1, 16, 32>}, {transform_indices = @transform_2, window_bounds = array<i64: 1, 1, 32>}, {transform_indices = @transform_3, window_bounds = array<i64: 1, 1, 32>}, {transform_indices = @transform_4, window_bounds = array<i64: 1, 32, 96>}, {transform_indices = @transform_5, window_bounds = array<i64: 1, 32, 32>}, {transform_indices = @transform_6, window_bounds = array<i64: 1, 1, 32>}, {transform_indices = @transform_7, window_bounds = array<i64: 1, 1, 32>}, {transform_indices = @transform_8, window_bounds = array<i64: 1, 1, 32>}, {transform_indices = @transform_9, window_bounds = array<i64: 1, 32, 128>}, {transform_indices = @transform_10, window_bounds = array<i64: 1, 1, 128>}, {transform_indices = @transform_11, window_bounds = array<i64: 1, 128, 32>}, {transform_indices = @transform_12, window_bounds = array<i64: 1, 1, 32>}, {transform_indices = @transform_13, window_bounds = array<i64: 1, 16, 32>}]} {
    %c0_i32 = arith.constant 0 : i32
    %0 = arith.cmpi eq, %arg1, %c0_i32 : i32
    %1 = arith.extui %0 : i1 to i32
    %c0_i32_0 = arith.constant 0 : i32
    %2 = arith.cmpi ne, %1, %c0_i32_0 : i32
    scf.if %2 {
      %c0_83 = arith.constant 0 : index
      %c0_84 = arith.constant 0 : index
      %c0_85 = arith.constant 0 : index
      %202 = vector.load %arg2[%c0_83, %c0_84, %c0_85] : memref<1x16x32xf32, #tpu.memory_space<vmem>>, vector<1x16x32xf32>
      %c0_86 = arith.constant 0 : index
      %c0_87 = arith.constant 0 : index
      %c0_88 = arith.constant 0 : index
      %203 = vector.load %arg15[%c0_86, %c0_87, %c0_88] : memref<1x16x32xf32, #tpu.memory_space<vmem>>, vector<1x16x32xf32>
      tpu.vector_store %arg15[%c0_86, %c0_87, %c0_88], %202 {strides = array<i32>} : memref<1x16x32xf32, #tpu.memory_space<vmem>>, vector<1x16x32xf32>,
    } else {
    }
    %c0 = arith.constant 0 : index
    %c0_1 = arith.constant 0 : index
    %c0_2 = arith.constant 0 : index
    %3 = vector.load %arg15[%c0, %c0_1, %c0_2] : memref<1x16x32xf32, #tpu.memory_space<vmem>>, vector<1x16x32xf32>
    %4 = vector.shape_cast %3 : vector<1x16x32xf32> to vector<16x32xf32>
    %c0_3 = arith.constant 0 : index
    %c0_4 = arith.constant 0 : index
    %c0_5 = arith.constant 0 : index
    %5 = vector.load %arg3[%c0_3, %c0_4, %c0_5] : memref<1x16x32xf32, #tpu.memory_space<vmem>>, vector<1x16x32xf32>
    %6 = vector.shape_cast %5 : vector<1x16x32xf32> to vector<16x32xf32>
    %7 = arith.addf %4, %6 : vector<16x32xf32>
    %c0_6 = arith.constant 0 : index
    %c0_7 = arith.constant 0 : index
    %c0_8 = arith.constant 0 : index
    %8 = vector.load %arg4[%c0_6, %c0_7, %c0_8] : memref<1x1x32xf32, #tpu.memory_space<vmem>>, vector<1x1x32xf32>
    %9 = vector.shape_cast %8 : vector<1x1x32xf32> to vector<1x32xf32>
    %c0_9 = arith.constant 0 : index
    %c0_10 = arith.constant 0 : index
    %c0_11 = arith.constant 0 : index
    %10 = vector.load %arg5[%c0_9, %c0_10, %c0_11] : memref<1x1x32xf32, #tpu.memory_space<vmem>>, vector<1x1x32xf32>
    %11 = vector.shape_cast %10 : vector<1x1x32xf32> to vector<1x32xf32>
    %cst = arith.constant dense<0.000000e+00> : vector<16xf32>
    %12 = vector.multi_reduction <add>, %7, %cst [1] : vector<16x32xf32> to vector<16xf32>
    %13 = vector.shape_cast %12 : vector<16xf32> to vector<16x1xf32>
    %cst_12 = arith.constant 3.200000e+01 : f32
    %14 = vector.broadcast %cst_12 : f32 to vector<16x1xf32>
    %15 = arith.divf %13, %14 : vector<16x1xf32>
    %16 = vector.broadcast %15 : vector<16x1xf32> to vector<16x32xf32>
    %17 = arith.subf %7, %16 : vector<16x32xf32>
    %18 = arith.mulf %17, %17 : vector<16x32xf32>
    %cst_13 = arith.constant dense<0.000000e+00> : vector<16xf32>
    %19 = vector.multi_reduction <add>, %18, %cst_13 [1] : vector<16x32xf32> to vector<16xf32>
    %20 = vector.shape_cast %19 : vector<16xf32> to vector<16x1xf32>
    %cst_14 = arith.constant 3.200000e+01 : f32
    %21 = vector.broadcast %cst_14 : f32 to vector<16x1xf32>
    %22 = arith.divf %20, %21 : vector<16x1xf32>
    %23 = vector.broadcast %15 : vector<16x1xf32> to vector<16x32xf32>
    %24 = arith.subf %7, %23 : vector<16x32xf32>
    %cst_15 = arith.constant 9.99999974E-6 : f32
    %25 = vector.broadcast %cst_15 : f32 to vector<16x1xf32>
    %26 = arith.addf %22, %25 : vector<16x1xf32>
    %27 = math.rsqrt %26 : vector<16x1xf32>
    %28 = vector.broadcast %27 : vector<16x1xf32> to vector<16x32xf32>
    %29 = arith.mulf %24, %28 : vector<16x32xf32>
    %30 = vector.broadcast %9 : vector<1x32xf32> to vector<16x32xf32>
    %31 = arith.mulf %29, %30 : vector<16x32xf32>
    %32 = vector.broadcast %11 : vector<1x32xf32> to vector<16x32xf32>
    %33 = arith.addf %31, %32 : vector<16x32xf32>
    %c0_16 = arith.constant 0 : index
    %c0_17 = arith.constant 0 : index
    %c0_18 = arith.constant 0 : index
    %34 = vector.load %arg6[%c0_16, %c0_17, %c0_18] : memref<1x32x96xbf16, #tpu.memory_space<vmem>>, vector<1x32x96xbf16>
    %35 = vector.shape_cast %34 : vector<1x32x96xbf16> to vector<32x96xbf16>
    %36 = arith.truncf %33 : vector<16x32xf32> to vector<16x32xbf16>
    %cst_19 = arith.constant dense<0.000000e+00> : vector<16x96xf32>
    %37 = tpu.matmul %36, %35, %cst_19 {dimension_numbers = #tpu.dot_dimension_numbers<[1], [0], [0], [1], [0, 0, 1, 1], [], []>} : vector<16x32xbf16>, vector<32x96xbf16>, vector<16x96xf32> -> vector<16x96xf32>
    %38 = tpu.iota {dimensions = array<i32: 1>} : vector<16x16xi32>
    %c11_i32 = arith.constant 11 : i32
    %39 = vector.broadcast %c11_i32 : i32 to vector<16x16xi32>
    %40 = arith.cmpi sge, %38, %39 : vector<16x16xi32>
    %41 = vector.extract_strided_slice %37 {offsets = [0, 0], sizes = [16, 8], strides = [1, 1]} : vector<16x96xf32> to vector<16x8xf32>
    %42 = vector.extract_strided_slice %37 {offsets = [0, 32], sizes = [16, 8], strides = [1, 1]} : vector<16x96xf32> to vector<16x8xf32>
    %43 = vector.extract_strided_slice %37 {offsets = [0, 64], sizes = [16, 8], strides = [1, 1]} : vector<16x96xf32> to vector<16x8xf32>
    %44 = arith.truncf %41 : vector<16x8xf32> to vector<16x8xbf16>
    %45 = arith.truncf %42 : vector<16x8xf32> to vector<16x8xbf16>
    %cst_20 = arith.constant dense<0.000000e+00> : vector<16x16xf32>
    %46 = tpu.matmul %44, %45, %cst_20 {dimension_numbers = #tpu.dot_dimension_numbers<[1], [1], [0], [0], [0, 0, 1, 0], [], []>} : vector<16x8xbf16>, vector<16x8xbf16>, vector<16x16xf32> -> vector<16x16xf32>
    %cst_21 = arith.constant 0.353553385 : f32
    %47 = vector.broadcast %cst_21 : f32 to vector<16x16xf32>
    %48 = arith.mulf %46, %47 : vector<16x16xf32>
    %cst_22 = arith.constant -1.000000e+30 : f32
    %49 = vector.broadcast %cst_22 : f32 to vector<16x16xf32>
    %50 = arith.select %40, %49, %48 : vector<16x16xi1>, vector<16x16xf32>
    %cst_23 = arith.constant dense<0xFF800000> : vector<16xf32>
    %51 = vector.multi_reduction <maximumf>, %50, %cst_23 [1] : vector<16x16xf32> to vector<16xf32>
    %52 = vector.shape_cast %51 : vector<16xf32> to vector<16x1xf32>
    %53 = vector.broadcast %52 : vector<16x1xf32> to vector<16x16xf32>
    %54 = arith.subf %50, %53 : vector<16x16xf32>
    %55 = math.exp %54 : vector<16x16xf32>
    %cst_24 = arith.constant dense<0.000000e+00> : vector<16xf32>
    %56 = vector.multi_reduction <add>, %55, %cst_24 [1] : vector<16x16xf32> to vector<16xf32>
    %57 = vector.shape_cast %56 : vector<16xf32> to vector<16x1xf32>
    %58 = tpu.reciprocal %57 {approx = true} : vector<16x1xf32> -> vector<16x1xf32>
    %59 = vector.broadcast %58 : vector<16x1xf32> to vector<16x16xf32>
    %60 = arith.mulf %55, %59 : vector<16x16xf32>
    %61 = arith.truncf %60 : vector<16x16xf32> to vector<16x16xbf16>
    %62 = arith.truncf %43 : vector<16x8xf32> to vector<16x8xbf16>
    %cst_25 = arith.constant dense<0.000000e+00> : vector<16x8xf32>
    %63 = tpu.matmul %61, %62, %cst_25 {dimension_numbers = #tpu.dot_dimension_numbers<[1], [0], [0], [1], [0, 0, 1, 1], [], []>} : vector<16x16xbf16>, vector<16x8xbf16>, vector<16x8xf32> -> vector<16x8xf32>
    %64 = vector.extract_strided_slice %37 {offsets = [0, 8], sizes = [16, 8], strides = [1, 1]} : vector<16x96xf32> to vector<16x8xf32>
    %65 = vector.extract_strided_slice %37 {offsets = [0, 40], sizes = [16, 8], strides = [1, 1]} : vector<16x96xf32> to vector<16x8xf32>
    %66 = vector.extract_strided_slice %37 {offsets = [0, 72], sizes = [16, 8], strides = [1, 1]} : vector<16x96xf32> to vector<16x8xf32>
    %67 = arith.truncf %64 : vector<16x8xf32> to vector<16x8xbf16>
    %68 = arith.truncf %65 : vector<16x8xf32> to vector<16x8xbf16>
    %cst_26 = arith.constant dense<0.000000e+00> : vector<16x16xf32>
    %69 = tpu.matmul %67, %68, %cst_26 {dimension_numbers = #tpu.dot_dimension_numbers<[1], [1], [0], [0], [0, 0, 1, 0], [], []>} : vector<16x8xbf16>, vector<16x8xbf16>, vector<16x16xf32> -> vector<16x16xf32>
    %cst_27 = arith.constant 0.353553385 : f32
    %70 = vector.broadcast %cst_27 : f32 to vector<16x16xf32>
    %71 = arith.mulf %69, %70 : vector<16x16xf32>
    %cst_28 = arith.constant -1.000000e+30 : f32
    %72 = vector.broadcast %cst_28 : f32 to vector<16x16xf32>
    %73 = arith.select %40, %72, %71 : vector<16x16xi1>, vector<16x16xf32>
    %cst_29 = arith.constant dense<0xFF800000> : vector<16xf32>
    %74 = vector.multi_reduction <maximumf>, %73, %cst_29 [1] : vector<16x16xf32> to vector<16xf32>
    %75 = vector.shape_cast %74 : vector<16xf32> to vector<16x1xf32>
    %76 = vector.broadcast %75 : vector<16x1xf32> to vector<16x16xf32>
    %77 = arith.subf %73, %76 : vector<16x16xf32>
    %78 = math.exp %77 : vector<16x16xf32>
    %cst_30 = arith.constant dense<0.000000e+00> : vector<16xf32>
    %79 = vector.multi_reduction <add>, %78, %cst_30 [1] : vector<16x16xf32> to vector<16xf32>
    %80 = vector.shape_cast %79 : vector<16xf32> to vector<16x1xf32>
    %81 = tpu.reciprocal %80 {approx = true} : vector<16x1xf32> -> vector<16x1xf32>
    %82 = vector.broadcast %81 : vector<16x1xf32> to vector<16x16xf32>
    %83 = arith.mulf %78, %82 : vector<16x16xf32>
    %84 = arith.truncf %83 : vector<16x16xf32> to vector<16x16xbf16>
    %85 = arith.truncf %66 : vector<16x8xf32> to vector<16x8xbf16>
    %cst_31 = arith.constant dense<0.000000e+00> : vector<16x8xf32>
    %86 = tpu.matmul %84, %85, %cst_31 {dimension_numbers = #tpu.dot_dimension_numbers<[1], [0], [0], [1], [0, 0, 1, 1], [], []>} : vector<16x16xbf16>, vector<16x8xbf16>, vector<16x8xf32> -> vector<16x8xf32>
    %87 = vector.extract_strided_slice %37 {offsets = [0, 16], sizes = [16, 8], strides = [1, 1]} : vector<16x96xf32> to vector<16x8xf32>
    %88 = vector.extract_strided_slice %37 {offsets = [0, 48], sizes = [16, 8], strides = [1, 1]} : vector<16x96xf32> to vector<16x8xf32>
    %89 = vector.extract_strided_slice %37 {offsets = [0, 80], sizes = [16, 8], strides = [1, 1]} : vector<16x96xf32> to vector<16x8xf32>
    %90 = arith.truncf %87 : vector<16x8xf32> to vector<16x8xbf16>
    %91 = arith.truncf %88 : vector<16x8xf32> to vector<16x8xbf16>
    %cst_32 = arith.constant dense<0.000000e+00> : vector<16x16xf32>
    %92 = tpu.matmul %90, %91, %cst_32 {dimension_numbers = #tpu.dot_dimension_numbers<[1], [1], [0], [0], [0, 0, 1, 0], [], []>} : vector<16x8xbf16>, vector<16x8xbf16>, vector<16x16xf32> -> vector<16x16xf32>
    %cst_33 = arith.constant 0.353553385 : f32
    %93 = vector.broadcast %cst_33 : f32 to vector<16x16xf32>
    %94 = arith.mulf %92, %93 : vector<16x16xf32>
    %cst_34 = arith.constant -1.000000e+30 : f32
    %95 = vector.broadcast %cst_34 : f32 to vector<16x16xf32>
    %96 = arith.select %40, %95, %94 : vector<16x16xi1>, vector<16x16xf32>
    %cst_35 = arith.constant dense<0xFF800000> : vector<16xf32>
    %97 = vector.multi_reduction <maximumf>, %96, %cst_35 [1] : vector<16x16xf32> to vector<16xf32>
    %98 = vector.shape_cast %97 : vector<16xf32> to vector<16x1xf32>
    %99 = vector.broadcast %98 : vector<16x1xf32> to vector<16x16xf32>
    %100 = arith.subf %96, %99 : vector<16x16xf32>
    %101 = math.exp %100 : vector<16x16xf32>
    %cst_36 = arith.constant dense<0.000000e+00> : vector<16xf32>
    %102 = vector.multi_reduction <add>, %101, %cst_36 [1] : vector<16x16xf32> to vector<16xf32>
    %103 = vector.shape_cast %102 : vector<16xf32> to vector<16x1xf32>
    %104 = tpu.reciprocal %103 {approx = true} : vector<16x1xf32> -> vector<16x1xf32>
    %105 = vector.broadcast %104 : vector<16x1xf32> to vector<16x16xf32>
    %106 = arith.mulf %101, %105 : vector<16x16xf32>
    %107 = arith.truncf %106 : vector<16x16xf32> to vector<16x16xbf16>
    %108 = arith.truncf %89 : vector<16x8xf32> to vector<16x8xbf16>
    %cst_37 = arith.constant dense<0.000000e+00> : vector<16x8xf32>
    %109 = tpu.matmul %107, %108, %cst_37 {dimension_numbers = #tpu.dot_dimension_numbers<[1], [0], [0], [1], [0, 0, 1, 1], [], []>} : vector<16x16xbf16>, vector<16x8xbf16>, vector<16x8xf32> -> vector<16x8xf32>
    %110 = vector.extract_strided_slice %37 {offsets = [0, 24], sizes = [16, 8], strides = [1, 1]} : vector<16x96xf32> to vector<16x8xf32>
    %111 = vector.extract_strided_slice %37 {offsets = [0, 56], sizes = [16, 8], strides = [1, 1]} : vector<16x96xf32> to vector<16x8xf32>
    %112 = vector.extract_strided_slice %37 {offsets = [0, 88], sizes = [16, 8], strides = [1, 1]} : vector<16x96xf32> to vector<16x8xf32>
    %113 = arith.truncf %110 : vector<16x8xf32> to vector<16x8xbf16>
    %114 = arith.truncf %111 : vector<16x8xf32> to vector<16x8xbf16>
    %cst_38 = arith.constant dense<0.000000e+00> : vector<16x16xf32>
    %115 = tpu.matmul %113, %114, %cst_38 {dimension_numbers = #tpu.dot_dimension_numbers<[1], [1], [0], [0], [0, 0, 1, 0], [], []>} : vector<16x8xbf16>, vector<16x8xbf16>, vector<16x16xf32> -> vector<16x16xf32>
    %cst_39 = arith.constant 0.353553385 : f32
    %116 = vector.broadcast %cst_39 : f32 to vector<16x16xf32>
    %117 = arith.mulf %115, %116 : vector<16x16xf32>
    %cst_40 = arith.constant -1.000000e+30 : f32
    %118 = vector.broadcast %cst_40 : f32 to vector<16x16xf32>
    %119 = arith.select %40, %118, %117 : vector<16x16xi1>, vector<16x16xf32>
    %cst_41 = arith.constant dense<0xFF800000> : vector<16xf32>
    %120 = vector.multi_reduction <maximumf>, %119, %cst_41 [1] : vector<16x16xf32> to vector<16xf32>
    %121 = vector.shape_cast %120 : vector<16xf32> to vector<16x1xf32>
    %122 = vector.broadcast %121 : vector<16x1xf32> to vector<16x16xf32>
    %123 = arith.subf %119, %122 : vector<16x16xf32>
    %124 = math.exp %123 : vector<16x16xf32>
    %cst_42 = arith.constant dense<0.000000e+00> : vector<16xf32>
    %125 = vector.multi_reduction <add>, %124, %cst_42 [1] : vector<16x16xf32> to vector<16xf32>
    %126 = vector.shape_cast %125 : vector<16xf32> to vector<16x1xf32>
    %127 = tpu.reciprocal %126 {approx = true} : vector<16x1xf32> -> vector<16x1xf32>
    %128 = vector.broadcast %127 : vector<16x1xf32> to vector<16x16xf32>
    %129 = arith.mulf %124, %128 : vector<16x16xf32>
    %130 = arith.truncf %129 : vector<16x16xf32> to vector<16x16xbf16>
    %131 = arith.truncf %112 : vector<16x8xf32> to vector<16x8xbf16>
    %cst_43 = arith.constant dense<0.000000e+00> : vector<16x8xf32>
    %132 = tpu.matmul %130, %131, %cst_43 {dimension_numbers = #tpu.dot_dimension_numbers<[1], [0], [0], [1], [0, 0, 1, 1], [], []>} : vector<16x16xbf16>, vector<16x8xbf16>, vector<16x8xf32> -> vector<16x8xf32>
    %133 = tpu.concatenate %63, %86, %109, %132 in 1 : vector<16x8xf32>, vector<16x8xf32>, vector<16x8xf32>, vector<16x8xf32> -> vector<16x32xf32>
    %c0_44 = arith.constant 0 : index
    %c0_45 = arith.constant 0 : index
    %c0_46 = arith.constant 0 : index
    %134 = vector.load %arg7[%c0_44, %c0_45, %c0_46] : memref<1x32x32xbf16, #tpu.memory_space<vmem>>, vector<1x32x32xbf16>
    %135 = vector.shape_cast %134 : vector<1x32x32xbf16> to vector<32x32xbf16>
    %136 = arith.truncf %133 : vector<16x32xf32> to vector<16x32xbf16>
    %cst_47 = arith.constant dense<0.000000e+00> : vector<16x32xf32>
    %137 = tpu.matmul %136, %135, %cst_47 {dimension_numbers = #tpu.dot_dimension_numbers<[1], [0], [0], [1], [0, 0, 1, 1], [], []>} : vector<16x32xbf16>, vector<32x32xbf16>, vector<16x32xf32> -> vector<16x32xf32>
    %c0_48 = arith.constant 0 : index
    %c0_49 = arith.constant 0 : index
    %c0_50 = arith.constant 0 : index
    %138 = vector.load %arg8[%c0_48, %c0_49, %c0_50] : memref<1x1x32xf32, #tpu.memory_space<vmem>>, vector<1x1x32xf32>
    %139 = vector.shape_cast %138 : vector<1x1x32xf32> to vector<1x32xf32>
    %140 = vector.broadcast %139 : vector<1x32xf32> to vector<16x32xf32>
    %141 = arith.addf %137, %140 : vector<16x32xf32>
    %142 = arith.addf %7, %141 : vector<16x32xf32>
    %c0_51 = arith.constant 0 : index
    %c0_52 = arith.constant 0 : index
    %c0_53 = arith.constant 0 : index
    %143 = vector.load %arg9[%c0_51, %c0_52, %c0_53] : memref<1x1x32xf32, #tpu.memory_space<vmem>>, vector<1x1x32xf32>
    %144 = vector.shape_cast %143 : vector<1x1x32xf32> to vector<1x32xf32>
    %c0_54 = arith.constant 0 : index
    %c0_55 = arith.constant 0 : index
    %c0_56 = arith.constant 0 : index
    %145 = vector.load %arg10[%c0_54, %c0_55, %c0_56] : memref<1x1x32xf32, #tpu.memory_space<vmem>>, vector<1x1x32xf32>
    %146 = vector.shape_cast %145 : vector<1x1x32xf32> to vector<1x32xf32>
    %cst_57 = arith.constant dense<0.000000e+00> : vector<16xf32>
    %147 = vector.multi_reduction <add>, %142, %cst_57 [1] : vector<16x32xf32> to vector<16xf32>
    %148 = vector.shape_cast %147 : vector<16xf32> to vector<16x1xf32>
    %cst_58 = arith.constant 3.200000e+01 : f32
    %149 = vector.broadcast %cst_58 : f32 to vector<16x1xf32>
    %150 = arith.divf %148, %149 : vector<16x1xf32>
    %151 = vector.broadcast %150 : vector<16x1xf32> to vector<16x32xf32>
    %152 = arith.subf %142, %151 : vector<16x32xf32>
    %153 = arith.mulf %152, %152 : vector<16x32xf32>
    %cst_59 = arith.constant dense<0.000000e+00> : vector<16xf32>
    %154 = vector.multi_reduction <add>, %153, %cst_59 [1] : vector<16x32xf32> to vector<16xf32>
    %155 = vector.shape_cast %154 : vector<16xf32> to vector<16x1xf32>
    %cst_60 = arith.constant 3.200000e+01 : f32
    %156 = vector.broadcast %cst_60 : f32 to vector<16x1xf32>
    %157 = arith.divf %155, %156 : vector<16x1xf32>
    %158 = vector.broadcast %150 : vector<16x1xf32> to vector<16x32xf32>
    %159 = arith.subf %142, %158 : vector<16x32xf32>
    %cst_61 = arith.constant 9.99999974E-6 : f32
    %160 = vector.broadcast %cst_61 : f32 to vector<16x1xf32>
    %161 = arith.addf %157, %160 : vector<16x1xf32>
    %162 = math.rsqrt %161 : vector<16x1xf32>
    %163 = vector.broadcast %162 : vector<16x1xf32> to vector<16x32xf32>
    %164 = arith.mulf %159, %163 : vector<16x32xf32>
    %165 = vector.broadcast %144 : vector<1x32xf32> to vector<16x32xf32>
    %166 = arith.mulf %164, %165 : vector<16x32xf32>
    %167 = vector.broadcast %146 : vector<1x32xf32> to vector<16x32xf32>
    %168 = arith.addf %166, %167 : vector<16x32xf32>
    %c0_62 = arith.constant 0 : index
    %c0_63 = arith.constant 0 : index
    %c0_64 = arith.constant 0 : index
    %169 = vector.load %arg11[%c0_62, %c0_63, %c0_64] : memref<1x32x128xbf16, #tpu.memory_space<vmem>>, vector<1x32x128xbf16>
    %170 = vector.shape_cast %169 : vector<1x32x128xbf16> to vector<32x128xbf16>
    %171 = arith.truncf %168 : vector<16x32xf32> to vector<16x32xbf16>
    %cst_65 = arith.constant dense<0.000000e+00> : vector<16x128xf32>
    %172 = tpu.matmul %171, %170, %cst_65 {dimension_numbers = #tpu.dot_dimension_numbers<[1], [0], [0], [1], [0, 0, 1, 1], [], []>} : vector<16x32xbf16>, vector<32x128xbf16>, vector<16x128xf32> -> vector<16x128xf32>
    %c0_66 = arith.constant 0 : index
    %c0_67 = arith.constant 0 : index
    %c0_68 = arith.constant 0 : index
    %173 = vector.load %arg12[%c0_66, %c0_67, %c0_68] : memref<1x1x128xf32, #tpu.memory_space<vmem>>, vector<1x1x128xf32>
    %174 = vector.shape_cast %173 : vector<1x1x128xf32> to vector<1x128xf32>
    %175 = vector.broadcast %174 : vector<1x128xf32> to vector<16x128xf32>
    %176 = arith.addf %172, %175 : vector<16x128xf32>
    %177 = arith.mulf %176, %176 : vector<16x128xf32>
    %178 = arith.mulf %176, %177 : vector<16x128xf32>
    %cst_69 = arith.constant 4.471500e-02 : f32
    %179 = vector.broadcast %cst_69 : f32 to vector<16x128xf32>
    %180 = arith.mulf %179, %178 : vector<16x128xf32>
    %181 = arith.addf %176, %180 : vector<16x128xf32>
    %cst_70 = arith.constant 0.797884583 : f32
    %182 = vector.broadcast %cst_70 : f32 to vector<16x128xf32>
    %183 = arith.mulf %182, %181 : vector<16x128xf32>
    %184 = math.tanh %183 : vector<16x128xf32>
    %cst_71 = arith.constant 1.000000e+00 : f32
    %185 = vector.broadcast %cst_71 : f32 to vector<16x128xf32>
    %186 = arith.addf %185, %184 : vector<16x128xf32>
    %cst_72 = arith.constant 5.000000e-01 : f32
    %187 = vector.broadcast %cst_72 : f32 to vector<16x128xf32>
    %188 = arith.mulf %187, %186 : vector<16x128xf32>
    %189 = arith.mulf %176, %188 : vector<16x128xf32>
    %c0_73 = arith.constant 0 : index
    %c0_74 = arith.constant 0 : index
    %c0_75 = arith.constant 0 : index
    %190 = vector.load %arg13[%c0_73, %c0_74, %c0_75] : memref<1x128x32xbf16, #tpu.memory_space<vmem>>, vector<1x128x32xbf16>
    %191 = vector.shape_cast %190 : vector<1x128x32xbf16> to vector<128x32xbf16>
    %192 = arith.truncf %189 : vector<16x128xf32> to vector<16x128xbf16>
    %cst_76 = arith.constant dense<0.000000e+00> : vector<16x32xf32>
    %193 = tpu.matmul %192, %191, %cst_76 {dimension_numbers = #tpu.dot_dimension_numbers<[1], [0], [0], [1], [0, 0, 1, 1], [], []>} : vector<16x128xbf16>, vector<128x32xbf16>, vector<16x32xf32> -> vector<16x32xf32>
    %c0_77 = arith.constant 0 : index
    %c0_78 = arith.constant 0 : index
    %c0_79 = arith.constant 0 : index
    %194 = vector.load %arg14[%c0_77, %c0_78, %c0_79] : memref<1x1x32xf32, #tpu.memory_space<vmem>>, vector<1x1x32xf32>
    %195 = vector.shape_cast %194 : vector<1x1x32xf32> to vector<1x32xf32>
    %196 = vector.broadcast %195 : vector<1x32xf32> to vector<16x32xf32>
    %197 = arith.addf %193, %196 : vector<16x32xf32>
    %198 = arith.addf %142, %197 : vector<16x32xf32>
    %c0_80 = arith.constant 0 : index
    %c0_81 = arith.constant 0 : index
    %c0_82 = arith.constant 0 : index
    %199 = vector.load %arg15[%c0_80, %c0_81, %c0_82] : memref<1x16x32xf32, #tpu.memory_space<vmem>>, vector<1x16x32xf32>
    %200 = vector.shape_cast %199 : vector<1x16x32xf32> to vector<16x32xf32>
    %201 = vector.shape_cast %198 : vector<16x32xf32> to vector<1x16x32xf32>
    tpu.vector_store %arg15[%c0_80, %c0_81, %c0_82], %201 {strides = array<i32>} : memref<1x16x32xf32, #tpu.memory_space<vmem>>, vector<1x16x32xf32>,
    return
  }
  func.func @transform_0(%arg0: i32, %arg1: i32) -> (i32, i32, i32) {
    %c0_i32 = arith.constant 0 : i32
    %c0_i32_0 = arith.constant 0 : i32
    %c0_i32_1 = arith.constant 0 : i32
    return %arg0, %c0_i32, %c0_i32_0 : i32, i32, i32
  }
  func.func @transform_1(%arg0: i32, %arg1: i32) -> (i32, i32, i32) {
    %c0_i32 = arith.constant 0 : i32
    %c0_i32_0 = arith.constant 0 : i32
    %c0_i32_1 = arith.constant 0 : i32
    return %arg0, %c0_i32, %c0_i32_0 : i32, i32, i32
  }
  func.func @transform_2(%arg0: i32, %arg1: i32) -> (i32, i32, i32) {
    %c0_i32 = arith.constant 0 : i32
    %c0_i32_0 = arith.constant 0 : i32
    %c0_i32_1 = arith.constant 0 : i32
    return %arg1, %c0_i32, %c0_i32_0 : i32, i32, i32
  }
  func.func @transform_3(%arg0: i32, %arg1: i32) -> (i32, i32, i32) {
    %c0_i32 = arith.constant 0 : i32
    %c0_i32_0 = arith.constant 0 : i32
    %c0_i32_1 = arith.constant 0 : i32
    return %arg1, %c0_i32, %c0_i32_0 : i32, i32, i32
  }
  func.func @transform_4(%arg0: i32, %arg1: i32) -> (i32, i32, i32) {
    %c0_i32 = arith.constant 0 : i32
    %c0_i32_0 = arith.constant 0 : i32
    %c0_i32_1 = arith.constant 0 : i32
    return %arg1, %c0_i32, %c0_i32_0 : i32, i32, i32
  }
  func.func @transform_5(%arg0: i32, %arg1: i32) -> (i32, i32, i32) {
    %c0_i32 = arith.constant 0 : i32
    %c0_i32_0 = arith.constant 0 : i32
    %c0_i32_1 = arith.constant 0 : i32
    return %arg1, %c0_i32, %c0_i32_0 : i32, i32, i32
  }
  func.func @transform_6(%arg0: i32, %arg1: i32) -> (i32, i32, i32) {
    %c0_i32 = arith.constant 0 : i32
    %c0_i32_0 = arith.constant 0 : i32
    %c0_i32_1 = arith.constant 0 : i32
    return %arg1, %c0_i32, %c0_i32_0 : i32, i32, i32
  }
  func.func @transform_7(%arg0: i32, %arg1: i32) -> (i32, i32, i32) {
    %c0_i32 = arith.constant 0 : i32
    %c0_i32_0 = arith.constant 0 : i32
    %c0_i32_1 = arith.constant 0 : i32
    return %arg1, %c0_i32, %c0_i32_0 : i32, i32, i32
  }
  func.func @transform_8(%arg0: i32, %arg1: i32) -> (i32, i32, i32) {
    %c0_i32 = arith.constant 0 : i32
    %c0_i32_0 = arith.constant 0 : i32
    %c0_i32_1 = arith.constant 0 : i32
    return %arg1, %c0_i32, %c0_i32_0 : i32, i32, i32
  }
  func.func @transform_9(%arg0: i32, %arg1: i32) -> (i32, i32, i32) {
    %c0_i32 = arith.constant 0 : i32
    %c0_i32_0 = arith.constant 0 : i32
    %c0_i32_1 = arith.constant 0 : i32
    return %arg1, %c0_i32, %c0_i32_0 : i32, i32, i32
  }
  func.func @transform_10(%arg0: i32, %arg1: i32) -> (i32, i32, i32) {
    %c0_i32 = arith.constant 0 : i32
    %c0_i32_0 = arith.constant 0 : i32
    %c0_i32_1 = arith.constant 0 : i32
    return %arg1, %c0_i32, %c0_i32_0 : i32, i32, i32
  }
  func.func @transform_11(%arg0: i32, %arg1: i32) -> (i32, i32, i32) {
    %c0_i32 = arith.constant 0 : i32
    %c0_i32_0 = arith.constant 0 : i32
    %c0_i32_1 = arith.constant 0 : i32
    return %arg1, %c0_i32, %c0_i32_0 : i32, i32, i32
  }
  func.func @transform_12(%arg0: i32, %arg1: i32) -> (i32, i32, i32) {
    %c0_i32 = arith.constant 0 : i32
    %c0_i32_0 = arith.constant 0 : i32
    %c0_i32_1 = arith.constant 0 : i32
    return %arg1, %c0_i32, %c0_i32_0 : i32, i32, i32
  }
  func.func @transform_13(%arg0: i32, %arg1: i32) -> (i32, i32, i32) {
    %c0_i32 = arith.constant 0 : i32
    %c0_i32_0 = arith.constant 0 : i32
    %c0_i32_1 = arith.constant 0 : i32
    return %arg0, %c0_i32, %c0_i32_0 : i32, i32, i32
  }
}

</mosaic_0001>

<llo_original>
// kernel: custom-call.6
$region0: #{custom-call.6}
  %s0 = inlined_call_operand.vmem [shape: f32[2,128], index: 0, kind: output, shape index: {}]

// kernel: forward.5
$region0: #{forward.5}
  #allocation0 [shape = 'u32[]', space=smem, size = 0x4, offset = 0x4, fixed_abs, tag = 'smem constant byte address 0x4 - core index']
  #allocation1 [shape = 'u32[144,128]{1,0:T(1,128)}', space=vmem, size = 0x12000, scoped, tag = 'internal scratch']
  %s0 = inlined_call_operand.vmem [shape: f32[16,8], index: 0, kind: input, shape index: {}]
  %s1 = inlined_call_operand.vmem [shape: bf16[8,128], index: 1, kind: input, shape index: {}]
  %s2 = inlined_call_operand.vmem [shape: f32[1,128], index: 2, kind: input, shape index: {}]
  %s3 = inlined_call_operand.vmem [shape: bf16[128,32], index: 3, kind: input, shape index: {}]
  %s4 = inlined_call_operand.vmem [shape: f32[1,32], index: 4, kind: input, shape index: {}]
  %s5 = inlined_call_operand.vmem [shape: f32[16,32], index: 5, kind: output, shape index: {}]
  %s6 = sld [smem:[#allocation0]]
  $region30: #{forward.5} parent=0
    _
  %s8 = ssub.s32 1, %s6
  %s9 = scalar_select 0, %s8, %s6
  // Predicated region
  $region2: #{forward.5} parent=0 // pred_check
    _
  $region3: #{forward.5} parent=0 // pred_check_branch
    %11 = sbr.rel (0) target = $region5
  $region4: #{forward.5} parent=0 // pred_region
    _
  $region5: #{forward.5} parent=0 // pred_fallthru
    _
  // Predicated region
  $region6: #{forward.5} parent=0 // pred_check
    _
  $region7: #{forward.5} parent=0 // pred_check_branch
    %13 = sbr.rel (0) target = $region9
  $region8: #{forward.5} parent=0 // pred_region
    _
  $region9: #{forward.5} parent=0 // pred_fallthru
    _
  // Predicated region
  $region10: #{forward.5} parent=0 // pred_check
    _
  $region11: #{forward.5} parent=0 // pred_check_branch
    %15 = sbr.rel (0) target = $region13
  $region12: #{forward.5} parent=0 // pred_region
    _
  $region13: #{forward.5} parent=0 // pred_fallthru
    _
  // Predicated region
  $region14: #{forward.5} parent=0 // pred_check
    _
  $region15: #{forward.5} parent=0 // pred_check_branch
    %17 = sbr.rel (0) target = $region17
  $region16: #{forward.5} parent=0 // pred_region
    _
  $region17: #{forward.5} parent=0 // pred_fallthru
    _
  // Predicated region
  $region18: #{forward.5} parent=0 // pred_check
    _
  $region19: #{forward.5} parent=0 // pred_check_branch
    %19 = sbr.rel (0) target = $region21
  $region20: #{forward.5} parent=0 // pred_region
    _
  $region21: #{forward.5} parent=0 // pred_fallthru
    _
  %v21 = vld [vmem:[%s0] sm:$0xff]
  %v22 = vld [vmem:[%s0 + $0x8] sm:$0xff]
  %v23 = vld [vmem:[%s1] sm:$0xf]
  %v24 = vpack.c.bf16 %v22, %v21
  %v25 = vld [vmem:[%s2] sm:$0x1]
  %v27 = vlaneseq
  %v28 = vshrl.u32 %v27, 7
  %v29 = vsub.s32 0, %v28
  %v30 = vrot.slane %v25, %v29
  %vm32 = vcmask 64512
  %v34 = vsel %vm32, %v24, 0
  %vm36 = vcmask 1043456
  %v38 = vsel %vm36, %v23, 0
  %40 = vmatprep.subr.bf16.mxu0 0
  %41 = vmatpush1.bf16.msra.mxu0 0
  %42 = vmatprep.subr.bf16.mxu0 0
  %43 = vmatpush1.bf16.msra.mxu0 0
  %44 = vmatprep.subr.bf16.mxu0 0
  %45 = vmatpush1.bf16.msra.mxu0 0
  %46 = vmatprep.subr.bf16.mxu0 0
  %47 = vmatpush1.bf16.msra.mxu0 0
  %48 = vmatprep.subr.bf16.mxu0 0
  %49 = vmatpush1.bf16.msra.mxu0 0
  %50 = vmatprep.subr.bf16.mxu0 0
  %51 = vmatpush1.bf16.msra.mxu0 0
  %52 = vmatprep.subr.bf16.mxu0 0
  %53 = vmatpush1.bf16.msra.mxu0 0
  %54 = vmatprep.subr.bf16.mxu0 0
  %55 = vmatpush1.bf16.msra.mxu0 %v38
  %56 = vmatprep.subr.bf16.mxu0 0
  %57 = vmatpush2.bf16.msra.mxu0 0
  %58 = vmatprep.subr.bf16.mxu0 0
  %59 = vmatpush2.bf16.msra.mxu0 0
  %60 = vmatprep.subr.bf16.mxu0 0
  %61 = vmatpush2.bf16.msra.mxu0 0
  %62 = vmatprep.subr.bf16.mxu0 0
  %63 = vmatpush2.bf16.msra.mxu0 0
  %64 = vmatprep.subr.bf16.mxu0 0
  %65 = vmatpush2.bf16.msra.mxu0 0
  %66 = vmatprep.subr.bf16.mxu0 0
  %67 = vmatpush2.bf16.msra.mxu0 0
  %68 = vmatprep.subr.bf16.mxu0 0
  %69 = vmatpush2.bf16.msra.mxu0 0
  %70 = vmatprep.subr.bf16.mxu0 0
  %71 = vmatpush2.bf16.msra.mxu0 0
  %72 = vmatprep.mubr.bf16.mxu0 0
  %73 = vmatmul.mubr.bf16.gmra.mxu0 %v34
  %v74 = vpop.f32.mrf.mxu0
  %v75 = vadd.f32 %v30, %v74
  %v76 = vpop.f32.mrf.mxu0
  %v77 = vpop.f32.mrf.mxu0
  %v78 = vadd.f32 %v30, %v77
  %v79 = vpop.f32.mrf.mxu0
  %80 = vdwg.mxu0
  %v81 = vmul.f32 %v75, %v75
  %v82 = vmul.f32 %v78, %v78
  %v83 = vmul.f32 %v75, %v81
  %v84 = vmul.f32 %v78, %v82
  %v85 = vmul.f32 %v83, 0.044715
  %v86 = vmul.f32 %v84, 0.044715
  %v87 = vadd.f32 %v75, %v85
  %v88 = vadd.f32 %v78, %v86
  %v89 = vmul.f32 %v87, 0.7978846
  %v90 = vmul.f32 %v88, 0.7978846
  %v91 = vtanh.pop %v89
  %v92 = vtanh.pop %v90
  %v93 = vadd.f32 %v91, 1.0
  %v94 = vadd.f32 %v92, 1.0
  %v95 = vmul.f32 %v93, 0.5
  %v96 = vmul.f32 %v94, 0.5
  %v97 = vmul.f32 %v75, %v95
  %v98 = vmul.f32 %v78, %v96
  %v99 = vld [vmem:[%s3] sm:$0xf]
  %v100 = vld [vmem:[%s3 + $0x4] sm:$0xf]
  %v101 = vld [vmem:[%s3 + $0x8] sm:$0xf]
  %v102 = vld [vmem:[%s3 + $0xc] sm:$0xf]
  %v103 = vld [vmem:[%s3 + $0x10] sm:$0xf]
  %v104 = vld [vmem:[%s3 + $0x14] sm:$0xf]
  %v105 = vld [vmem:[%s3 + $0x18] sm:$0xf]
  %v106 = vld [vmem:[%s3 + $0x1c] sm:$0xf]
  %v107 = vld [vmem:[%s3 + $0x20] sm:$0xf]
  %v108 = vld [vmem:[%s3 + $0x24] sm:$0xf]
  %v109 = vld [vmem:[%s3 + $0x28] sm:$0xf]
  %v110 = vld [vmem:[%s3 + $0x2c] sm:$0xf]
  %v111 = vld [vmem:[%s3 + $0x30] sm:$0xf]
  %v112 = vld [vmem:[%s3 + $0x34] sm:$0xf]
  %v113 = vld [vmem:[%s3 + $0x38] sm:$0xf]
  %v114 = vld [vmem:[%s3 + $0x3c] sm:$0xf]
  %v115 = vpack.c.bf16 %v98, %v97
  %v116 = vld [vmem:[%s4] sm:$0x1]
  %v118 = vlaneseq
  %v119 = vshrl.u32 %v118, 7
  %v120 = vsub.s32 0, %v119
  %v121 = vrot.slane %v116, %v120
  %v139 = vunpack.c.l.b16 %v99
  %v140 = vunpack.c.l.b16 %v100
  %v141 = vunpack.c.l.b16 %v101
  %v142 = vunpack.c.l.b16 %v102
  %v143 = vunpack.c.l.b16 %v103
  %v144 = vunpack.c.l.b16 %v104
  %v145 = vunpack.c.l.b16 %v105
  %v146 = vunpack.c.l.b16 %v106
  %v147 = vunpack.c.l.b16 %v107
  %v148 = vunpack.c.l.b16 %v108
  %v149 = vunpack.c.l.b16 %v109
  %v150 = vunpack.c.l.b16 %v110
  %v151 = vunpack.c.l.b16 %v111
  %v152 = vunpack.c.l.b16 %v112
  %v153 = vunpack.c.l.b16 %v113
  %v154 = vunpack.c.l.b16 %v114
  %v155 = vpack.c.b16 %v140, %v139
  %v156 = vpack.c.b16 %v142, %v141
  %v157 = vpack.c.b16 %v144, %v143
  %v158 = vpack.c.b16 %v146, %v145
  %v159 = vpack.c.b16 %v148, %v147
  %v160 = vpack.c.b16 %v150, %v149
  %v161 = vpack.c.b16 %v152, %v151
  %v162 = vpack.c.b16 %v154, %v153
  %171 = vmatprep.subr.bf16.mxu0 0
  %172 = vmatpush1.bf16.msra.mxu0 %v162
  %173 = vmatprep.subr.bf16.mxu0 0
  %174 = vmatpush1.bf16.msra.mxu0 %v161
  %175 = vmatprep.subr.bf16.mxu0 0
  %176 = vmatpush1.bf16.msra.mxu0 %v160
  %177 = vmatprep.subr.bf16.mxu0 0
  %178 = vmatpush1.bf16.msra.mxu0 %v159
  %179 = vmatprep.subr.bf16.mxu0 0
  %180 = vmatpush1.bf16.msra.mxu0 %v158
  %181 = vmatprep.subr.bf16.mxu0 0
  %182 = vmatpush1.bf16.msra.mxu0 %v157
  %183 = vmatprep.subr.bf16.mxu0 0
  %184 = vmatpush1.bf16.msra.mxu0 %v156
  %185 = vmatprep.subr.bf16.mxu0 0
  %186 = vmatpush1.bf16.msra.mxu0 %v155
  %187 = vmatprep.subr.bf16.mxu0 0
  %188 = vmatpush2.bf16.msra.mxu0 0
  %189 = vmatprep.subr.bf16.mxu0 0
  %190 = vmatpush2.bf16.msra.mxu0 0
  %191 = vmatprep.subr.bf16.mxu0 0
  %192 = vmatpush2.bf16.msra.mxu0 0
  %193 = vmatprep.subr.bf16.mxu0 0
  %194 = vmatpush2.bf16.msra.mxu0 0
  %195 = vmatprep.subr.bf16.mxu0 0
  %196 = vmatpush2.bf16.msra.mxu0 0
  %197 = vmatprep.subr.bf16.mxu0 0
  %198 = vmatpush2.bf16.msra.mxu0 0
  %199 = vmatprep.subr.bf16.mxu0 0
  %200 = vmatpush2.bf16.msra.mxu0 0
  %201 = vmatprep.subr.bf16.mxu0 0
  %202 = vmatpush2.bf16.msra.mxu0 0
  %203 = vmatprep.mubr.bf16.mxu0 0
  %204 = vmatmul.mubr.bf16.gmra.mxu0 %v115
  %v205 = vpop.f32.mrf.mxu0
  %v206 = vadd.f32 %v121, %v205
  %v207 = vpop.f32.mrf.mxu0
  %v208 = vpop.f32.mrf.mxu0
  %v209 = vadd.f32 %v121, %v208
  %v210 = vpop.f32.mrf.mxu0
  %211 = vdwg.mxu0
  %vm212 = vcmask 261120
  %213 = vst.msk [vmem:[%s5] sm:$0xff] %vm212, %v206
  %214 = vst.msk [vmem:[%s5 + $0x8] sm:$0xff] %vm212, %v209
  // Predicated region
  $region22: #{forward.5} parent=0 // pred_check
    _
  $region23: #{forward.5} parent=0 // pred_check_branch
    %216 = sbr.rel (0) target = $region25
  $region24: #{forward.5} parent=0 // pred_region
    _
  $region25: #{forward.5} parent=0 // pred_fallthru
    _
  // Predicated region
  $region26: #{forward.5} parent=0 // pred_check
    _
  $region27: #{forward.5} parent=0 // pred_check_branch
    %218 = sbr.rel (0) target = $region29
  $region28: #{forward.5} parent=0 // pred_region
    _
  $region29: #{forward.5} parent=0 // pred_fallthru
    _

// kernel: forward.7
$region0: #{forward.7}
  #allocation0 [shape = 'u32[]', space=smem, size = 0x4, offset = 0x4, fixed_abs, tag = 'smem constant byte address 0x4 - core index']
  #allocation1 [shape = 'u32[144,128]{1,0:T(1,128)}', space=vmem, size = 0x12000, scoped, tag = 'internal scratch']
  %s0 = inlined_call_operand.vmem [shape: f32[2,16,32], index: 0, kind: input, shape index: {}]
  %s1 = inlined_call_operand.vmem [shape: f32[1,32], index: 1, kind: input, shape index: {}]
  %s2 = inlined_call_operand.vmem [shape: f32[1,32], index: 2, kind: input, shape index: {}]
  %s3 = inlined_call_operand.vmem [shape: bf16[128,256], index: 3, kind: input, shape index: {}]
  %s4 = inlined_call_operand.vmem [shape: f32[1,256], index: 4, kind: input, shape index: {}]
  %s5 = inlined_call_operand.vmem [shape: bf16[256,256], index: 5, kind: input, shape index: {}]
  %s6 = inlined_call_operand.vmem [shape: f32[1,256], index: 6, kind: input, shape index: {}]
  %s7 = inlined_call_operand.vmem [shape: bf16[256,128], index: 7, kind: input, shape index: {}]
  %s8 = inlined_call_operand.vmem [shape: f32[1,128], index: 8, kind: input, shape index: {}]
  %s9 = inlined_call_operand.hbm [shape: f32[2,128], index: 9, kind: output, shape index: {}]
  %s10 = sld [smem:[#allocation0]]
  $region46: #{forward.7} parent=0
    _
  %s12 = ssub.s32 1, %s10
  %s13 = scalar_select 0, %s12, %s10
  $region1: #{forward.7} parent=0
    #allocation2 [shape = 'u8[1024]{0}', space=vmem, size = 0x400, scoped, tag = 'output window, operand 0, single buffered']
    #allocation3 [shape = 's32[1]{0}', space=sflag, size = 0x4, scoped, tag = 'scoped memory for forward.7']
    %14 = vsyncpa [#allocation3], 0
    // Predicated region
    $region2: #{forward.7} parent=1 // pred_check
      _
    $region3: #{forward.7} parent=1 // pred_check_branch
      %16 = sbr.rel (0) target = $region5
    $region4: #{forward.7} parent=1 // pred_region
      _
    $region5: #{forward.7} parent=1 // pred_fallthru
      _
    // Predicated region
    $region6: #{forward.7} parent=1 // pred_check
      _
    $region7: #{forward.7} parent=1 // pred_check_branch
      %18 = sbr.rel (0) target = $region9
    $region8: #{forward.7} parent=1 // pred_region
      _
    $region9: #{forward.7} parent=1 // pred_fallthru
      _
    // Predicated region
    $region10: #{forward.7} parent=1 // pred_check
      _
    $region11: #{forward.7} parent=1 // pred_check_branch
      %20 = sbr.rel (0) target = $region13
    $region12: #{forward.7} parent=1 // pred_region
      _
    $region13: #{forward.7} parent=1 // pred_fallthru
      _
    // Predicated region
    $region14: #{forward.7} parent=1 // pred_check
      _
    $region15: #{forward.7} parent=1 // pred_check_branch
      %22 = sbr.rel (0) target = $region17
    $region16: #{forward.7} parent=1 // pred_region
      _
    $region17: #{forward.7} parent=1 // pred_fallthru
      _
    // Predicated region
    $region18: #{forward.7} parent=1 // pred_check
      _
    $region19: #{forward.7} parent=1 // pred_check_branch
      %24 = sbr.rel (0) target = $region21
    $region20: #{forward.7} parent=1 // pred_region
      _
    $region21: #{forward.7} parent=1 // pred_fallthru
      _
    // Predicated region
    $region22: #{forward.7} parent=1 // pred_check
      _
    $region23: #{forward.7} parent=1 // pred_check_branch
      %26 = sbr.rel (0) target = $region25
    $region24: #{forward.7} parent=1 // pred_region
      _
    $region25: #{forward.7} parent=1 // pred_fallthru
      _
    // Predicated region
    $region26: #{forward.7} parent=1 // pred_check
      _
    $region27: #{forward.7} parent=1 // pred_check_branch
      %28 = sbr.rel (0) target = $region29
    $region28: #{forward.7} parent=1 // pred_region
      _
    $region29: #{forward.7} parent=1 // pred_fallthru
      _
    // Predicated region
    $region30: #{forward.7} parent=1 // pred_check
      _
    $region31: #{forward.7} parent=1 // pred_check_branch
      %30 = sbr.rel (0) target = $region33
    $region32: #{forward.7} parent=1 // pred_region
      _
    $region33: #{forward.7} parent=1 // pred_fallthru
      _
    // Predicated region
    $region34: #{forward.7} parent=1 // pred_check
      _
    $region35: #{forward.7} parent=1 // pred_check_branch
      %32 = sbr.rel (0) target = $region37
    $region36: #{forward.7} parent=1 // pred_region
      _
    $region37: #{forward.7} parent=1 // pred_fallthru
      _
    %v34 = vld [vmem:[%s0] sm:$0xff]
    %v35 = vld [vmem:[%s0 + $0x8] sm:$0xff]
    %v36 = vld [vmem:[%s0 + $0x10] sm:$0xff]
    %v37 = vld [vmem:[%s0 + $0x18] sm:$0xff]
    %v38 = vld [vmem:[%s1] sm:$0x1]
    %v39 = vld [vmem:[%s2] sm:$0x1]
    %vm40 = vcmask 261120
    %v41 = vsel %vm40, %v34, 0.0
    %42 = vadd.xlane.f32.xlu0 %v41
    %v43 = vpop.xlane.xlu0 %42
    %v44 = vsel %vm40, %v35, 0.0
    %45 = vadd.xlane.f32.xlu0 %v44
    %v46 = vpop.xlane.xlu0 %45
    %v47 = vsel %vm40, %v36, 0.0
    %48 = vadd.xlane.f32.xlu0 %v47
    %v49 = vpop.xlane.xlu0 %48
    %v50 = vsel %vm40, %v37, 0.0
    %51 = vadd.xlane.f32.xlu0 %v50
    %v52 = vpop.xlane.xlu0 %51
    %v53 = vrcp.pop 32.0
    %v54 = vmul.f32 %v43, %v53
    %v55 = vmul.f32 %v46, %v53
    %v56 = vmul.f32 %v49, %v53
    %v57 = vmul.f32 %v52, %v53
    %v58 = vsub.f32 %v34, %v54
    %v59 = vsub.f32 %v35, %v55
    %v60 = vsub.f32 %v36, %v56
    %v61 = vsub.f32 %v37, %v57
    %v62 = vmul.f32 %v58, %v58
    %v63 = vmul.f32 %v59, %v59
    %v64 = vmul.f32 %v60, %v60
    %v65 = vmul.f32 %v61, %v61
    %v66 = vsel %vm40, %v62, 0.0
    %67 = vadd.xlane.f32.xlu0 %v66
    %v68 = vpop.xlane.xlu0 %67
    %v69 = vsel %vm40, %v63, 0.0
    %70 = vadd.xlane.f32.xlu0 %v69
    %v71 = vpop.xlane.xlu0 %70
    %v72 = vsel %vm40, %v64, 0.0
    %73 = vadd.xlane.f32.xlu0 %v72
    %v74 = vpop.xlane.xlu0 %73
    %v75 = vsel %vm40, %v65, 0.0
    %76 = vadd.xlane.f32.xlu0 %v75
    %v77 = vpop.xlane.xlu0 %76
    %v78 = vmul.f32 %v68, %v53
    %v79 = vmul.f32 %v71, %v53
    %v80 = vmul.f32 %v74, %v53
    %v81 = vmul.f32 %v77, %v53
    %v82 = vadd.f32 %v78, 1e-05
    %v83 = vadd.f32 %v79, 1e-05
    %v84 = vadd.f32 %v80, 1e-05
    %v85 = vadd.f32 %v81, 1e-05
    %v86 = vrsqrt.pop %v82
    %v87 = vrsqrt.pop %v83
    %v88 = vrsqrt.pop %v84
    %v89 = vrsqrt.pop %v85
    %v90 = vmul.f32 %v58, %v86
    %v91 = vmul.f32 %v59, %v87
    %v92 = vmul.f32 %v60, %v88
    %v93 = vmul.f32 %v61, %v89
    %v95 = vlaneseq
    %v96 = vshrl.u32 %v95, 7
    %v97 = vsub.s32 0, %v96
    %v98 = vrot.slane %v38, %v97
    %v100 = vmul.f32 %v90, %v98
    %v101 = vmul.f32 %v91, %v98
    %v102 = vmul.f32 %v92, %v98
    %v103 = vmul.f32 %v93, %v98
    %v105 = vlaneseq
    %v106 = vshrl.u32 %v105, 7
    %v107 = vsub.s32 0, %v106
    %v108 = vrot.slane %v39, %v107
    %v110 = vadd.f32 %v100, %v108
    %v111 = vadd.f32 %v101, %v108
    %v112 = vadd.f32 %v102, %v108
    %v113 = vadd.f32 %v103, %v108
    %v114 = vlaneseq
    %v115 = vshrl.u32 %v114, 7
    %v116 = vadd.s32 %v115, 8
    %vm117 = vcmp.ge.s32.totalorder %v115, 3
    %vm118 = vcmp.ge.s32.totalorder %v116, 3
    %vm119 = vcmp.lt.s32.totalorder %v115, 11
    %vm120 = vcmp.lt.s32.totalorder %v116, 11
    %vm121 = vmand %vm117, %vm119
    %vm122 = vmand %vm118, %vm120
    %v123 = vsel %vm121, %v110, -1e+30
    %v124 = vsel %vm122, %v111, -1e+30
    %v125 = vsel %vm121, %v112, -1e+30
    %v126 = vsel %vm122, %v113, -1e+30
    %v127 = vsel %vm40, %v123, -inf
    %v128 = vsel %vm40, %v124, -inf
    %v129 = vmax.f32 %v127, %v128
    %v130 = vrot.slane %v129, 4
    %v131 = vmax.f32 %v129, %v130
    %v132 = vrot.slane %v131, 2
    %v133 = vmax.f32 %v131, %v132
    %v134 = vrot.slane %v133, 1
    %v135 = vmax.f32 %v133, %v134
    %v136 = vsel %vm40, %v125, -inf
    %v137 = vsel %vm40, %v126, -inf
    %v138 = vmax.f32 %v136, %v137
    %v139 = vrot.slane %v138, 4
    %v140 = vmax.f32 %v138, %v139
    %v141 = vrot.slane %v140, 2
    %v142 = vmax.f32 %v140, %v141
    %v143 = vrot.slane %v142, 1
    %v144 = vmax.f32 %v142, %v143
    %v147 = vrot.slane %v112, 7
    %vm148 = vcmask 1041409
    %v149 = vsel %vm148, %v147, %v110
    %v151 = vrot.slane %v110, 1
    %v152 = vsel %vm148, %v112, %v151
    %153 = vrot.lane.b32.xlu0 %v152, 32
    %v154 = vpop.permute.xlu0 %153
    %v156 = vrot.slane %v110, 2
    %v157 = vrot.slane %v112, 1
    %v158 = vsel %vm148, %v157, %v156
    %159 = vrot.lane.b32.xlu0 %v158, 64
    %v160 = vpop.permute.xlu0 %159
    %v164 = vsel %vm148, %v144, %v135
    %165 = vrot.lane.b32.xlu0 %v164, 96
    %v166 = vpop.permute.xlu0 %165
    %v168 = vsel %vm40, %v149, %v154
    %vm169 = vcmask 523264
    %v170 = vsel %vm169, %v168, %v160
    %vm171 = vcmask 785408
    %v172 = vsel %vm171, %v170, %v166
    %v173 = vld [vmem:[%s3] sm:$0xff]
    %v174 = vld [vmem:[%s3 + $0x8] sm:$0xff]
    %v175 = vld [vmem:[%s3 + $0x10] sm:$0xff]
    %v176 = vld [vmem:[%s3 + $0x18] sm:$0xff]
    %v177 = vld [vmem:[%s3 + $0x20] sm:$0xff]
    %v178 = vld [vmem:[%s3 + $0x28] sm:$0xff]
    %v179 = vld [vmem:[%s3 + $0x30] sm:$0xff]
    %v180 = vld [vmem:[%s3 + $0x38] sm:$0xff]
    %v181 = vld [vmem:[%s3 + $0x40] sm:$0xff]
    %v182 = vld [vmem:[%s3 + $0x48] sm:$0xff]
    %v183 = vld [vmem:[%s3 + $0x50] sm:$0xff]
    %v184 = vld [vmem:[%s3 + $0x58] sm:$0xff]
    %v185 = vld [vmem:[%s3 + $0x60] sm:$0xff]
    %v186 = vld [vmem:[%s3 + $0x68] sm:$0xff]
    %v187 = vld [vmem:[%s3 + $0x70] sm:$0xff]
    %v188 = vld [vmem:[%s3 + $0x78] sm:$0xff]
    %v189 = vpack.c.bf16 %v172, %v172
    %v190 = vld [vmem:[%s4] sm:$0x3]
    %v192 = vlaneseq
    %v193 = vshrl.u32 %v192, 7
    %v194 = vsub.s32 0, %v193
    %v195 = vrot.slane %v190, %v194
    %v196 = vlaneseq
    %v197 = vshrl.u32 %v196, 7
    %v198 = vsub.s32 1, %v197
    %v199 = vrot.slane %v190, %v198
    %v218 = vunpack.c.l.b16 %v173
    %v219 = vunpack.c.h.b16 %v173
    %v220 = vunpack.c.l.b16 %v174
    %v221 = vunpack.c.h.b16 %v174
    %v222 = vunpack.c.l.b16 %v175
    %v223 = vunpack.c.h.b16 %v175
    %v224 = vunpack.c.l.b16 %v176
    %v225 = vunpack.c.h.b16 %v176
    %v226 = vunpack.c.l.b16 %v177
    %v227 = vunpack.c.h.b16 %v177
    %v228 = vunpack.c.l.b16 %v178
    %v229 = vunpack.c.h.b16 %v178
    %v230 = vunpack.c.l.b16 %v179
    %v231 = vunpack.c.h.b16 %v179
    %v232 = vunpack.c.l.b16 %v180
    %v233 = vunpack.c.h.b16 %v180
    %v234 = vunpack.c.l.b16 %v181
    %v235 = vunpack.c.h.b16 %v181
    %v236 = vunpack.c.l.b16 %v182
    %v237 = vunpack.c.h.b16 %v182
    %v238 = vunpack.c.l.b16 %v183
    %v239 = vunpack.c.h.b16 %v183
    %v240 = vunpack.c.l.b16 %v184
    %v241 = vunpack.c.h.b16 %v184
    %v242 = vunpack.c.l.b16 %v185
    %v243 = vunpack.c.h.b16 %v185
    %v244 = vunpack.c.l.b16 %v186
    %v245 = vunpack.c.h.b16 %v186
    %v246 = vunpack.c.l.b16 %v187
    %v247 = vunpack.c.h.b16 %v187
    %v248 = vunpack.c.l.b16 %v188
    %v249 = vunpack.c.h.b16 %v188
    %v250 = vpack.c.b16 %v220, %v218
    %v251 = vpack.c.b16 %v221, %v219
    %v252 = vpack.c.b16 %v224, %v222
    %v253 = vpack.c.b16 %v225, %v223
    %v254 = vpack.c.b16 %v228, %v226
    %v255 = vpack.c.b16 %v229, %v227
    %v256 = vpack.c.b16 %v232, %v230
    %v257 = vpack.c.b16 %v233, %v231
    %v258 = vpack.c.b16 %v236, %v234
    %v259 = vpack.c.b16 %v237, %v235
    %v260 = vpack.c.b16 %v240, %v238
    %v261 = vpack.c.b16 %v241, %v239
    %v262 = vpack.c.b16 %v244, %v242
    %v263 = vpack.c.b16 %v245, %v243
    %v264 = vpack.c.b16 %v248, %v246
    %v265 = vpack.c.b16 %v249, %v247
    %282 = vmatprep.subr.bf16.mxu0 %v265
    %283 = vmatpush1.bf16.msra.mxu0 %v264
    %284 = vmatprep.subr.bf16.mxu0 %v263
    %285 = vmatpush1.bf16.msra.mxu0 %v262
    %286 = vmatprep.subr.bf16.mxu0 %v261
    %287 = vmatpush1.bf16.msra.mxu0 %v260
    %288 = vmatprep.subr.bf16.mxu0 %v259
    %289 = vmatpush1.bf16.msra.mxu0 %v258
    %290 = vmatprep.subr.bf16.mxu0 %v257
    %291 = vmatpush1.bf16.msra.mxu0 %v256
    %292 = vmatprep.subr.bf16.mxu0 %v255
    %293 = vmatpush1.bf16.msra.mxu0 %v254
    %294 = vmatprep.subr.bf16.mxu0 %v253
    %295 = vmatpush1.bf16.msra.mxu0 %v252
    %296 = vmatprep.subr.bf16.mxu0 %v251
    %297 = vmatpush1.bf16.msra.mxu0 %v250
    %298 = vmatprep.subr.bf16.mxu0 0
    %299 = vmatpush2.bf16.msra.mxu0 0
    %300 = vmatprep.subr.bf16.mxu0 0
    %301 = vmatpush2.bf16.msra.mxu0 0
    %302 = vmatprep.subr.bf16.mxu0 0
    %303 = vmatpush2.bf16.msra.mxu0 0
    %304 = vmatprep.subr.bf16.mxu0 0
    %305 = vmatpush2.bf16.msra.mxu0 0
    %306 = vmatprep.subr.bf16.mxu0 0
    %307 = vmatpush2.bf16.msra.mxu0 0
    %308 = vmatprep.subr.bf16.mxu0 0
    %309 = vmatpush2.bf16.msra.mxu0 0
    %310 = vmatprep.subr.bf16.mxu0 0
    %311 = vmatpush2.bf16.msra.mxu0 0
    %312 = vmatprep.subr.bf16.mxu0 0
    %313 = vmatpush2.bf16.msra.mxu0 0
    %314 = vmatprep.mubr.bf16.mxu0 0
    %315 = vmatmul.mubr.bf16.gmra.mxu0 %v189
    %v316 = vpop.f32.mrf.mxu0
    %v317 = vadd.f32 %v195, %v316
    %v318 = vpop.f32.mrf.mxu0
    %v319 = vadd.f32 %v199, %v318
    %v320 = vpop.f32.mrf.mxu0
    %v321 = vpop.f32.mrf.mxu0
    %322 = vdwg.mxu0
    %v323 = vmax.f32 %v317, 0.0
    %v324 = vmax.f32 %v319, 0.0
    %v325 = vld [vmem:[%s5] sm:$0xff]
    %v326 = vld [vmem:[%s5 + $0x8] sm:$0xff]
    %v327 = vld [vmem:[%s5 + $0x10] sm:$0xff]
    %v328 = vld [vmem:[%s5 + $0x18] sm:$0xff]
    %v329 = vld [vmem:[%s5 + $0x20] sm:$0xff]
    %v330 = vld [vmem:[%s5 + $0x28] sm:$0xff]
    %v331 = vld [vmem:[%s5 + $0x30] sm:$0xff]
    %v332 = vld [vmem:[%s5 + $0x38] sm:$0xff]
    %v333 = vld [vmem:[%s5 + $0x40] sm:$0xff]
    %v334 = vld [vmem:[%s5 + $0x48] sm:$0xff]
    %v335 = vld [vmem:[%s5 + $0x50] sm:$0xff]
    %v336 = vld [vmem:[%s5 + $0x58] sm:$0xff]
    %v337 = vld [vmem:[%s5 + $0x60] sm:$0xff]
    %v338 = vld [vmem:[%s5 + $0x68] sm:$0xff]
    %v339 = vld [vmem:[%s5 + $0x70] sm:$0xff]
    %v340 = vld [vmem:[%s5 + $0x78] sm:$0xff]
    %v341 = vld [vmem:[%s5 + $0x80] sm:$0xff]
    %v342 = vld [vmem:[%s5 + $0x88] sm:$0xff]
    %v343 = vld [vmem:[%s5 + $0x90] sm:$0xff]
    %v344 = vld [vmem:[%s5 + $0x98] sm:$0xff]
    %v345 = vld [vmem:[%s5 + $0xa0] sm:$0xff]
    %v346 = vld [vmem:[%s5 + $0xa8] sm:$0xff]
    %v347 = vld [vmem:[%s5 + $0xb0] sm:$0xff]
    %v348 = vld [vmem:[%s5 + $0xb8] sm:$0xff]
    %v349 = vld [vmem:[%s5 + $0xc0] sm:$0xff]
    %v350 = vld [vmem:[%s5 + $0xc8] sm:$0xff]
    %v351 = vld [vmem:[%s5 + $0xd0] sm:$0xff]
    %v352 = vld [vmem:[%s5 + $0xd8] sm:$0xff]
    %v353 = vld [vmem:[%s5 + $0xe0] sm:$0xff]
    %v354 = vld [vmem:[%s5 + $0xe8] sm:$0xff]
    %v355 = vld [vmem:[%s5 + $0xf0] sm:$0xff]
    %v356 = vld [vmem:[%s5 + $0xf8] sm:$0xff]
    %v357 = vpack.c.bf16 %v323, %v323
    %v358 = vpack.c.bf16 %v324, %v324
    %v359 = vld [vmem:[%s6] sm:$0x3]
    %v361 = vlaneseq
    %v362 = vshrl.u32 %v361, 7
    %v363 = vsub.s32 0, %v362
    %v364 = vrot.slane %v359, %v363
    %v365 = vlaneseq
    %v366 = vshrl.u32 %v365, 7
    %v367 = vsub.s32 1, %v366
    %v368 = vrot.slane %v359, %v367
    %v403 = vunpack.c.l.b16 %v325
    %v404 = vunpack.c.h.b16 %v325
    %v405 = vunpack.c.l.b16 %v326
    %v406 = vunpack.c.h.b16 %v326
    %v407 = vunpack.c.l.b16 %v327
    %v408 = vunpack.c.h.b16 %v327
    %v409 = vunpack.c.l.b16 %v328
    %v410 = vunpack.c.h.b16 %v328
    %v411 = vunpack.c.l.b16 %v329
    %v412 = vunpack.c.h.b16 %v329
    %v413 = vunpack.c.l.b16 %v330
    %v414 = vunpack.c.h.b16 %v330
    %v415 = vunpack.c.l.b16 %v331
    %v416 = vunpack.c.h.b16 %v331
    %v417 = vunpack.c.l.b16 %v332
    %v418 = vunpack.c.h.b16 %v332
    %v419 = vunpack.c.l.b16 %v333
    %v420 = vunpack.c.h.b16 %v333
    %v421 = vunpack.c.l.b16 %v334
    %v422 = vunpack.c.h.b16 %v334
    %v423 = vunpack.c.l.b16 %v335
    %v424 = vunpack.c.h.b16 %v335
    %v425 = vunpack.c.l.b16 %v336
    %v426 = vunpack.c.h.b16 %v336
    %v427 = vunpack.c.l.b16 %v337
    %v428 = vunpack.c.h.b16 %v337
    %v429 = vunpack.c.l.b16 %v338
    %v430 = vunpack.c.h.b16 %v338
    %v431 = vunpack.c.l.b16 %v339
    %v432 = vunpack.c.h.b16 %v339
    %v433 = vunpack.c.l.b16 %v340
    %v434 = vunpack.c.h.b16 %v340
    %v435 = vunpack.c.l.b16 %v341
    %v436 = vunpack.c.h.b16 %v341
    %v437 = vunpack.c.l.b16 %v342
    %v438 = vunpack.c.h.b16 %v342
    %v439 = vunpack.c.l.b16 %v343
    %v440 = vunpack.c.h.b16 %v343
    %v441 = vunpack.c.l.b16 %v344
    %v442 = vunpack.c.h.b16 %v344
    %v443 = vunpack.c.l.b16 %v345
    %v444 = vunpack.c.h.b16 %v345
    %v445 = vunpack.c.l.b16 %v346
    %v446 = vunpack.c.h.b16 %v346
    %v447 = vunpack.c.l.b16 %v347
    %v448 = vunpack.c.h.b16 %v347
    %v449 = vunpack.c.l.b16 %v348
    %v450 = vunpack.c.h.b16 %v348
    %v451 = vunpack.c.l.b16 %v349
    %v452 = vunpack.c.h.b16 %v349
    %v453 = vunpack.c.l.b16 %v350
    %v454 = vunpack.c.h.b16 %v350
    %v455 = vunpack.c.l.b16 %v351
    %v456 = vunpack.c.h.b16 %v351
    %v457 = vunpack.c.l.b16 %v352
    %v458 = vunpack.c.h.b16 %v352
    %v459 = vunpack.c.l.b16 %v353
    %v460 = vunpack.c.h.b16 %v353
    %v461 = vunpack.c.l.b16 %v354
    %v462 = vunpack.c.h.b16 %v354
    %v463 = vunpack.c.l.b16 %v355
    %v464 = vunpack.c.h.b16 %v355
    %v465 = vunpack.c.l.b16 %v356
    %v466 = vunpack.c.h.b16 %v356
    %v467 = vpack.c.b16 %v405, %v403
    %v468 = vpack.c.b16 %v406, %v404
    %v469 = vpack.c.b16 %v409, %v407
    %v470 = vpack.c.b16 %v410, %v408
    %v471 = vpack.c.b16 %v413, %v411
    %v472 = vpack.c.b16 %v414, %v412
    %v473 = vpack.c.b16 %v417, %v415
    %v474 = vpack.c.b16 %v418, %v416
    %v475 = vpack.c.b16 %v421, %v419
    %v476 = vpack.c.b16 %v422, %v420
    %v477 = vpack.c.b16 %v425, %v423
    %v478 = vpack.c.b16 %v426, %v424
    %v479 = vpack.c.b16 %v429, %v427
    %v480 = vpack.c.b16 %v430, %v428
    %v481 = vpack.c.b16 %v433, %v431
    %v482 = vpack.c.b16 %v434, %v432
    %v483 = vpack.c.b16 %v437, %v435
    %v484 = vpack.c.b16 %v438, %v436
    %v485 = vpack.c.b16 %v441, %v439
    %v486 = vpack.c.b16 %v442, %v440
    %v487 = vpack.c.b16 %v445, %v443
    %v488 = vpack.c.b16 %v446, %v444
    %v489 = vpack.c.b16 %v449, %v447
    %v490 = vpack.c.b16 %v450, %v448
    %v491 = vpack.c.b16 %v453, %v451
    %v492 = vpack.c.b16 %v454, %v452
    %v493 = vpack.c.b16 %v457, %v455
    %v494 = vpack.c.b16 %v458, %v456
    %v495 = vpack.c.b16 %v461, %v459
    %v496 = vpack.c.b16 %v462, %v460
    %v497 = vpack.c.b16 %v465, %v463
    %v498 = vpack.c.b16 %v466, %v464
    %531 = vmatprep.subr.bf16.mxu0 %v482
    %532 = vmatpush1.bf16.msra.mxu0 %v481
    %533 = vmatprep.subr.bf16.mxu0 %v480
    %534 = vmatpush1.bf16.msra.mxu0 %v479
    %535 = vmatprep.subr.bf16.mxu0 %v478
    %536 = vmatpush1.bf16.msra.mxu0 %v477
    %537 = vmatprep.subr.bf16.mxu0 %v476
    %538 = vmatpush1.bf16.msra.mxu0 %v475
    %539 = vmatprep.subr.bf16.mxu0 %v474
    %540 = vmatpush1.bf16.msra.mxu0 %v473
    %541 = vmatprep.subr.bf16.mxu0 %v472
    %542 = vmatpush1.bf16.msra.mxu0 %v471
    %543 = vmatprep.subr.bf16.mxu0 %v470
    %544 = vmatpush1.bf16.msra.mxu0 %v469
    %545 = vmatprep.subr.bf16.mxu0 %v468
    %546 = vmatpush1.bf16.msra.mxu0 %v467
    %547 = vmatprep.subr.bf16.mxu0 %v498
    %548 = vmatpush2.bf16.msra.mxu0 %v497
    %549 = vmatprep.subr.bf16.mxu0 %v496
    %550 = vmatpush2.bf16.msra.mxu0 %v495
    %551 = vmatprep.subr.bf16.mxu0 %v494
    %552 = vmatpush2.bf16.msra.mxu0 %v493
    %553 = vmatprep.subr.bf16.mxu0 %v492
    %554 = vmatpush2.bf16.msra.mxu0 %v491
    %555 = vmatprep.subr.bf16.mxu0 %v490
    %556 = vmatpush2.bf16.msra.mxu0 %v489
    %557 = vmatprep.subr.bf16.mxu0 %v488
    %558 = vmatpush2.bf16.msra.mxu0 %v487
    %559 = vmatprep.subr.bf16.mxu0 %v486
    %560 = vmatpush2.bf16.msra.mxu0 %v485
    %561 = vmatprep.subr.bf16.mxu0 %v484
    %562 = vmatpush2.bf16.msra.mxu0 %v483
    %563 = vmatprep.mubr.bf16.mxu0 %v358
    %564 = vmatmul.mubr.bf16.gmra.mxu0 %v357
    %v565 = vpop.f32.mrf.mxu0
    %v566 = vadd.f32 %v364, %v565
    %v567 = vpop.f32.mrf.mxu0
    %v568 = vadd.f32 %v368, %v567
    %v569 = vpop.f32.mrf.mxu0
    %v570 = vpop.f32.mrf.mxu0
    %571 = vdwg.mxu0
    %v572 = vmax.f32 %v566, 0.0
    %v573 = vmax.f32 %v568, 0.0
    %v574 = vld [vmem:[%s7] sm:$0xf]
    %v575 = vld [vmem:[%s7 + $0x4] sm:$0xf]
    %v576 = vld [vmem:[%s7 + $0x8] sm:$0xf]
    %v577 = vld [vmem:[%s7 + $0xc] sm:$0xf]
    %v578 = vld [vmem:[%s7 + $0x10] sm:$0xf]
    %v579 = vld [vmem:[%s7 + $0x14] sm:$0xf]
    %v580 = vld [vmem:[%s7 + $0x18] sm:$0xf]
    %v581 = vld [vmem:[%s7 + $0x1c] sm:$0xf]
    %v582 = vld [vmem:[%s7 + $0x20] sm:$0xf]
    %v583 = vld [vmem:[%s7 + $0x24] sm:$0xf]
    %v584 = vld [vmem:[%s7 + $0x28] sm:$0xf]
    %v585 = vld [vmem:[%s7 + $0x2c] sm:$0xf]
    %v586 = vld [vmem:[%s7 + $0x30] sm:$0xf]
    %v587 = vld [vmem:[%s7 + $0x34] sm:$0xf]
    %v588 = vld [vmem:[%s7 + $0x38] sm:$0xf]
    %v589 = vld [vmem:[%s7 + $0x3c] sm:$0xf]
    %v590 = vld [vmem:[%s7 + $0x40] sm:$0xf]
    %v591 = vld [vmem:[%s7 + $0x44] sm:$0xf]
    %v592 = vld [vmem:[%s7 + $0x48] sm:$0xf]
    %v593 = vld [vmem:[%s7 + $0x4c] sm:$0xf]
    %v594 = vld [vmem:[%s7 + $0x50] sm:$0xf]
    %v595 = vld [vmem:[%s7 + $0x54] sm:$0xf]
    %v596 = vld [vmem:[%s7 + $0x58] sm:$0xf]
    %v597 = vld [vmem:[%s7 + $0x5c] sm:$0xf]
    %v598 = vld [vmem:[%s7 + $0x60] sm:$0xf]
    %v599 = vld [vmem:[%s7 + $0x64] sm:$0xf]
    %v600 = vld [vmem:[%s7 + $0x68] sm:$0xf]
    %v601 = vld [vmem:[%s7 + $0x6c] sm:$0xf]
    %v602 = vld [vmem:[%s7 + $0x70] sm:$0xf]
    %v603 = vld [vmem:[%s7 + $0x74] sm:$0xf]
    %v604 = vld [vmem:[%s7 + $0x78] sm:$0xf]
    %v605 = vld [vmem:[%s7 + $0x7c] sm:$0xf]
    %v606 = vpack.c.bf16 %v572, %v572
    %v607 = vpack.c.bf16 %v573, %v573
    %v608 = vld [vmem:[%s8] sm:$0x1]
    %v610 = vlaneseq
    %v611 = vshrl.u32 %v610, 7
    %v612 = vsub.s32 0, %v611
    %v613 = vrot.slane %v608, %v612
    %v647 = vunpack.c.l.b16 %v574
    %v648 = vunpack.c.l.b16 %v575
    %v649 = vunpack.c.l.b16 %v576
    %v650 = vunpack.c.l.b16 %v577
    %v651 = vunpack.c.l.b16 %v578
    %v652 = vunpack.c.l.b16 %v579
    %v653 = vunpack.c.l.b16 %v580
    %v654 = vunpack.c.l.b16 %v581
    %v655 = vunpack.c.l.b16 %v582
    %v656 = vunpack.c.l.b16 %v583
    %v657 = vunpack.c.l.b16 %v584
    %v658 = vunpack.c.l.b16 %v585
    %v659 = vunpack.c.l.b16 %v586
    %v660 = vunpack.c.l.b16 %v587
    %v661 = vunpack.c.l.b16 %v588
    %v662 = vunpack.c.l.b16 %v589
    %v663 = vunpack.c.l.b16 %v590
    %v664 = vunpack.c.l.b16 %v591
    %v665 = vunpack.c.l.b16 %v592
    %v666 = vunpack.c.l.b16 %v593
    %v667 = vunpack.c.l.b16 %v594
    %v668 = vunpack.c.l.b16 %v595
    %v669 = vunpack.c.l.b16 %v596
    %v670 = vunpack.c.l.b16 %v597
    %v671 = vunpack.c.l.b16 %v598
    %v672 = vunpack.c.l.b16 %v599
    %v673 = vunpack.c.l.b16 %v600
    %v674 = vunpack.c.l.b16 %v601
    %v675 = vunpack.c.l.b16 %v602
    %v676 = vunpack.c.l.b16 %v603
    %v677 = vunpack.c.l.b16 %v604
    %v678 = vunpack.c.l.b16 %v605
    %v679 = vpack.c.b16 %v648, %v647
    %v680 = vpack.c.b16 %v650, %v649
    %v681 = vpack.c.b16 %v652, %v651
    %v682 = vpack.c.b16 %v654, %v653
    %v683 = vpack.c.b16 %v656, %v655
    %v684 = vpack.c.b16 %v658, %v657
    %v685 = vpack.c.b16 %v660, %v659
    %v686 = vpack.c.b16 %v662, %v661
    %v687 = vpack.c.b16 %v664, %v663
    %v688 = vpack.c.b16 %v666, %v665
    %v689 = vpack.c.b16 %v668, %v667
    %v690 = vpack.c.b16 %v670, %v669
    %v691 = vpack.c.b16 %v672, %v671
    %v692 = vpack.c.b16 %v674, %v673
    %v693 = vpack.c.b16 %v676, %v675
    %v694 = vpack.c.b16 %v678, %v677
    %711 = vmatprep.subr.bf16.mxu0 0
    %712 = vmatpush1.bf16.msra.mxu0 %v686
    %713 = vmatprep.subr.bf16.mxu0 0
    %714 = vmatpush1.bf16.msra.mxu0 %v685
    %715 = vmatprep.subr.bf16.mxu0 0
    %716 = vmatpush1.bf16.msra.mxu0 %v684
    %717 = vmatprep.subr.bf16.mxu0 0
    %718 = vmatpush1.bf16.msra.mxu0 %v683
    %719 = vmatprep.subr.bf16.mxu0 0
    %720 = vmatpush1.bf16.msra.mxu0 %v682
    %721 = vmatprep.subr.bf16.mxu0 0
    %722 = vmatpush1.bf16.msra.mxu0 %v681
    %723 = vmatprep.subr.bf16.mxu0 0
    %724 = vmatpush1.bf16.msra.mxu0 %v680
    %725 = vmatprep.subr.bf16.mxu0 0
    %726 = vmatpush1.bf16.msra.mxu0 %v679
    %727 = vmatprep.subr.bf16.mxu0 0
    %728 = vmatpush2.bf16.msra.mxu0 %v694
    %729 = vmatprep.subr.bf16.mxu0 0
    %730 = vmatpush2.bf16.msra.mxu0 %v693
    %731 = vmatprep.subr.bf16.mxu0 0
    %732 = vmatpush2.bf16.msra.mxu0 %v692
    %733 = vmatprep.subr.bf16.mxu0 0
    %734 = vmatpush2.bf16.msra.mxu0 %v691
    %735 = vmatprep.subr.bf16.mxu0 0
    %736 = vmatpush2.bf16.msra.mxu0 %v690
    %737 = vmatprep.subr.bf16.mxu0 0
    %738 = vmatpush2.bf16.msra.mxu0 %v689
    %739 = vmatprep.subr.bf16.mxu0 0
    %740 = vmatpush2.bf16.msra.mxu0 %v688
    %741 = vmatprep.subr.bf16.mxu0 0
    %742 = vmatpush2.bf16.msra.mxu0 %v687
    %743 = vmatprep.mubr.bf16.mxu0 %v607
    %744 = vmatmul.mubr.bf16.gmra.mxu0 %v606
    %v745 = vpop.f32.mrf.mxu0
    %v746 = vadd.f32 %v613, %v745
    %v747 = vpop.f32.mrf.mxu0
    %v748 = vpop.f32.mrf.mxu0
    %v749 = vpop.f32.mrf.mxu0
    %750 = vdwg.mxu0
    %751 = vst [vmem:[#allocation2] sm:$0x3] %v746
    // Predicated region
    $region38: #{forward.7} parent=1 // pred_check
      _
    $region39: #{forward.7} parent=1 // pred_check_branch
      %753 = sbr.rel (0) target = $region41
    $region40: #{forward.7} parent=1 // pred_region
      %s755 = ssub.s32 32, 32
      %756 = vsyncadd [#allocation3], %s755
      %s758 = sshll.u32 [#allocation2], 4
      %s759 = int_to_ptr.vmem [resolvable:$true] %s758
      %761 = dma.vmem_to_hbm [thread:$0]  %s759, 32, %s9, [#allocation3]
    $region41: #{forward.7} parent=1 // pred_fallthru
      _
    // Predicated region
    $region42: #{forward.7} parent=1 // pred_check
      _
    $region43: #{forward.7} parent=1 // pred_check_branch
      %763 = sbr.rel (0) target = $region45
    $region44: #{forward.7} parent=1 // pred_region
      %764 = dma.done [#allocation3], 32
    $region45: #{forward.7} parent=1 // pred_fallthru
      _
    %765 = vsyncpa [#allocation3], 1

// kernel: forward.4
$region0: #{forward.4}
  #allocation0 [shape = 'u32[]', space=smem, size = 0x4, offset = 0x4, fixed_abs, tag = 'smem constant byte address 0x4 - core index']
  #allocation1 [shape = 'u32[144,128]{1,0:T(1,128)}', space=vmem, size = 0x12000, scoped, tag = 'internal scratch']
  %s0 = inlined_call_operand.vmem [shape: f32[256,8], index: 0, kind: input, shape index: {}]
  %s1 = inlined_call_operand.vmem [shape: bf16[8,128], index: 1, kind: input, shape index: {}]
  %s2 = inlined_call_operand.vmem [shape: f32[1,128], index: 2, kind: input, shape index: {}]
  %s3 = inlined_call_operand.vmem [shape: bf16[128,256], index: 3, kind: input, shape index: {}]
  %s4 = inlined_call_operand.vmem [shape: f32[1,256], index: 4, kind: input, shape index: {}]
  %s5 = inlined_call_operand.vmem [shape: bf16[256,512], index: 5, kind: input, shape index: {}]
  %s6 = inlined_call_operand.vmem [shape: bf16[256,512], index: 6, kind: input, shape index: {}]
  %s7 = inlined_call_operand.vmem [shape: f32[1,512], index: 7, kind: input, shape index: {}]
  %s8 = inlined_call_operand.vmem [shape: bf16[512,32], index: 8, kind: input, shape index: {}]
  %s9 = inlined_call_operand.vmem [shape: f32[1,32], index: 9, kind: input, shape index: {}]
  %s10 = inlined_call_operand.vmem [shape: f32[16,32], index: 10, kind: output, shape index: {}]
  %s11 = sld [smem:[#allocation0]]
  $region73: #{forward.4} parent=0
    _
  %s13 = ssub.s32 1, %s11
  %s14 = scalar_select 0, %s13, %s11
  loop: start=0, step=1, limit=4
  $region2: #{forward.4} parent=0 // loop_pre_header
    _
  $region3: #{forward.4} parent=0 // loop_header
    %s16 = sphi 0, %s20
    %p17 = scmp.ge.s32.totalorder %s16, 4
    %s26 = sphi 0, %s28
    %s29 = sphi 0, %s26
    %s30 = sphi 0, %s29
    %s46 = sphi 0, %s30
    %s50 = sphi 0, %s50
    %s52 = sphi 0, %s50
    %s53 = sphi 0, %s52
    %s67 = sphi 0, %s53
    %s71 = sphi 0, %s71
    %s73 = sphi 0, %s71
    %s74 = sphi 0, %s73
    %s88 = sphi 0, %s74
    %s92 = sphi 0, %s92
    %s94 = sphi 0, %s92
    %s95 = sphi 0, %s94
    %s109 = sphi 0, %s95
    %s113 = sphi 0, %s113
    %s115 = sphi 0, %s113
    %s116 = sphi 0, %s115
    %s130 = sphi 0, %s116
    %s134 = sphi 0, %s134
    %s136 = sphi 0, %s134
    %s137 = sphi 0, %s136
    %s151 = sphi 0, %s137
    %s155 = sphi 0, %s155
    %s157 = sphi 0, %s155
    %s158 = sphi 0, %s157
    %s172 = sphi 0, %s158
    %s176 = sphi 0, %s176
    %s178 = sphi 0, %s176
    %s179 = sphi 0, %s178
    %s193 = sphi 0, %s179
    %s197 = sphi 0, %s197
    %s199 = sphi 0, %s197
    %s200 = sphi 0, %s199
    %s214 = sphi 0, %s200
    %s218 = sphi 0, %s218
    %s220 = sphi 0, %s218
    %s221 = sphi 0, %s220
    %s235 = sphi 0, %s221
    %s241 = sphi 0, %s243
    %s244 = sphi 0, %s241
    %s245 = sphi 0, %s244
    %s261 = sphi 0, %s245
  $region4: #{forward.4} parent=0 // loop_header_branch
    %19 = sbr.rel (%p17) target = $region8
  $region5: #{forward.4} parent=0 // loop_body
    %s21 = ssub.s32 %s16, 1
    %s22 = ssub.s32 %s16, 2
    %s23 = sadd.s32 %s16, 1
    %s24 = ssub.s32 %s16, %s23
    %p25 = scmp.eq.s32.totalorder %s24, 0
    %s27 = sadd.s32 %s26, 1
    %s28 = scalar_select %p25, %s26, %s27
    %p31 = pneg %p25
    %p32 = scmp.eq.s32.totalorder %s16, 1
    %p33 = por %p31, %p32
    %p34 = scmp.ne.s32.totalorder %s26, %s29
    %p35 = scmp.eq.s32.totalorder %s16, 0
    %p36 = por %p34, %p35
    %p37 = scmp.ne.s32.totalorder %s26, %s29
    %p38 = scmp.eq.s32.totalorder %s21, 1
    %p39 = por %p37, %p38
    %p40 = scmp.ne.s32.totalorder %s29, %s30
    %p41 = scmp.eq.s32.totalorder %s21, 0
    %p42 = por %p40, %p41
    %p43 = scmp.ne.s32.totalorder %s29, %s30
    %p44 = scmp.eq.s32.totalorder %s22, 1
    %p45 = por %p43, %p44
    %p47 = scmp.ne.s32.totalorder %s30, %s46
    %p48 = scmp.eq.s32.totalorder %s22, 0
    %p49 = por %p47, %p48
    %s51 = sadd.s32 %s50, 1
    %p54 = scmp.eq.s32.totalorder %s16, 1
    %p55 = scmp.ne.s32.totalorder %s50, %s52
    %p56 = scmp.eq.s32.totalorder %s16, 0
    %p57 = por %p55, %p56
    %p58 = scmp.ne.s32.totalorder %s50, %s52
    %p59 = scmp.eq.s32.totalorder %s21, 1
    %p60 = por %p58, %p59
    %p61 = scmp.ne.s32.totalorder %s52, %s53
    %p62 = scmp.eq.s32.totalorder %s21, 0
    %p63 = por %p61, %p62
    %p64 = scmp.ne.s32.totalorder %s52, %s53
    %p65 = scmp.eq.s32.totalorder %s22, 1
    %p66 = por %p64, %p65
    %p68 = scmp.ne.s32.totalorder %s53, %s67
    %p69 = scmp.eq.s32.totalorder %s22, 0
    %p70 = por %p68, %p69
    %s72 = sadd.s32 %s71, 1
    %p75 = scmp.eq.s32.totalorder %s16, 1
    %p76 = scmp.ne.s32.totalorder %s71, %s73
    %p77 = scmp.eq.s32.totalorder %s16, 0
    %p78 = por %p76, %p77
    %p79 = scmp.ne.s32.totalorder %s71, %s73
    %p80 = scmp.eq.s32.totalorder %s21, 1
    %p81 = por %p79, %p80
    %p82 = scmp.ne.s32.totalorder %s73, %s74
    %p83 = scmp.eq.s32.totalorder %s21, 0
    %p84 = por %p82, %p83
    %p85 = scmp.ne.s32.totalorder %s73, %s74
    %p86 = scmp.eq.s32.totalorder %s22, 1
    %p87 = por %p85, %p86
    %p89 = scmp.ne.s32.totalorder %s74, %s88
    %p90 = scmp.eq.s32.totalorder %s22, 0
    %p91 = por %p89, %p90
    %s93 = sadd.s32 %s92, 1
    %p96 = scmp.eq.s32.totalorder %s16, 1
    %p97 = scmp.ne.s32.totalorder %s92, %s94
    %p98 = scmp.eq.s32.totalorder %s16, 0
    %p99 = por %p97, %p98
    %p100 = scmp.ne.s32.totalorder %s92, %s94
    %p101 = scmp.eq.s32.totalorder %s21, 1
    %p102 = por %p100, %p101
    %p103 = scmp.ne.s32.totalorder %s94, %s95
    %p104 = scmp.eq.s32.totalorder %s21, 0
    %p105 = por %p103, %p104
    %p106 = scmp.ne.s32.totalorder %s94, %s95
    %p107 = scmp.eq.s32.totalorder %s22, 1
    %p108 = por %p106, %p107
    %p110 = scmp.ne.s32.totalorder %s95, %s109
    %p111 = scmp.eq.s32.totalorder %s22, 0
    %p112 = por %p110, %p111
    %s114 = sadd.s32 %s113, 1
    %p117 = scmp.eq.s32.totalorder %s16, 1
    %p118 = scmp.ne.s32.totalorder %s113, %s115
    %p119 = scmp.eq.s32.totalorder %s16, 0
    %p120 = por %p118, %p119
    %p121 = scmp.ne.s32.totalorder %s113, %s115
    %p122 = scmp.eq.s32.totalorder %s21, 1
    %p123 = por %p121, %p122
    %p124 = scmp.ne.s32.totalorder %s115, %s116
    %p125 = scmp.eq.s32.totalorder %s21, 0
    %p126 = por %p124, %p125
    %p127 = scmp.ne.s32.totalorder %s115, %s116
    %p128 = scmp.eq.s32.totalorder %s22, 1
    %p129 = por %p127, %p128
    %p131 = scmp.ne.s32.totalorder %s116, %s130
    %p132 = scmp.eq.s32.totalorder %s22, 0
    %p133 = por %p131, %p132
    %s135 = sadd.s32 %s134, 1
    %p138 = scmp.eq.s32.totalorder %s16, 1
    %p139 = scmp.ne.s32.totalorder %s134, %s136
    %p140 = scmp.eq.s32.totalorder %s16, 0
    %p141 = por %p139, %p140
    %p142 = scmp.ne.s32.totalorder %s134, %s136
    %p143 = scmp.eq.s32.totalorder %s21, 1
    %p144 = por %p142, %p143
    %p145 = scmp.ne.s32.totalorder %s136, %s137
    %p146 = scmp.eq.s32.totalorder %s21, 0
    %p147 = por %p145, %p146
    %p148 = scmp.ne.s32.totalorder %s136, %s137
    %p149 = scmp.eq.s32.totalorder %s22, 1
    %p150 = por %p148, %p149
    %p152 = scmp.ne.s32.totalorder %s137, %s151
    %p153 = scmp.eq.s32.totalorder %s22, 0
    %p154 = por %p152, %p153
    %s156 = sadd.s32 %s155, 1
    %p159 = scmp.eq.s32.totalorder %s16, 1
    %p160 = scmp.ne.s32.totalorder %s155, %s157
    %p161 = scmp.eq.s32.totalorder %s16, 0
    %p162 = por %p160, %p161
    %p163 = scmp.ne.s32.totalorder %s155, %s157
    %p164 = scmp.eq.s32.totalorder %s21, 1
    %p165 = por %p163, %p164
    %p166 = scmp.ne.s32.totalorder %s157, %s158
    %p167 = scmp.eq.s32.totalorder %s21, 0
    %p168 = por %p166, %p167
    %p169 = scmp.ne.s32.totalorder %s157, %s158
    %p170 = scmp.eq.s32.totalorder %s22, 1
    %p171 = por %p169, %p170
    %p173 = scmp.ne.s32.totalorder %s158, %s172
    %p174 = scmp.eq.s32.totalorder %s22, 0
    %p175 = por %p173, %p174
    %s177 = sadd.s32 %s176, 1
    %p180 = scmp.eq.s32.totalorder %s16, 1
    %p181 = scmp.ne.s32.totalorder %s176, %s178
    %p182 = scmp.eq.s32.totalorder %s16, 0
    %p183 = por %p181, %p182
    %p184 = scmp.ne.s32.totalorder %s176, %s178
    %p185 = scmp.eq.s32.totalorder %s21, 1
    %p186 = por %p184, %p185
    %p187 = scmp.ne.s32.totalorder %s178, %s179
    %p188 = scmp.eq.s32.totalorder %s21, 0
    %p189 = por %p187, %p188
    %p190 = scmp.ne.s32.totalorder %s178, %s179
    %p191 = scmp.eq.s32.totalorder %s22, 1
    %p192 = por %p190, %p191
    %p194 = scmp.ne.s32.totalorder %s179, %s193
    %p195 = scmp.eq.s32.totalorder %s22, 0
    %p196 = por %p194, %p195
    %s198 = sadd.s32 %s197, 1
    %p201 = scmp.eq.s32.totalorder %s16, 1
    %p202 = scmp.ne.s32.totalorder %s197, %s199
    %p203 = scmp.eq.s32.totalorder %s16, 0
    %p204 = por %p202, %p203
    %p205 = scmp.ne.s32.totalorder %s197, %s199
    %p206 = scmp.eq.s32.totalorder %s21, 1
    %p207 = por %p205, %p206
    %p208 = scmp.ne.s32.totalorder %s199, %s200
    %p209 = scmp.eq.s32.totalorder %s21, 0
    %p210 = por %p208, %p209
    %p211 = scmp.ne.s32.totalorder %s199, %s200
    %p212 = scmp.eq.s32.totalorder %s22, 1
    %p213 = por %p211, %p212
    %p215 = scmp.ne.s32.totalorder %s200, %s214
    %p216 = scmp.eq.s32.totalorder %s22, 0
    %p217 = por %p215, %p216
    %s219 = sadd.s32 %s218, 1
    %p222 = scmp.eq.s32.totalorder %s16, 1
    %p223 = scmp.ne.s32.totalorder %s218, %s220
    %p224 = scmp.eq.s32.totalorder %s16, 0
    %p225 = por %p223, %p224
    %p226 = scmp.ne.s32.totalorder %s218, %s220
    %p227 = scmp.eq.s32.totalorder %s21, 1
    %p228 = por %p226, %p227
    %p229 = scmp.ne.s32.totalorder %s220, %s221
    %p230 = scmp.eq.s32.totalorder %s21, 0
    %p231 = por %p229, %p230
    %p232 = scmp.ne.s32.totalorder %s220, %s221
    %p233 = scmp.eq.s32.totalorder %s22, 1
    %p234 = por %p232, %p233
    %p236 = scmp.ne.s32.totalorder %s221, %s235
    %p237 = scmp.eq.s32.totalorder %s22, 0
    %p238 = por %p236, %p237
    %s239 = ssub.s32 %s16, %s23
    %p240 = scmp.eq.s32.totalorder %s239, 0
    %s242 = sadd.s32 %s241, 1
    %s243 = scalar_select %p240, %s241, %s242
    %p246 = pneg %p240
    %p247 = scmp.eq.s32.totalorder %s16, 1
    %p248 = por %p246, %p247
    %p249 = scmp.ne.s32.totalorder %s241, %s244
    %p250 = scmp.eq.s32.totalorder %s16, 0
    %p251 = por %p249, %p250
    %p252 = scmp.ne.s32.totalorder %s241, %s244
    %p253 = scmp.eq.s32.totalorder %s21, 1
    %p254 = por %p252, %p253
    %p255 = scmp.ne.s32.totalorder %s244, %s245
    %p256 = scmp.eq.s32.totalorder %s21, 0
    %p257 = por %p255, %p256
    %p258 = scmp.ne.s32.totalorder %s244, %s245
    %p259 = scmp.eq.s32.totalorder %s22, 1
    %p260 = por %p258, %p259
    %p262 = scmp.ne.s32.totalorder %s245, %s261
    %p263 = scmp.eq.s32.totalorder %s22, 0
    %p264 = por %p262, %p263
    %p265 = scmp.le.s32.totalorder 1, %s16
    %p266 = scmp.lt.s32.totalorder %s16, 3
    %p267 = pnand %p265, %p266
    %p268 = pneg %p267
    // Predicated region
    $region9: #{forward.4} parent=5 // pred_check
      _
    $region10: #{forward.4} parent=5 // pred_check_branch
      %270 = sbr.rel (%p267) target = $region12
    $region11: #{forward.4} parent=5 // pred_region
      %s271 = ssub.s32 %s16, 1
      // Predicated region
      $region13: #{forward.4} parent=11 // pred_check
        %p272 = pneg %p63
      $region14: #{forward.4} parent=11 // pred_check_branch
        %274 = sbr.rel (%p272) target = $region16
      $region15: #{forward.4} parent=11 // pred_region
        _
      $region16: #{forward.4} parent=11 // pred_fallthru
        _
      // Predicated region
      $region17: #{forward.4} parent=11 // pred_check
        %p275 = pneg %p84
      $region18: #{forward.4} parent=11 // pred_check_branch
        %277 = sbr.rel (%p275) target = $region20
      $region19: #{forward.4} parent=11 // pred_region
        _
      $region20: #{forward.4} parent=11 // pred_fallthru
        _
      // Predicated region
      $region21: #{forward.4} parent=11 // pred_check
        %p278 = pneg %p105
      $region22: #{forward.4} parent=11 // pred_check_branch
        %280 = sbr.rel (%p278) target = $region24
      $region23: #{forward.4} parent=11 // pred_region
        _
      $region24: #{forward.4} parent=11 // pred_fallthru
        _
      // Predicated region
      $region25: #{forward.4} parent=11 // pred_check
        %p281 = pneg %p126
      $region26: #{forward.4} parent=11 // pred_check_branch
        %283 = sbr.rel (%p281) target = $region28
      $region27: #{forward.4} parent=11 // pred_region
        _
      $region28: #{forward.4} parent=11 // pred_fallthru
        _
      // Predicated region
      $region29: #{forward.4} parent=11 // pred_check
        %p284 = pneg %p147
      $region30: #{forward.4} parent=11 // pred_check_branch
        %286 = sbr.rel (%p284) target = $region32
      $region31: #{forward.4} parent=11 // pred_region
        _
      $region32: #{forward.4} parent=11 // pred_fallthru
        _
      // Predicated region
      $region33: #{forward.4} parent=11 // pred_check
        %p287 = pneg %p168
      $region34: #{forward.4} parent=11 // pred_check_branch
        %289 = sbr.rel (%p287) target = $region36
      $region35: #{forward.4} parent=11 // pred_region
        _
      $region36: #{forward.4} parent=11 // pred_fallthru
        _
      // Predicated region
      $region37: #{forward.4} parent=11 // pred_check
        %p290 = pneg %p189
      $region38: #{forward.4} parent=11 // pred_check_branch
        %292 = sbr.rel (%p290) target = $region40
      $region39: #{forward.4} parent=11 // pred_region
        _
      $region40: #{forward.4} parent=11 // pred_fallthru
        _
      // Predicated region
      $region41: #{forward.4} parent=11 // pred_check
        %p293 = pneg %p210
      $region42: #{forward.4} parent=11 // pred_check_branch
        %295 = sbr.rel (%p293) target = $region44
      $region43: #{forward.4} parent=11 // pred_region
        _
      $region44: #{forward.4} parent=11 // pred_fallthru
        _
      // Predicated region
      $region45: #{forward.4} parent=11 // pred_check
        %p296 = pneg %p231
      $region46: #{forward.4} parent=11 // pred_check_branch
        %298 = sbr.rel (%p296) target = $region48
      $region47: #{forward.4} parent=11 // pred_region
        _
      $region48: #{forward.4} parent=11 // pred_fallthru
        _
    $region12: #{forward.4} parent=5 // pred_fallthru
      _
    %p299 = scmp.lt.s32.totalorder %s16, 2
    // Predicated region
    $region49: #{forward.4} parent=5 // pred_check
      %p300 = pneg %p299
    $region50: #{forward.4} parent=5 // pred_check_branch
      %302 = sbr.rel (%p300) target = $region52
    $region51: #{forward.4} parent=5 // pred_region
      // Predicated region
      $region53: #{forward.4} parent=51 // pred_check
        %p303 = pneg %p36
      $region54: #{forward.4} parent=51 // pred_check_branch
        %305 = sbr.rel (%p303) target = $region56
      $region55: #{forward.4} parent=51 // pred_region
        %s306 = smul.u32 16, %s16
        %p307 = scmp.lt.s32.totalorder %s306, 31
        %s308 = scalar_select %p307, %s306, 31
        %s309 = smul.addr %s308, 8
        %s310 = scalar_lea.vmem %s0, %s309
        %s311 = smul.u32 16, %s16
      $region56: #{forward.4} parent=51 // pred_fallthru
        _
    $region52: #{forward.4} parent=5 // pred_fallthru
      _
    %p312 = scmp.le.s32.totalorder 1, %s16
    %p313 = scmp.lt.s32.totalorder %s16, 3
    %p314 = pnand %p312, %p313
    %p315 = pneg %p314
    // Predicated region
    $region57: #{forward.4} parent=5 // pred_check
      _
    $region58: #{forward.4} parent=5 // pred_check_branch
      %317 = sbr.rel (%p314) target = $region60
    $region59: #{forward.4} parent=5 // pred_region
      %s318 = ssub.s32 %s16, 1
      %s319 = smul.u32 16, %s21
      %p320 = scmp.lt.s32.totalorder %s319, 31
      %s321 = scalar_select %p320, %s319, 31
      %s322 = smul.addr %s321, 8
      %s323 = scalar_lea.vmem %s0, %s322
      %p324 = pneg %p42
      %p325 = pneg %p39
      %p326 = pneg %p63
      %p327 = pneg %p60
      %p328 = pneg %p84
      %p329 = pneg %p81
      %p330 = pneg %p105
      %p331 = pneg %p102
      %p332 = pneg %p126
      %p333 = pneg %p123
      %p334 = pneg %p147
      %p335 = pneg %p144
      %p336 = pneg %p168
      %p337 = pneg %p165
      %p338 = pneg %p189
      %p339 = pneg %p186
      %p340 = pneg %p210
      %p341 = pneg %p207
      %p342 = pneg %p231
      %p343 = pneg %p228
      %p344 = pneg %p257
      %p345 = pneg %p254
      %p346 = scmp.lt.s32.totalorder %s21, 1
      %s347 = scalar_select %p346, %s21, 1
      %s348 = smul.addr %s347, 8
      %s349 = scalar_lea.vmem %s10, %s348
      %s350 = smul.u32 16, %s21
      %p351 = scmp.lt.s32.totalorder %s350, 31
      %s352 = scalar_select %p351, %s350, 31
      %s353 = smul.addr %s352, 8
      %s354 = scalar_lea.vmem %s0, %s353
      %s355 = smul.u32 16, %s21
      %p356 = scmp.lt.s32.totalorder %s21, 1
      %s357 = scalar_select %p356, %s21, 1
      %s358 = smul.addr %s357, 8
      %s359 = scalar_lea.vmem %s10, %s358
      %v361 = vld [vmem:[%s354] sm:$0xff]
      %v362 = vld [vmem:[%s354 + $0x8] sm:$0xff]
      %v363 = vld [vmem:[%s354 + $0x10] sm:$0xff]
      %v364 = vld [vmem:[%s354 + $0x18] sm:$0xff]
      %v365 = vld [vmem:[%s354 + $0x20] sm:$0xff]
      %v366 = vld [vmem:[%s354 + $0x28] sm:$0xff]
      %v367 = vld [vmem:[%s354 + $0x30] sm:$0xff]
      %v368 = vld [vmem:[%s354 + $0x38] sm:$0xff]
      %v369 = vld [vmem:[%s354 + $0x40] sm:$0xff]
      %v370 = vld [vmem:[%s354 + $0x48] sm:$0xff]
      %v371 = vld [vmem:[%s354 + $0x50] sm:$0xff]
      %v372 = vld [vmem:[%s354 + $0x58] sm:$0xff]
      %v373 = vld [vmem:[%s354 + $0x60] sm:$0xff]
      %v374 = vld [vmem:[%s354 + $0x68] sm:$0xff]
      %v375 = vld [vmem:[%s354 + $0x70] sm:$0xff]
      %v376 = vld [vmem:[%s354 + $0x78] sm:$0xff]
      %v377 = vld [vmem:[%s1] sm:$0xf]
      %v378 = vpack.c.bf16 %v362, %v361
      %v379 = vpack.c.bf16 %v364, %v363
      %v380 = vpack.c.bf16 %v366, %v365
      %v381 = vpack.c.bf16 %v368, %v367
      %v382 = vpack.c.bf16 %v370, %v369
      %v383 = vpack.c.bf16 %v372, %v371
      %v384 = vpack.c.bf16 %v374, %v373
      %v385 = vpack.c.bf16 %v376, %v375
      %v386 = vld [vmem:[%s2] sm:$0x1]
      %v388 = vlaneseq
      %v389 = vshrl.u32 %v388, 7
      %v390 = vsub.s32 0, %v389
      %v391 = vrot.slane %v386, %v390
      %vm393 = vcmask 64512
      %v395 = vsel %vm393, %v378, 0
      %v398 = vsel %vm393, %v379, 0
      %v401 = vsel %vm393, %v380, 0
      %v404 = vsel %vm393, %v381, 0
      %v407 = vsel %vm393, %v382, 0
      %v410 = vsel %vm393, %v383, 0
      %v413 = vsel %vm393, %v384, 0
      %v416 = vsel %vm393, %v385, 0
      %vm418 = vcmask 1043456
      %v420 = vsel %vm418, %v377, 0
      %422 = vmatprep.subr.bf16.mxu0 0
      %423 = vmatpush1.bf16.msra.mxu0 0
      %424 = vmatprep.subr.bf16.mxu0 0
      %425 = vmatpush1.bf16.msra.mxu0 0
      %426 = vmatprep.subr.bf16.mxu0 0
      %427 = vmatpush1.bf16.msra.mxu0 0
      %428 = vmatprep.subr.bf16.mxu0 0
      %429 = vmatpush1.bf16.msra.mxu0 0
      %430 = vmatprep.subr.bf16.mxu0 0
      %431 = vmatpush1.bf16.msra.mxu0 0
      %432 = vmatprep.subr.bf16.mxu0 0
      %433 = vmatpush1.bf16.msra.mxu0 0
      %434 = vmatprep.subr.bf16.mxu0 0
      %435 = vmatpush1.bf16.msra.mxu0 0
      %436 = vmatprep.subr.bf16.mxu0 0
      %437 = vmatpush1.bf16.msra.mxu0 %v420
      %438 = vmatprep.subr.bf16.mxu0 0
      %439 = vmatpush2.bf16.msra.mxu0 0
      %440 = vmatprep.subr.bf16.mxu0 0
      %441 = vmatpush2.bf16.msra.mxu0 0
      %442 = vmatprep.subr.bf16.mxu0 0
      %443 = vmatpush2.bf16.msra.mxu0 0
      %444 = vmatprep.subr.bf16.mxu0 0
      %445 = vmatpush2.bf16.msra.mxu0 0
      %446 = vmatprep.subr.bf16.mxu0 0
      %447 = vmatpush2.bf16.msra.mxu0 0
      %448 = vmatprep.subr.bf16.mxu0 0
      %449 = vmatpush2.bf16.msra.mxu0 0
      %450 = vmatprep.subr.bf16.mxu0 0
      %451 = vmatpush2.bf16.msra.mxu0 0
      %452 = vmatprep.subr.bf16.mxu0 0
      %453 = vmatpush2.bf16.msra.mxu0 0
      %454 = vmatprep.mubr.bf16.mxu0 0
      %455 = vmatmul.mubr.bf16.gmra.mxu0 %v395
      %v456 = vpop.f32.mrf.mxu0
      %v457 = vadd.f32 %v391, %v456
      %v458 = vpop.f32.mrf.mxu0
      %v459 = vpop.f32.mrf.mxu0
      %v460 = vadd.f32 %v391, %v459
      %v461 = vpop.f32.mrf.mxu0
      %462 = vmatprep.mubr.bf16.mxu0 0
      %463 = vmatmul.mubr.bf16.gmra.mxu0 %v398
      %v464 = vpop.f32.mrf.mxu0
      %v465 = vadd.f32 %v391, %v464
      %v466 = vpop.f32.mrf.mxu0
      %v467 = vpop.f32.mrf.mxu0
      %v468 = vadd.f32 %v391, %v467
      %v469 = vpop.f32.mrf.mxu0
      %470 = vmatprep.mubr.bf16.mxu0 0
      %471 = vmatmul.mubr.bf16.gmra.mxu0 %v401
      %v472 = vpop.f32.mrf.mxu0
      %v473 = vadd.f32 %v391, %v472
      %v474 = vpop.f32.mrf.mxu0
      %v475 = vpop.f32.mrf.mxu0
      %v476 = vadd.f32 %v391, %v475
      %v477 = vpop.f32.mrf.mxu0
      %478 = vmatprep.mubr.bf16.mxu0 0
      %479 = vmatmul.mubr.bf16.gmra.mxu0 %v404
      %v480 = vpop.f32.mrf.mxu0
      %v481 = vadd.f32 %v391, %v480
      %v482 = vpop.f32.mrf.mxu0
      %v483 = vpop.f32.mrf.mxu0
      %v484 = vadd.f32 %v391, %v483
      %v485 = vpop.f32.mrf.mxu0
      %486 = vmatprep.mubr.bf16.mxu0 0
      %487 = vmatmul.mubr.bf16.gmra.mxu0 %v407
      %v488 = vpop.f32.mrf.mxu0
      %v489 = vadd.f32 %v391, %v488
      %v490 = vpop.f32.mrf.mxu0
      %v491 = vpop.f32.mrf.mxu0
      %v492 = vadd.f32 %v391, %v491
      %v493 = vpop.f32.mrf.mxu0
      %494 = vmatprep.mubr.bf16.mxu0 0
      %495 = vmatmul.mubr.bf16.gmra.mxu0 %v410
      %v496 = vpop.f32.mrf.mxu0
      %v497 = vadd.f32 %v391, %v496
      %v498 = vpop.f32.mrf.mxu0
      %v499 = vpop.f32.mrf.mxu0
      %v500 = vadd.f32 %v391, %v499
      %v501 = vpop.f32.mrf.mxu0
      %502 = vmatprep.mubr.bf16.mxu0 0
      %503 = vmatmul.mubr.bf16.gmra.mxu0 %v413
      %v504 = vpop.f32.mrf.mxu0
      %v505 = vadd.f32 %v391, %v504
      %v506 = vpop.f32.mrf.mxu0
      %v507 = vpop.f32.mrf.mxu0
      %v508 = vadd.f32 %v391, %v507
      %v509 = vpop.f32.mrf.mxu0
      %510 = vmatprep.mubr.bf16.mxu0 0
      %511 = vmatmul.mubr.bf16.gmra.mxu0 %v416
      %v512 = vpop.f32.mrf.mxu0
      %v513 = vadd.f32 %v391, %v512
      %v514 = vpop.f32.mrf.mxu0
      %v515 = vpop.f32.mrf.mxu0
      %v516 = vadd.f32 %v391, %v515
      %v517 = vpop.f32.mrf.mxu0
      %518 = vdwg.mxu0
      %v519 = vmax.f32 %v457, 0.0
      %v520 = vmax.f32 %v460, 0.0
      %v521 = vmax.f32 %v465, 0.0
      %v522 = vmax.f32 %v468, 0.0
      %v523 = vmax.f32 %v473, 0.0
      %v524 = vmax.f32 %v476, 0.0
      %v525 = vmax.f32 %v481, 0.0
      %v526 = vmax.f32 %v484, 0.0
      %v527 = vmax.f32 %v489, 0.0
      %v528 = vmax.f32 %v492, 0.0
      %v529 = vmax.f32 %v497, 0.0
      %v530 = vmax.f32 %v500, 0.0
      %v531 = vmax.f32 %v505, 0.0
      %v532 = vmax.f32 %v508, 0.0
      %v533 = vmax.f32 %v513, 0.0
      %v534 = vmax.f32 %v516, 0.0
      %v535 = vld [vmem:[%s3] sm:$0xff]
      %v536 = vld [vmem:[%s3 + $0x8] sm:$0xff]
      %v537 = vld [vmem:[%s3 + $0x10] sm:$0xff]
      %v538 = vld [vmem:[%s3 + $0x18] sm:$0xff]
      %v539 = vld [vmem:[%s3 + $0x20] sm:$0xff]
      %v540 = vld [vmem:[%s3 + $0x28] sm:$0xff]
      %v541 = vld [vmem:[%s3 + $0x30] sm:$0xff]
      %v542 = vld [vmem:[%s3 + $0x38] sm:$0xff]
      %v543 = vld [vmem:[%s3 + $0x40] sm:$0xff]
      %v544 = vld [vmem:[%s3 + $0x48] sm:$0xff]
      %v545 = vld [vmem:[%s3 + $0x50] sm:$0xff]
      %v546 = vld [vmem:[%s3 + $0x58] sm:$0xff]
      %v547 = vld [vmem:[%s3 + $0x60] sm:$0xff]
      %v548 = vld [vmem:[%s3 + $0x68] sm:$0xff]
      %v549 = vld [vmem:[%s3 + $0x70] sm:$0xff]
      %v550 = vld [vmem:[%s3 + $0x78] sm:$0xff]
      %v551 = vpack.c.bf16 %v520, %v519
      %v552 = vpack.c.bf16 %v522, %v521
      %v553 = vpack.c.bf16 %v524, %v523
      %v554 = vpack.c.bf16 %v526, %v525
      %v555 = vpack.c.bf16 %v528, %v527
      %v556 = vpack.c.bf16 %v530, %v529
      %v557 = vpack.c.bf16 %v532, %v531
      %v558 = vpack.c.bf16 %v534, %v533
      %v559 = vld [vmem:[%s4] sm:$0x3]
      %v561 = vlaneseq
      %v562 = vshrl.u32 %v561, 7
      %v563 = vsub.s32 0, %v562
      %v564 = vrot.slane %v559, %v563
      %v565 = vlaneseq
      %v566 = vshrl.u32 %v565, 7
      %v567 = vsub.s32 1, %v566
      %v568 = vrot.slane %v559, %v567
      %v587 = vunpack.c.l.b16 %v535
      %v588 = vunpack.c.h.b16 %v535
      %v589 = vunpack.c.l.b16 %v536
      %v590 = vunpack.c.h.b16 %v536
      %v591 = vunpack.c.l.b16 %v537
      %v592 = vunpack.c.h.b16 %v537
      %v593 = vunpack.c.l.b16 %v538
      %v594 = vunpack.c.h.b16 %v538
      %v595 = vunpack.c.l.b16 %v539
      %v596 = vunpack.c.h.b16 %v539
      %v597 = vunpack.c.l.b16 %v540
      %v598 = vunpack.c.h.b16 %v540
      %v599 = vunpack.c.l.b16 %v541
      %v600 = vunpack.c.h.b16 %v541
      %v601 = vunpack.c.l.b16 %v542
      %v602 = vunpack.c.h.b16 %v542
      %v603 = vunpack.c.l.b16 %v543
      %v604 = vunpack.c.h.b16 %v543
      %v605 = vunpack.c.l.b16 %v544
      %v606 = vunpack.c.h.b16 %v544
      %v607 = vunpack.c.l.b16 %v545
      %v608 = vunpack.c.h.b16 %v545
      %v609 = vunpack.c.l.b16 %v546
      %v610 = vunpack.c.h.b16 %v546
      %v611 = vunpack.c.l.b16 %v547
      %v612 = vunpack.c.h.b16 %v547
      %v613 = vunpack.c.l.b16 %v548
      %v614 = vunpack.c.h.b16 %v548
      %v615 = vunpack.c.l.b16 %v549
      %v616 = vunpack.c.h.b16 %v549
      %v617 = vunpack.c.l.b16 %v550
      %v618 = vunpack.c.h.b16 %v550
      %v619 = vpack.c.b16 %v589, %v587
      %v620 = vpack.c.b16 %v590, %v588
      %v621 = vpack.c.b16 %v593, %v591
      %v622 = vpack.c.b16 %v594, %v592
      %v623 = vpack.c.b16 %v597, %v595
      %v624 = vpack.c.b16 %v598, %v596
      %v625 = vpack.c.b16 %v601, %v599
      %v626 = vpack.c.b16 %v602, %v600
      %v627 = vpack.c.b16 %v605, %v603
      %v628 = vpack.c.b16 %v606, %v604
      %v629 = vpack.c.b16 %v609, %v607
      %v630 = vpack.c.b16 %v610, %v608
      %v631 = vpack.c.b16 %v613, %v611
      %v632 = vpack.c.b16 %v614, %v612
      %v633 = vpack.c.b16 %v617, %v615
      %v634 = vpack.c.b16 %v618, %v616
      %651 = vmatprep.subr.bf16.mxu0 %v634
      %652 = vmatpush1.bf16.msra.mxu0 %v633
      %653 = vmatprep.subr.bf16.mxu0 %v632
      %654 = vmatpush1.bf16.msra.mxu0 %v631
      %655 = vmatprep.subr.bf16.mxu0 %v630
      %656 = vmatpush1.bf16.msra.mxu0 %v629
      %657 = vmatprep.subr.bf16.mxu0 %v628
      %658 = vmatpush1.bf16.msra.mxu0 %v627
      %659 = vmatprep.subr.bf16.mxu0 %v626
      %660 = vmatpush1.bf16.msra.mxu0 %v625
      %661 = vmatprep.subr.bf16.mxu0 %v624
      %662 = vmatpush1.bf16.msra.mxu0 %v623
      %663 = vmatprep.subr.bf16.mxu0 %v622
      %664 = vmatpush1.bf16.msra.mxu0 %v621
      %665 = vmatprep.subr.bf16.mxu0 %v620
      %666 = vmatpush1.bf16.msra.mxu0 %v619
      %667 = vmatprep.subr.bf16.mxu0 0
      %668 = vmatpush2.bf16.msra.mxu0 0
      %669 = vmatprep.subr.bf16.mxu0 0
      %670 = vmatpush2.bf16.msra.mxu0 0
      %671 = vmatprep.subr.bf16.mxu0 0
      %672 = vmatpush2.bf16.msra.mxu0 0
      %673 = vmatprep.subr.bf16.mxu0 0
      %674 = vmatpush2.bf16.msra.mxu0 0
      %675 = vmatprep.subr.bf16.mxu0 0
      %676 = vmatpush2.bf16.msra.mxu0 0
      %677 = vmatprep.subr.bf16.mxu0 0
      %678 = vmatpush2.bf16.msra.mxu0 0
      %679 = vmatprep.subr.bf16.mxu0 0
      %680 = vmatpush2.bf16.msra.mxu0 0
      %681 = vmatprep.subr.bf16.mxu0 0
      %682 = vmatpush2.bf16.msra.mxu0 0
      %683 = vmatprep.mubr.bf16.mxu0 0
      %684 = vmatmul.mubr.bf16.gmra.mxu0 %v551
      %v685 = vpop.f32.mrf.mxu0
      %v686 = vadd.f32 %v564, %v685
      %v687 = vpop.f32.mrf.mxu0
      %v688 = vadd.f32 %v568, %v687
      %v689 = vpop.f32.mrf.mxu0
      %v690 = vadd.f32 %v564, %v689
      %v691 = vpop.f32.mrf.mxu0
      %v692 = vadd.f32 %v568, %v691
      %693 = vmatprep.mubr.bf16.mxu0 0
      %694 = vmatmul.mubr.bf16.gmra.mxu0 %v552
      %v695 = vpop.f32.mrf.mxu0
      %v696 = vadd.f32 %v564, %v695
      %v697 = vpop.f32.mrf.mxu0
      %v698 = vadd.f32 %v568, %v697
      %v699 = vpop.f32.mrf.mxu0
      %v700 = vadd.f32 %v564, %v699
      %v701 = vpop.f32.mrf.mxu0
      %v702 = vadd.f32 %v568, %v701
      %703 = vmatprep.mubr.bf16.mxu0 0
      %704 = vmatmul.mubr.bf16.gmra.mxu0 %v553
      %v705 = vpop.f32.mrf.mxu0
      %v706 = vadd.f32 %v564, %v705
      %v707 = vpop.f32.mrf.mxu0
      %v708 = vadd.f32 %v568, %v707
      %v709 = vpop.f32.mrf.mxu0
      %v710 = vadd.f32 %v564, %v709
      %v711 = vpop.f32.mrf.mxu0
      %v712 = vadd.f32 %v568, %v711
      %713 = vmatprep.mubr.bf16.mxu0 0
      %714 = vmatmul.mubr.bf16.gmra.mxu0 %v554
      %v715 = vpop.f32.mrf.mxu0
      %v716 = vadd.f32 %v564, %v715
      %v717 = vpop.f32.mrf.mxu0
      %v718 = vadd.f32 %v568, %v717
      %v719 = vpop.f32.mrf.mxu0
      %v720 = vadd.f32 %v564, %v719
      %v721 = vpop.f32.mrf.mxu0
      %v722 = vadd.f32 %v568, %v721
      %723 = vmatprep.mubr.bf16.mxu0 0
      %724 = vmatmul.mubr.bf16.gmra.mxu0 %v555
      %v725 = vpop.f32.mrf.mxu0
      %v726 = vadd.f32 %v564, %v725
      %v727 = vpop.f32.mrf.mxu0
      %v728 = vadd.f32 %v568, %v727
      %v729 = vpop.f32.mrf.mxu0
      %v730 = vadd.f32 %v564, %v729
      %v731 = vpop.f32.mrf.mxu0
      %v732 = vadd.f32 %v568, %v731
      %733 = vmatprep.mubr.bf16.mxu0 0
      %734 = vmatmul.mubr.bf16.gmra.mxu0 %v556
      %v735 = vpop.f32.mrf.mxu0
      %v736 = vadd.f32 %v564, %v735
      %v737 = vpop.f32.mrf.mxu0
      %v738 = vadd.f32 %v568, %v737
      %v739 = vpop.f32.mrf.mxu0
      %v740 = vadd.f32 %v564, %v739
      %v741 = vpop.f32.mrf.mxu0
      %v742 = vadd.f32 %v568, %v741
      %743 = vmatprep.mubr.bf16.mxu0 0
      %744 = vmatmul.mubr.bf16.gmra.mxu0 %v557
      %v745 = vpop.f32.mrf.mxu0
      %v746 = vadd.f32 %v564, %v745
      %v747 = vpop.f32.mrf.mxu0
      %v748 = vadd.f32 %v568, %v747
      %v749 = vpop.f32.mrf.mxu0
      %v750 = vadd.f32 %v564, %v749
      %v751 = vpop.f32.mrf.mxu0
      %v752 = vadd.f32 %v568, %v751
      %753 = vmatprep.mubr.bf16.mxu0 0
      %754 = vmatmul.mubr.bf16.gmra.mxu0 %v558
      %v755 = vpop.f32.mrf.mxu0
      %v756 = vadd.f32 %v564, %v755
      %v757 = vpop.f32.mrf.mxu0
      %v758 = vadd.f32 %v568, %v757
      %v759 = vpop.f32.mrf.mxu0
      %v760 = vadd.f32 %v564, %v759
      %v761 = vpop.f32.mrf.mxu0
      %v762 = vadd.f32 %v568, %v761
      %763 = vdwg.mxu0
      %v764 = vmax.f32 %v686, %v690
      %v765 = vrot.slane %v764, 4
      %v766 = vmax.f32 %v764, %v765
      %v767 = vrot.slane %v766, 2
      %v768 = vmax.f32 %v766, %v767
      %v769 = vrot.slane %v768, 1
      %v770 = vmax.f32 %v768, %v769
      %v771 = vmax.f32 %v688, %v692
      %v772 = vrot.slane %v771, 4
      %v773 = vmax.f32 %v771, %v772
      %v774 = vrot.slane %v773, 2
      %v775 = vmax.f32 %v773, %v774
      %v776 = vrot.slane %v775, 1
      %v777 = vmax.f32 %v775, %v776
      %v778 = vmax.f32 %v696, %v700
      %v779 = vrot.slane %v778, 4
      %v780 = vmax.f32 %v778, %v779
      %v781 = vrot.slane %v780, 2
      %v782 = vmax.f32 %v780, %v781
      %v783 = vrot.slane %v782, 1
      %v784 = vmax.f32 %v782, %v783
      %v785 = vmax.f32 %v698, %v702
      %v786 = vrot.slane %v785, 4
      %v787 = vmax.f32 %v785, %v786
      %v788 = vrot.slane %v787, 2
      %v789 = vmax.f32 %v787, %v788
      %v790 = vrot.slane %v789, 1
      %v791 = vmax.f32 %v789, %v790
      %v792 = vmax.f32 %v706, %v710
      %v793 = vrot.slane %v792, 4
      %v794 = vmax.f32 %v792, %v793
      %v795 = vrot.slane %v794, 2
      %v796 = vmax.f32 %v794, %v795
      %v797 = vrot.slane %v796, 1
      %v798 = vmax.f32 %v796, %v797
      %v799 = vmax.f32 %v708, %v712
      %v800 = vrot.slane %v799, 4
      %v801 = vmax.f32 %v799, %v800
      %v802 = vrot.slane %v801, 2
      %v803 = vmax.f32 %v801, %v802
      %v804 = vrot.slane %v803, 1
      %v805 = vmax.f32 %v803, %v804
      %v806 = vmax.f32 %v716, %v720
      %v807 = vrot.slane %v806, 4
      %v808 = vmax.f32 %v806, %v807
      %v809 = vrot.slane %v808, 2
      %v810 = vmax.f32 %v808, %v809
      %v811 = vrot.slane %v810, 1
      %v812 = vmax.f32 %v810, %v811
      %v813 = vmax.f32 %v718, %v722
      %v814 = vrot.slane %v813, 4
      %v815 = vmax.f32 %v813, %v814
      %v816 = vrot.slane %v815, 2
      %v817 = vmax.f32 %v815, %v816
      %v818 = vrot.slane %v817, 1
      %v819 = vmax.f32 %v817, %v818
      %v820 = vmax.f32 %v726, %v730
      %v821 = vrot.slane %v820, 4
      %v822 = vmax.f32 %v820, %v821
      %v823 = vrot.slane %v822, 2
      %v824 = vmax.f32 %v822, %v823
      %v825 = vrot.slane %v824, 1
      %v826 = vmax.f32 %v824, %v825
      %v827 = vmax.f32 %v728, %v732
      %v828 = vrot.slane %v827, 4
      %v829 = vmax.f32 %v827, %v828
      %v830 = vrot.slane %v829, 2
      %v831 = vmax.f32 %v829, %v830
      %v832 = vrot.slane %v831, 1
      %v833 = vmax.f32 %v831, %v832
      %v834 = vmax.f32 %v736, %v740
      %v835 = vrot.slane %v834, 4
      %v836 = vmax.f32 %v834, %v835
      %v837 = vrot.slane %v836, 2
      %v838 = vmax.f32 %v836, %v837
      %v839 = vrot.slane %v838, 1
      %v840 = vmax.f32 %v838, %v839
      %v841 = vmax.f32 %v738, %v742
      %v842 = vrot.slane %v841, 4
      %v843 = vmax.f32 %v841, %v842
      %v844 = vrot.slane %v843, 2
      %v845 = vmax.f32 %v843, %v844
      %v846 = vrot.slane %v845, 1
      %v847 = vmax.f32 %v845, %v846
      %v848 = vmax.f32 %v746, %v750
      %v849 = vrot.slane %v848, 4
      %v850 = vmax.f32 %v848, %v849
      %v851 = vrot.slane %v850, 2
      %v852 = vmax.f32 %v850, %v851
      %v853 = vrot.slane %v852, 1
      %v854 = vmax.f32 %v852, %v853
      %v855 = vmax.f32 %v748, %v752
      %v856 = vrot.slane %v855, 4
      %v857 = vmax.f32 %v855, %v856
      %v858 = vrot.slane %v857, 2
      %v859 = vmax.f32 %v857, %v858
      %v860 = vrot.slane %v859, 1
      %v861 = vmax.f32 %v859, %v860
      %v862 = vmax.f32 %v756, %v760
      %v863 = vrot.slane %v862, 4
      %v864 = vmax.f32 %v862, %v863
      %v865 = vrot.slane %v864, 2
      %v866 = vmax.f32 %v864, %v865
      %v867 = vrot.slane %v866, 1
      %v868 = vmax.f32 %v866, %v867
      %v869 = vmax.f32 %v758, %v762
      %v870 = vrot.slane %v869, 4
      %v871 = vmax.f32 %v869, %v870
      %v872 = vrot.slane %v871, 2
      %v873 = vmax.f32 %v871, %v872
      %v874 = vrot.slane %v873, 1
      %v875 = vmax.f32 %v873, %v874
      %v876 = vld [vmem:[%s5] sm:$0xff]
      %v877 = vld [vmem:[%s5 + $0x8] sm:$0xff]
      %v878 = vld [vmem:[%s5 + $0x10] sm:$0xff]
      %v879 = vld [vmem:[%s5 + $0x18] sm:$0xff]
      %v880 = vld [vmem:[%s5 + $0x20] sm:$0xff]
      %v881 = vld [vmem:[%s5 + $0x28] sm:$0xff]
      %v882 = vld [vmem:[%s5 + $0x30] sm:$0xff]
      %v883 = vld [vmem:[%s5 + $0x38] sm:$0xff]
      %v884 = vld [vmem:[%s5 + $0x40] sm:$0xff]
      %v885 = vld [vmem:[%s5 + $0x48] sm:$0xff]
      %v886 = vld [vmem:[%s5 + $0x50] sm:$0xff]
      %v887 = vld [vmem:[%s5 + $0x58] sm:$0xff]
      %v888 = vld [vmem:[%s5 + $0x60] sm:$0xff]
      %v889 = vld [vmem:[%s5 + $0x68] sm:$0xff]
      %v890 = vld [vmem:[%s5 + $0x70] sm:$0xff]
      %v891 = vld [vmem:[%s5 + $0x78] sm:$0xff]
      %v892 = vld [vmem:[%s5 + $0x80] sm:$0xff]
      %v893 = vld [vmem:[%s5 + $0x88] sm:$0xff]
      %v894 = vld [vmem:[%s5 + $0x90] sm:$0xff]
      %v895 = vld [vmem:[%s5 + $0x98] sm:$0xff]
      %v896 = vld [vmem:[%s5 + $0xa0] sm:$0xff]
      %v897 = vld [vmem:[%s5 + $0xa8] sm:$0xff]
      %v898 = vld [vmem:[%s5 + $0xb0] sm:$0xff]
      %v899 = vld [vmem:[%s5 + $0xb8] sm:$0xff]
      %v900 = vld [vmem:[%s5 + $0xc0] sm:$0xff]
      %v901 = vld [vmem:[%s5 + $0xc8] sm:$0xff]
      %v902 = vld [vmem:[%s5 + $0xd0] sm:$0xff]
      %v903 = vld [vmem:[%s5 + $0xd8] sm:$0xff]
      %v904 = vld [vmem:[%s5 + $0xe0] sm:$0xff]
      %v905 = vld [vmem:[%s5 + $0xe8] sm:$0xff]
      %v906 = vld [vmem:[%s5 + $0xf0] sm:$0xff]
      %v907 = vld [vmem:[%s5 + $0xf8] sm:$0xff]
      %v908 = vld [vmem:[%s5 + $0x100] sm:$0xff]
      %v909 = vld [vmem:[%s5 + $0x108] sm:$0xff]
      %v910 = vld [vmem:[%s5 + $0x110] sm:$0xff]
      %v911 = vld [vmem:[%s5 + $0x118] sm:$0xff]
      %v912 = vld [vmem:[%s5 + $0x120] sm:$0xff]
      %v913 = vld [vmem:[%s5 + $0x128] sm:$0xff]
      %v914 = vld [vmem:[%s5 + $0x130] sm:$0xff]
      %v915 = vld [vmem:[%s5 + $0x138] sm:$0xff]
      %v916 = vld [vmem:[%s5 + $0x140] sm:$0xff]
      %v917 = vld [vmem:[%s5 + $0x148] sm:$0xff]
      %v918 = vld [vmem:[%s5 + $0x150] sm:$0xff]
      %v919 = vld [vmem:[%s5 + $0x158] sm:$0xff]
      %v920 = vld [vmem:[%s5 + $0x160] sm:$0xff]
      %v921 = vld [vmem:[%s5 + $0x168] sm:$0xff]
      %v922 = vld [vmem:[%s5 + $0x170] sm:$0xff]
      %v923 = vld [vmem:[%s5 + $0x178] sm:$0xff]
      %v924 = vld [vmem:[%s5 + $0x180] sm:$0xff]
      %v925 = vld [vmem:[%s5 + $0x188] sm:$0xff]
      %v926 = vld [vmem:[%s5 + $0x190] sm:$0xff]
      %v927 = vld [vmem:[%s5 + $0x198] sm:$0xff]
      %v928 = vld [vmem:[%s5 + $0x1a0] sm:$0xff]
      %v929 = vld [vmem:[%s5 + $0x1a8] sm:$0xff]
      %v930 = vld [vmem:[%s5 + $0x1b0] sm:$0xff]
      %v931 = vld [vmem:[%s5 + $0x1b8] sm:$0xff]
      %v932 = vld [vmem:[%s5 + $0x1c0] sm:$0xff]
      %v933 = vld [vmem:[%s5 + $0x1c8] sm:$0xff]
      %v934 = vld [vmem:[%s5 + $0x1d0] sm:$0xff]
      %v935 = vld [vmem:[%s5 + $0x1d8] sm:$0xff]
      %v936 = vld [vmem:[%s5 + $0x1e0] sm:$0xff]
      %v937 = vld [vmem:[%s5 + $0x1e8] sm:$0xff]
      %v938 = vld [vmem:[%s5 + $0x1f0] sm:$0xff]
      %v939 = vld [vmem:[%s5 + $0x1f8] sm:$0xff]
      %v940 = vpack.c.bf16 %v770, %v770
      %v941 = vpack.c.bf16 %v777, %v777
      %v942 = vpack.c.bf16 %v784, %v784
      %v943 = vpack.c.bf16 %v791, %v791
      %v944 = vpack.c.bf16 %v798, %v798
      %v945 = vpack.c.bf16 %v805, %v805
      %v946 = vpack.c.bf16 %v812, %v812
      %v947 = vpack.c.bf16 %v819, %v819
      %v948 = vpack.c.bf16 %v826, %v826
      %v949 = vpack.c.bf16 %v833, %v833
      %v950 = vpack.c.bf16 %v840, %v840
      %v951 = vpack.c.bf16 %v847, %v847
      %v952 = vpack.c.bf16 %v854, %v854
      %v953 = vpack.c.bf16 %v861, %v861
      %v954 = vpack.c.bf16 %v868, %v868
      %v955 = vpack.c.bf16 %v875, %v875
      %v972 = vunpack.c.l.b16 %v940
      %v973 = vunpack.c.l.b16 %v941
      %v974 = vunpack.c.l.b16 %v942
      %v975 = vunpack.c.l.b16 %v943
      %v976 = vunpack.c.l.b16 %v944
      %v977 = vunpack.c.l.b16 %v945
      %v978 = vunpack.c.l.b16 %v946
      %v979 = vunpack.c.l.b16 %v947
      %v980 = vunpack.c.l.b16 %v948
      %v981 = vunpack.c.l.b16 %v949
      %v982 = vunpack.c.l.b16 %v950
      %v983 = vunpack.c.l.b16 %v951
      %v984 = vunpack.c.l.b16 %v952
      %v985 = vunpack.c.l.b16 %v953
      %v986 = vunpack.c.l.b16 %v954
      %v987 = vunpack.c.l.b16 %v955
      %vm988 = vcmask 1041409
      %v989 = vsel %vm988, %v974, %v972
      %vm990 = vcmask 1042434
      %v991 = vsel %vm990, %v976, %v989
      %vm992 = vcmask 1043459
      %v993 = vsel %vm992, %v978, %v991
      %vm994 = vcmask 1044484
      %v995 = vsel %vm994, %v980, %v993
      %vm996 = vcmask 1045509
      %v997 = vsel %vm996, %v982, %v995
      %vm998 = vcmask 1046534
      %v999 = vsel %vm998, %v984, %v997
      %vm1000 = vcmask 1047559
      %v1001 = vsel %vm1000, %v986, %v999
      %v1002 = vsel %vm988, %v975, %v973
      %v1003 = vsel %vm990, %v977, %v1002
      %v1004 = vsel %vm992, %v979, %v1003
      %v1005 = vsel %vm994, %v981, %v1004
      %v1006 = vsel %vm996, %v983, %v1005
      %v1007 = vsel %vm998, %v985, %v1006
      %v1008 = vsel %vm1000, %v987, %v1007
      %v1009 = vpack.c.b16 %v1001, %v1001
      %v1010 = vpack.c.b16 %v1008, %v1008
      %v1077 = vunpack.c.l.b16 %v876
      %v1078 = vunpack.c.h.b16 %v876
      %v1079 = vunpack.c.l.b16 %v877
      %v1080 = vunpack.c.h.b16 %v877
      %v1081 = vunpack.c.l.b16 %v878
      %v1082 = vunpack.c.h.b16 %v878
      %v1083 = vunpack.c.l.b16 %v879
      %v1084 = vunpack.c.h.b16 %v879
      %v1085 = vunpack.c.l.b16 %v880
      %v1086 = vunpack.c.h.b16 %v880
      %v1087 = vunpack.c.l.b16 %v881
      %v1088 = vunpack.c.h.b16 %v881
      %v1089 = vunpack.c.l.b16 %v882
      %v1090 = vunpack.c.h.b16 %v882
      %v1091 = vunpack.c.l.b16 %v883
      %v1092 = vunpack.c.h.b16 %v883
      %v1093 = vunpack.c.l.b16 %v884
      %v1094 = vunpack.c.h.b16 %v884
      %v1095 = vunpack.c.l.b16 %v885
      %v1096 = vunpack.c.h.b16 %v885
      %v1097 = vunpack.c.l.b16 %v886
      %v1098 = vunpack.c.h.b16 %v886
      %v1099 = vunpack.c.l.b16 %v887
      %v1100 = vunpack.c.h.b16 %v887
      %v1101 = vunpack.c.l.b16 %v888
      %v1102 = vunpack.c.h.b16 %v888
      %v1103 = vunpack.c.l.b16 %v889
      %v1104 = vunpack.c.h.b16 %v889
      %v1105 = vunpack.c.l.b16 %v890
      %v1106 = vunpack.c.h.b16 %v890
      %v1107 = vunpack.c.l.b16 %v891
      %v1108 = vunpack.c.h.b16 %v891
      %v1109 = vunpack.c.l.b16 %v892
      %v1110 = vunpack.c.h.b16 %v892
      %v1111 = vunpack.c.l.b16 %v893
      %v1112 = vunpack.c.h.b16 %v893
      %v1113 = vunpack.c.l.b16 %v894
      %v1114 = vunpack.c.h.b16 %v894
      %v1115 = vunpack.c.l.b16 %v895
      %v1116 = vunpack.c.h.b16 %v895
      %v1117 = vunpack.c.l.b16 %v896
      %v1118 = vunpack.c.h.b16 %v896
      %v1119 = vunpack.c.l.b16 %v897
      %v1120 = vunpack.c.h.b16 %v897
      %v1121 = vunpack.c.l.b16 %v898
      %v1122 = vunpack.c.h.b16 %v898
      %v1123 = vunpack.c.l.b16 %v899
      %v1124 = vunpack.c.h.b16 %v899
      %v1125 = vunpack.c.l.b16 %v900
      %v1126 = vunpack.c.h.b16 %v900
      %v1127 = vunpack.c.l.b16 %v901
      %v1128 = vunpack.c.h.b16 %v901
      %v1129 = vunpack.c.l.b16 %v902
      %v1130 = vunpack.c.h.b16 %v902
      %v1131 = vunpack.c.l.b16 %v903
      %v1132 = vunpack.c.h.b16 %v903
      %v1133 = vunpack.c.l.b16 %v904
      %v1134 = vunpack.c.h.b16 %v904
      %v1135 = vunpack.c.l.b16 %v905
      %v1136 = vunpack.c.h.b16 %v905
      %v1137 = vunpack.c.l.b16 %v906
      %v1138 = vunpack.c.h.b16 %v906
      %v1139 = vunpack.c.l.b16 %v907
      %v1140 = vunpack.c.h.b16 %v907
      %v1141 = vunpack.c.l.b16 %v908
      %v1142 = vunpack.c.h.b16 %v908
      %v1143 = vunpack.c.l.b16 %v909
      %v1144 = vunpack.c.h.b16 %v909
      %v1145 = vunpack.c.l.b16 %v910
      %v1146 = vunpack.c.h.b16 %v910
      %v1147 = vunpack.c.l.b16 %v911
      %v1148 = vunpack.c.h.b16 %v911
      %v1149 = vunpack.c.l.b16 %v912
      %v1150 = vunpack.c.h.b16 %v912
      %v1151 = vunpack.c.l.b16 %v913
      %v1152 = vunpack.c.h.b16 %v913
      %v1153 = vunpack.c.l.b16 %v914
      %v1154 = vunpack.c.h.b16 %v914
      %v1155 = vunpack.c.l.b16 %v915
      %v1156 = vunpack.c.h.b16 %v915
      %v1157 = vunpack.c.l.b16 %v916
      %v1158 = vunpack.c.h.b16 %v916
      %v1159 = vunpack.c.l.b16 %v917
      %v1160 = vunpack.c.h.b16 %v917
      %v1161 = vunpack.c.l.b16 %v918
      %v1162 = vunpack.c.h.b16 %v918
      %v1163 = vunpack.c.l.b16 %v919
      %v1164 = vunpack.c.h.b16 %v919
      %v1165 = vunpack.c.l.b16 %v920
      %v1166 = vunpack.c.h.b16 %v920
      %v1167 = vunpack.c.l.b16 %v921
      %v1168 = vunpack.c.h.b16 %v921
      %v1169 = vunpack.c.l.b16 %v922
      %v1170 = vunpack.c.h.b16 %v922
      %v1171 = vunpack.c.l.b16 %v923
      %v1172 = vunpack.c.h.b16 %v923
      %v1173 = vunpack.c.l.b16 %v924
      %v1174 = vunpack.c.h.b16 %v924
      %v1175 = vunpack.c.l.b16 %v925
      %v1176 = vunpack.c.h.b16 %v925
      %v1177 = vunpack.c.l.b16 %v926
      %v1178 = vunpack.c.h.b16 %v926
      %v1179 = vunpack.c.l.b16 %v927
      %v1180 = vunpack.c.h.b16 %v927
      %v1181 = vunpack.c.l.b16 %v928
      %v1182 = vunpack.c.h.b16 %v928
      %v1183 = vunpack.c.l.b16 %v929
      %v1184 = vunpack.c.h.b16 %v929
      %v1185 = vunpack.c.l.b16 %v930
      %v1186 = vunpack.c.h.b16 %v930
      %v1187 = vunpack.c.l.b16 %v931
      %v1188 = vunpack.c.h.b16 %v931
      %v1189 = vunpack.c.l.b16 %v932
      %v1190 = vunpack.c.h.b16 %v932
      %v1191 = vunpack.c.l.b16 %v933
      %v1192 = vunpack.c.h.b16 %v933
      %v1193 = vunpack.c.l.b16 %v934
      %v1194 = vunpack.c.h.b16 %v934
      %v1195 = vunpack.c.l.b16 %v935
      %v1196 = vunpack.c.h.b16 %v935
      %v1197 = vunpack.c.l.b16 %v936
      %v1198 = vunpack.c.h.b16 %v936
      %v1199 = vunpack.c.l.b16 %v937
      %v1200 = vunpack.c.h.b16 %v937
      %v1201 = vunpack.c.l.b16 %v938
      %v1202 = vunpack.c.h.b16 %v938
      %v1203 = vunpack.c.l.b16 %v939
      %v1204 = vunpack.c.h.b16 %v939
      %v1205 = vpack.c.b16 %v1081, %v1077
      %v1206 = vpack.c.b16 %v1082, %v1078
      %v1207 = vpack.c.b16 %v1083, %v1079
      %v1208 = vpack.c.b16 %v1084, %v1080
      %v1209 = vpack.c.b16 %v1089, %v1085
      %v1210 = vpack.c.b16 %v1090, %v1086
      %v1211 = vpack.c.b16 %v1091, %v1087
      %v1212 = vpack.c.b16 %v1092, %v1088
      %v1213 = vpack.c.b16 %v1097, %v1093
      %v1214 = vpack.c.b16 %v1098, %v1094
      %v1215 = vpack.c.b16 %v1099, %v1095
      %v1216 = vpack.c.b16 %v1100, %v1096
      %v1217 = vpack.c.b16 %v1105, %v1101
      %v1218 = vpack.c.b16 %v1106, %v1102
      %v1219 = vpack.c.b16 %v1107, %v1103
      %v1220 = vpack.c.b16 %v1108, %v1104
      %v1221 = vpack.c.b16 %v1113, %v1109
      %v1222 = vpack.c.b16 %v1114, %v1110
      %v1223 = vpack.c.b16 %v1115, %v1111
      %v1224 = vpack.c.b16 %v1116, %v1112
      %v1225 = vpack.c.b16 %v1121, %v1117
      %v1226 = vpack.c.b16 %v1122, %v1118
      %v1227 = vpack.c.b16 %v1123, %v1119
      %v1228 = vpack.c.b16 %v1124, %v1120
      %v1229 = vpack.c.b16 %v1129, %v1125
      %v1230 = vpack.c.b16 %v1130, %v1126
      %v1231 = vpack.c.b16 %v1131, %v1127
      %v1232 = vpack.c.b16 %v1132, %v1128
      %v1233 = vpack.c.b16 %v1137, %v1133
      %v1234 = vpack.c.b16 %v1138, %v1134
      %v1235 = vpack.c.b16 %v1139, %v1135
      %v1236 = vpack.c.b16 %v1140, %v1136
      %v1237 = vpack.c.b16 %v1145, %v1141
      %v1238 = vpack.c.b16 %v1146, %v1142
      %v1239 = vpack.c.b16 %v1147, %v1143
      %v1240 = vpack.c.b16 %v1148, %v1144
      %v1241 = vpack.c.b16 %v1153, %v1149
      %v1242 = vpack.c.b16 %v1154, %v1150
      %v1243 = vpack.c.b16 %v1155, %v1151
      %v1244 = vpack.c.b16 %v1156, %v1152
      %v1245 = vpack.c.b16 %v1161, %v1157
      %v1246 = vpack.c.b16 %v1162, %v1158
      %v1247 = vpack.c.b16 %v1163, %v1159
      %v1248 = vpack.c.b16 %v1164, %v1160
      %v1249 = vpack.c.b16 %v1169, %v1165
      %v1250 = vpack.c.b16 %v1170, %v1166
      %v1251 = vpack.c.b16 %v1171, %v1167
      %v1252 = vpack.c.b16 %v1172, %v1168
      %v1253 = vpack.c.b16 %v1177, %v1173
      %v1254 = vpack.c.b16 %v1178, %v1174
      %v1255 = vpack.c.b16 %v1179, %v1175
      %v1256 = vpack.c.b16 %v1180, %v1176
      %v1257 = vpack.c.b16 %v1185, %v1181
      %v1258 = vpack.c.b16 %v1186, %v1182
      %v1259 = vpack.c.b16 %v1187, %v1183
      %v1260 = vpack.c.b16 %v1188, %v1184
      %v1261 = vpack.c.b16 %v1193, %v1189
      %v1262 = vpack.c.b16 %v1194, %v1190
      %v1263 = vpack.c.b16 %v1195, %v1191
      %v1264 = vpack.c.b16 %v1196, %v1192
      %v1265 = vpack.c.b16 %v1201, %v1197
      %v1266 = vpack.c.b16 %v1202, %v1198
      %v1267 = vpack.c.b16 %v1203, %v1199
      %v1268 = vpack.c.b16 %v1204, %v1200
      %1333 = vmatprep.subr.bf16.mxu0 %v1234
      %1334 = vmatpush1.bf16.msra.mxu0 %v1233
      %1335 = vmatprep.subr.bf16.mxu0 %v1230
      %1336 = vmatpush1.bf16.msra.mxu0 %v1229
      %1337 = vmatprep.subr.bf16.mxu0 %v1226
      %1338 = vmatpush1.bf16.msra.mxu0 %v1225
      %1339 = vmatprep.subr.bf16.mxu0 %v1222
      %1340 = vmatpush1.bf16.msra.mxu0 %v1221
      %1341 = vmatprep.subr.bf16.mxu0 %v1218
      %1342 = vmatpush1.bf16.msra.mxu0 %v1217
      %1343 = vmatprep.subr.bf16.mxu0 %v1214
      %1344 = vmatpush1.bf16.msra.mxu0 %v1213
      %1345 = vmatprep.subr.bf16.mxu0 %v1210
      %1346 = vmatpush1.bf16.msra.mxu0 %v1209
      %1347 = vmatprep.subr.bf16.mxu0 %v1206
      %1348 = vmatpush1.bf16.msra.mxu0 %v1205
      %1349 = vmatprep.subr.bf16.mxu0 %v1266
      %1350 = vmatpush2.bf16.msra.mxu0 %v1265
      %1351 = vmatprep.subr.bf16.mxu0 %v1262
      %1352 = vmatpush2.bf16.msra.mxu0 %v1261
      %1353 = vmatprep.subr.bf16.mxu0 %v1258
      %1354 = vmatpush2.bf16.msra.mxu0 %v1257
      %1355 = vmatprep.subr.bf16.mxu0 %v1254
      %1356 = vmatpush2.bf16.msra.mxu0 %v1253
      %1357 = vmatprep.subr.bf16.mxu0 %v1250
      %1358 = vmatpush2.bf16.msra.mxu0 %v1249
      %1359 = vmatprep.subr.bf16.mxu0 %v1246
      %1360 = vmatpush2.bf16.msra.mxu0 %v1245
      %1361 = vmatprep.subr.bf16.mxu0 %v1242
      %1362 = vmatpush2.bf16.msra.mxu0 %v1241
      %1363 = vmatprep.subr.bf16.mxu0 %v1238
      %1364 = vmatpush2.bf16.msra.mxu0 %v1237
      %1365 = vmatprep.mubr.bf16.mxu0 %v1010
      %1366 = vmatmul.mubr.bf16.gmra.mxu0 %v1009
      %v1367 = vpop.f32.mrf.mxu0
      %v1368 = vadd.f32 0.0, %v1367
      %v1369 = vpop.f32.mrf.mxu0
      %v1370 = vadd.f32 0.0, %v1369
      %v1371 = vpop.f32.mrf.mxu0
      %v1372 = vpop.f32.mrf.mxu0
      %1373 = vdwg.mxu0
      %1374 = vmatprep.subr.bf16.mxu0 %v1236
      %1375 = vmatpush1.bf16.msra.mxu0 %v1235
      %1376 = vmatprep.subr.bf16.mxu0 %v1232
      %1377 = vmatpush1.bf16.msra.mxu0 %v1231
      %1378 = vmatprep.subr.bf16.mxu0 %v1228
      %1379 = vmatpush1.bf16.msra.mxu0 %v1227
      %1380 = vmatprep.subr.bf16.mxu0 %v1224
      %1381 = vmatpush1.bf16.msra.mxu0 %v1223
      %1382 = vmatprep.subr.bf16.mxu0 %v1220
      %1383 = vmatpush1.bf16.msra.mxu0 %v1219
      %1384 = vmatprep.subr.bf16.mxu0 %v1216
      %1385 = vmatpush1.bf16.msra.mxu0 %v1215
      %1386 = vmatprep.subr.bf16.mxu0 %v1212
      %1387 = vmatpush1.bf16.msra.mxu0 %v1211
      %1388 = vmatprep.subr.bf16.mxu0 %v1208
      %1389 = vmatpush1.bf16.msra.mxu0 %v1207
      %1390 = vmatprep.subr.bf16.mxu0 %v1268
      %1391 = vmatpush2.bf16.msra.mxu0 %v1267
      %1392 = vmatprep.subr.bf16.mxu0 %v1264
      %1393 = vmatpush2.bf16.msra.mxu0 %v1263
      %1394 = vmatprep.subr.bf16.mxu0 %v1260
      %1395 = vmatpush2.bf16.msra.mxu0 %v1259
      %1396 = vmatprep.subr.bf16.mxu0 %v1256
      %1397 = vmatpush2.bf16.msra.mxu0 %v1255
      %1398 = vmatprep.subr.bf16.mxu0 %v1252
      %1399 = vmatpush2.bf16.msra.mxu0 %v1251
      %1400 = vmatprep.subr.bf16.mxu0 %v1248
      %1401 = vmatpush2.bf16.msra.mxu0 %v1247
      %1402 = vmatprep.subr.bf16.mxu0 %v1244
      %1403 = vmatpush2.bf16.msra.mxu0 %v1243
      %1404 = vmatprep.subr.bf16.mxu0 %v1240
      %1405 = vmatpush2.bf16.msra.mxu0 %v1239
      %1406 = vmatprep.mubr.bf16.mxu0 %v1010
      %1407 = vmatmul.mubr.bf16.gmra.mxu0 %v1009
      %v1408 = vpop.f32.mrf.mxu0
      %v1409 = vadd.f32 0.0, %v1408
      %v1410 = vpop.f32.mrf.mxu0
      %v1411 = vadd.f32 0.0, %v1410
      %v1412 = vpop.f32.mrf.mxu0
      %v1413 = vpop.f32.mrf.mxu0
      %1414 = vdwg.mxu0
      %v1415 = vld [vmem:[%s6] sm:$0xff]
      %v1416 = vld [vmem:[%s6 + $0x8] sm:$0xff]
      %v1417 = vld [vmem:[%s6 + $0x10] sm:$0xff]
      %v1418 = vld [vmem:[%s6 + $0x18] sm:$0xff]
      %v1419 = vld [vmem:[%s6 + $0x20] sm:$0xff]
      %v1420 = vld [vmem:[%s6 + $0x28] sm:$0xff]
      %v1421 = vld [vmem:[%s6 + $0x30] sm:$0xff]
      %v1422 = vld [vmem:[%s6 + $0x38] sm:$0xff]
      %v1423 = vld [vmem:[%s6 + $0x40] sm:$0xff]
      %v1424 = vld [vmem:[%s6 + $0x48] sm:$0xff]
      %v1425 = vld [vmem:[%s6 + $0x50] sm:$0xff]
      %v1426 = vld [vmem:[%s6 + $0x58] sm:$0xff]
      %v1427 = vld [vmem:[%s6 + $0x60] sm:$0xff]
      %v1428 = vld [vmem:[%s6 + $0x68] sm:$0xff]
      %v1429 = vld [vmem:[%s6 + $0x70] sm:$0xff]
      %v1430 = vld [vmem:[%s6 + $0x78] sm:$0xff]
      %v1431 = vld [vmem:[%s6 + $0x80] sm:$0xff]
      %v1432 = vld [vmem:[%s6 + $0x88] sm:$0xff]
      %v1433 = vld [vmem:[%s6 + $0x90] sm:$0xff]
      %v1434 = vld [vmem:[%s6 + $0x98] sm:$0xff]
      %v1435 = vld [vmem:[%s6 + $0xa0] sm:$0xff]
      %v1436 = vld [vmem:[%s6 + $0xa8] sm:$0xff]
      %v1437 = vld [vmem:[%s6 + $0xb0] sm:$0xff]
      %v1438 = vld [vmem:[%s6 + $0xb8] sm:$0xff]
      %v1439 = vld [vmem:[%s6 + $0xc0] sm:$0xff]
      %v1440 = vld [vmem:[%s6 + $0xc8] sm:$0xff]
      %v1441 = vld [vmem:[%s6 + $0xd0] sm:$0xff]
      %v1442 = vld [vmem:[%s6 + $0xd8] sm:$0xff]
      %v1443 = vld [vmem:[%s6 + $0xe0] sm:$0xff]
      %v1444 = vld [vmem:[%s6 + $0xe8] sm:$0xff]
      %v1445 = vld [vmem:[%s6 + $0xf0] sm:$0xff]
      %v1446 = vld [vmem:[%s6 + $0xf8] sm:$0xff]
      %v1447 = vld [vmem:[%s6 + $0x100] sm:$0xff]
      %v1448 = vld [vmem:[%s6 + $0x108] sm:$0xff]
      %v1449 = vld [vmem:[%s6 + $0x110] sm:$0xff]
      %v1450 = vld [vmem:[%s6 + $0x118] sm:$0xff]
      %v1451 = vld [vmem:[%s6 + $0x120] sm:$0xff]
      %v1452 = vld [vmem:[%s6 + $0x128] sm:$0xff]
      %v1453 = vld [vmem:[%s6 + $0x130] sm:$0xff]
      %v1454 = vld [vmem:[%s6 + $0x138] sm:$0xff]
      %v1455 = vld [vmem:[%s6 + $0x140] sm:$0xff]
      %v1456 = vld [vmem:[%s6 + $0x148] sm:$0xff]
      %v1457 = vld [vmem:[%s6 + $0x150] sm:$0xff]
      %v1458 = vld [vmem:[%s6 + $0x158] sm:$0xff]
      %v1459 = vld [vmem:[%s6 + $0x160] sm:$0xff]
      %v1460 = vld [vmem:[%s6 + $0x168] sm:$0xff]
      %v1461 = vld [vmem:[%s6 + $0x170] sm:$0xff]
      %v1462 = vld [vmem:[%s6 + $0x178] sm:$0xff]
      %v1463 = vld [vmem:[%s6 + $0x180] sm:$0xff]
      %v1464 = vld [vmem:[%s6 + $0x188] sm:$0xff]
      %v1465 = vld [vmem:[%s6 + $0x190] sm:$0xff]
      %v1466 = vld [vmem:[%s6 + $0x198] sm:$0xff]
      %v1467 = vld [vmem:[%s6 + $0x1a0] sm:$0xff]
      %v1468 = vld [vmem:[%s6 + $0x1a8] sm:$0xff]
      %v1469 = vld [vmem:[%s6 + $0x1b0] sm:$0xff]
      %v1470 = vld [vmem:[%s6 + $0x1b8] sm:$0xff]
      %v1471 = vld [vmem:[%s6 + $0x1c0] sm:$0xff]
      %v1472 = vld [vmem:[%s6 + $0x1c8] sm:$0xff]
      %v1473 = vld [vmem:[%s6 + $0x1d0] sm:$0xff]
      %v1474 = vld [vmem:[%s6 + $0x1d8] sm:$0xff]
      %v1475 = vld [vmem:[%s6 + $0x1e0] sm:$0xff]
      %v1476 = vld [vmem:[%s6 + $0x1e8] sm:$0xff]
      %v1477 = vld [vmem:[%s6 + $0x1f0] sm:$0xff]
      %v1478 = vld [vmem:[%s6 + $0x1f8] sm:$0xff]
      %v1479 = vpack.c.bf16 %v690, %v686
      %v1480 = vpack.c.bf16 %v692, %v688
      %v1481 = vpack.c.bf16 %v700, %v696
      %v1482 = vpack.c.bf16 %v702, %v698
      %v1483 = vpack.c.bf16 %v710, %v706
      %v1484 = vpack.c.bf16 %v712, %v708
      %v1485 = vpack.c.bf16 %v720, %v716
      %v1486 = vpack.c.bf16 %v722, %v718
      %v1487 = vpack.c.bf16 %v730, %v726
      %v1488 = vpack.c.bf16 %v732, %v728
      %v1489 = vpack.c.bf16 %v740, %v736
      %v1490 = vpack.c.bf16 %v742, %v738
      %v1491 = vpack.c.bf16 %v750, %v746
      %v1492 = vpack.c.bf16 %v752, %v748
      %v1493 = vpack.c.bf16 %v760, %v756
      %v1494 = vpack.c.bf16 %v762, %v758
      %v1559 = vunpack.c.l.b16 %v1415
      %v1560 = vunpack.c.h.b16 %v1415
      %v1561 = vunpack.c.l.b16 %v1416
      %v1562 = vunpack.c.h.b16 %v1416
      %v1563 = vunpack.c.l.b16 %v1417
      %v1564 = vunpack.c.h.b16 %v1417
      %v1565 = vunpack.c.l.b16 %v1418
      %v1566 = vunpack.c.h.b16 %v1418
      %v1567 = vunpack.c.l.b16 %v1419
      %v1568 = vunpack.c.h.b16 %v1419
      %v1569 = vunpack.c.l.b16 %v1420
      %v1570 = vunpack.c.h.b16 %v1420
      %v1571 = vunpack.c.l.b16 %v1421
      %v1572 = vunpack.c.h.b16 %v1421
      %v1573 = vunpack.c.l.b16 %v1422
      %v1574 = vunpack.c.h.b16 %v1422
      %v1575 = vunpack.c.l.b16 %v1423
      %v1576 = vunpack.c.h.b16 %v1423
      %v1577 = vunpack.c.l.b16 %v1424
      %v1578 = vunpack.c.h.b16 %v1424
      %v1579 = vunpack.c.l.b16 %v1425
      %v1580 = vunpack.c.h.b16 %v1425
      %v1581 = vunpack.c.l.b16 %v1426
      %v1582 = vunpack.c.h.b16 %v1426
      %v1583 = vunpack.c.l.b16 %v1427
      %v1584 = vunpack.c.h.b16 %v1427
      %v1585 = vunpack.c.l.b16 %v1428
      %v1586 = vunpack.c.h.b16 %v1428
      %v1587 = vunpack.c.l.b16 %v1429
      %v1588 = vunpack.c.h.b16 %v1429
      %v1589 = vunpack.c.l.b16 %v1430
      %v1590 = vunpack.c.h.b16 %v1430
      %v1591 = vunpack.c.l.b16 %v1431
      %v1592 = vunpack.c.h.b16 %v1431
      %v1593 = vunpack.c.l.b16 %v1432
      %v1594 = vunpack.c.h.b16 %v1432
      %v1595 = vunpack.c.l.b16 %v1433
      %v1596 = vunpack.c.h.b16 %v1433
      %v1597 = vunpack.c.l.b16 %v1434
      %v1598 = vunpack.c.h.b16 %v1434
      %v1599 = vunpack.c.l.b16 %v1435
      %v1600 = vunpack.c.h.b16 %v1435
      %v1601 = vunpack.c.l.b16 %v1436
      %v1602 = vunpack.c.h.b16 %v1436
      %v1603 = vunpack.c.l.b16 %v1437
      %v1604 = vunpack.c.h.b16 %v1437
      %v1605 = vunpack.c.l.b16 %v1438
      %v1606 = vunpack.c.h.b16 %v1438
      %v1607 = vunpack.c.l.b16 %v1439
      %v1608 = vunpack.c.h.b16 %v1439
      %v1609 = vunpack.c.l.b16 %v1440
      %v1610 = vunpack.c.h.b16 %v1440
      %v1611 = vunpack.c.l.b16 %v1441
      %v1612 = vunpack.c.h.b16 %v1441
      %v1613 = vunpack.c.l.b16 %v1442
      %v1614 = vunpack.c.h.b16 %v1442
      %v1615 = vunpack.c.l.b16 %v1443
      %v1616 = vunpack.c.h.b16 %v1443
      %v1617 = vunpack.c.l.b16 %v1444
      %v1618 = vunpack.c.h.b16 %v1444
      %v1619 = vunpack.c.l.b16 %v1445
      %v1620 = vunpack.c.h.b16 %v1445
      %v1621 = vunpack.c.l.b16 %v1446
      %v1622 = vunpack.c.h.b16 %v1446
      %v1623 = vunpack.c.l.b16 %v1447
      %v1624 = vunpack.c.h.b16 %v1447
      %v1625 = vunpack.c.l.b16 %v1448
      %v1626 = vunpack.c.h.b16 %v1448
      %v1627 = vunpack.c.l.b16 %v1449
      %v1628 = vunpack.c.h.b16 %v1449
      %v1629 = vunpack.c.l.b16 %v1450
      %v1630 = vunpack.c.h.b16 %v1450
      %v1631 = vunpack.c.l.b16 %v1451
      %v1632 = vunpack.c.h.b16 %v1451
      %v1633 = vunpack.c.l.b16 %v1452
      %v1634 = vunpack.c.h.b16 %v1452
      %v1635 = vunpack.c.l.b16 %v1453
      %v1636 = vunpack.c.h.b16 %v1453
      %v1637 = vunpack.c.l.b16 %v1454
      %v1638 = vunpack.c.h.b16 %v1454
      %v1639 = vunpack.c.l.b16 %v1455
      %v1640 = vunpack.c.h.b16 %v1455
      %v1641 = vunpack.c.l.b16 %v1456
      %v1642 = vunpack.c.h.b16 %v1456
      %v1643 = vunpack.c.l.b16 %v1457
      %v1644 = vunpack.c.h.b16 %v1457
      %v1645 = vunpack.c.l.b16 %v1458
      %v1646 = vunpack.c.h.b16 %v1458
      %v1647 = vunpack.c.l.b16 %v1459
      %v1648 = vunpack.c.h.b16 %v1459
      %v1649 = vunpack.c.l.b16 %v1460
      %v1650 = vunpack.c.h.b16 %v1460
      %v1651 = vunpack.c.l.b16 %v1461
      %v1652 = vunpack.c.h.b16 %v1461
      %v1653 = vunpack.c.l.b16 %v1462
      %v1654 = vunpack.c.h.b16 %v1462
      %v1655 = vunpack.c.l.b16 %v1463
      %v1656 = vunpack.c.h.b16 %v1463
      %v1657 = vunpack.c.l.b16 %v1464
      %v1658 = vunpack.c.h.b16 %v1464
      %v1659 = vunpack.c.l.b16 %v1465
      %v1660 = vunpack.c.h.b16 %v1465
      %v1661 = vunpack.c.l.b16 %v1466
      %v1662 = vunpack.c.h.b16 %v1466
      %v1663 = vunpack.c.l.b16 %v1467
      %v1664 = vunpack.c.h.b16 %v1467
      %v1665 = vunpack.c.l.b16 %v1468
      %v1666 = vunpack.c.h.b16 %v1468
      %v1667 = vunpack.c.l.b16 %v1469
      %v1668 = vunpack.c.h.b16 %v1469
      %v1669 = vunpack.c.l.b16 %v1470
      %v1670 = vunpack.c.h.b16 %v1470
      %v1671 = vunpack.c.l.b16 %v1471
      %v1672 = vunpack.c.h.b16 %v1471
      %v1673 = vunpack.c.l.b16 %v1472
      %v1674 = vunpack.c.h.b16 %v1472
      %v1675 = vunpack.c.l.b16 %v1473
      %v1676 = vunpack.c.h.b16 %v1473
      %v1677 = vunpack.c.l.b16 %v1474
      %v1678 = vunpack.c.h.b16 %v1474
      %v1679 = vunpack.c.l.b16 %v1475
      %v1680 = vunpack.c.h.b16 %v1475
      %v1681 = vunpack.c.l.b16 %v1476
      %v1682 = vunpack.c.h.b16 %v1476
      %v1683 = vunpack.c.l.b16 %v1477
      %v1684 = vunpack.c.h.b16 %v1477
      %v1685 = vunpack.c.l.b16 %v1478
      %v1686 = vunpack.c.h.b16 %v1478
      %v1687 = vpack.c.b16 %v1563, %v1559
      %v1688 = vpack.c.b16 %v1564, %v1560
      %v1689 = vpack.c.b16 %v1565, %v1561
      %v1690 = vpack.c.b16 %v1566, %v1562
      %v1691 = vpack.c.b16 %v1571, %v1567
      %v1692 = vpack.c.b16 %v1572, %v1568
      %v1693 = vpack.c.b16 %v1573, %v1569
      %v1694 = vpack.c.b16 %v1574, %v1570
      %v1695 = vpack.c.b16 %v1579, %v1575
      %v1696 = vpack.c.b16 %v1580, %v1576
      %v1697 = vpack.c.b16 %v1581, %v1577
      %v1698 = vpack.c.b16 %v1582, %v1578
      %v1699 = vpack.c.b16 %v1587, %v1583
      %v1700 = vpack.c.b16 %v1588, %v1584
      %v1701 = vpack.c.b16 %v1589, %v1585
      %v1702 = vpack.c.b16 %v1590, %v1586
      %v1703 = vpack.c.b16 %v1595, %v1591
      %v1704 = vpack.c.b16 %v1596, %v1592
      %v1705 = vpack.c.b16 %v1597, %v1593
      %v1706 = vpack.c.b16 %v1598, %v1594
      %v1707 = vpack.c.b16 %v1603, %v1599
      %v1708 = vpack.c.b16 %v1604, %v1600
      %v1709 = vpack.c.b16 %v1605, %v1601
      %v1710 = vpack.c.b16 %v1606, %v1602
      %v1711 = vpack.c.b16 %v1611, %v1607
      %v1712 = vpack.c.b16 %v1612, %v1608
      %v1713 = vpack.c.b16 %v1613, %v1609
      %v1714 = vpack.c.b16 %v1614, %v1610
      %v1715 = vpack.c.b16 %v1619, %v1615
      %v1716 = vpack.c.b16 %v1620, %v1616
      %v1717 = vpack.c.b16 %v1621, %v1617
      %v1718 = vpack.c.b16 %v1622, %v1618
      %v1719 = vpack.c.b16 %v1627, %v1623
      %v1720 = vpack.c.b16 %v1628, %v1624
      %v1721 = vpack.c.b16 %v1629, %v1625
      %v1722 = vpack.c.b16 %v1630, %v1626
      %v1723 = vpack.c.b16 %v1635, %v1631
      %v1724 = vpack.c.b16 %v1636, %v1632
      %v1725 = vpack.c.b16 %v1637, %v1633
      %v1726 = vpack.c.b16 %v1638, %v1634
      %v1727 = vpack.c.b16 %v1643, %v1639
      %v1728 = vpack.c.b16 %v1644, %v1640
      %v1729 = vpack.c.b16 %v1645, %v1641
      %v1730 = vpack.c.b16 %v1646, %v1642
      %v1731 = vpack.c.b16 %v1651, %v1647
      %v1732 = vpack.c.b16 %v1652, %v1648
      %v1733 = vpack.c.b16 %v1653, %v1649
      %v1734 = vpack.c.b16 %v1654, %v1650
      %v1735 = vpack.c.b16 %v1659, %v1655
      %v1736 = vpack.c.b16 %v1660, %v1656
      %v1737 = vpack.c.b16 %v1661, %v1657
      %v1738 = vpack.c.b16 %v1662, %v1658
      %v1739 = vpack.c.b16 %v1667, %v1663
      %v1740 = vpack.c.b16 %v1668, %v1664
      %v1741 = vpack.c.b16 %v1669, %v1665
      %v1742 = vpack.c.b16 %v1670, %v1666
      %v1743 = vpack.c.b16 %v1675, %v1671
      %v1744 = vpack.c.b16 %v1676, %v1672
      %v1745 = vpack.c.b16 %v1677, %v1673
      %v1746 = vpack.c.b16 %v1678, %v1674
      %v1747 = vpack.c.b16 %v1683, %v1679
      %v1748 = vpack.c.b16 %v1684, %v1680
      %v1749 = vpack.c.b16 %v1685, %v1681
      %v1750 = vpack.c.b16 %v1686, %v1682
      %1815 = vmatprep.subr.bf16.mxu0 %v1716
      %1816 = vmatpush1.bf16.msra.mxu0 %v1715
      %1817 = vmatprep.subr.bf16.mxu0 %v1712
      %1818 = vmatpush1.bf16.msra.mxu0 %v1711
      %1819 = vmatprep.subr.bf16.mxu0 %v1708
      %1820 = vmatpush1.bf16.msra.mxu0 %v1707
      %1821 = vmatprep.subr.bf16.mxu0 %v1704
      %1822 = vmatpush1.bf16.msra.mxu0 %v1703
      %1823 = vmatprep.subr.bf16.mxu0 %v1700
      %1824 = vmatpush1.bf16.msra.mxu0 %v1699
      %1825 = vmatprep.subr.bf16.mxu0 %v1696
      %1826 = vmatpush1.bf16.msra.mxu0 %v1695
      %1827 = vmatprep.subr.bf16.mxu0 %v1692
      %1828 = vmatpush1.bf16.msra.mxu0 %v1691
      %1829 = vmatprep.subr.bf16.mxu0 %v1688
      %1830 = vmatpush1.bf16.msra.mxu0 %v1687
      %1831 = vmatprep.subr.bf16.mxu0 %v1748
      %1832 = vmatpush2.bf16.msra.mxu0 %v1747
      %1833 = vmatprep.subr.bf16.mxu0 %v1744
      %1834 = vmatpush2.bf16.msra.mxu0 %v1743
      %1835 = vmatprep.subr.bf16.mxu0 %v1740
      %1836 = vmatpush2.bf16.msra.mxu0 %v1739
      %1837 = vmatprep.subr.bf16.mxu0 %v1736
      %1838 = vmatpush2.bf16.msra.mxu0 %v1735
      %1839 = vmatprep.subr.bf16.mxu0 %v1732
      %1840 = vmatpush2.bf16.msra.mxu0 %v1731
      %1841 = vmatprep.subr.bf16.mxu0 %v1728
      %1842 = vmatpush2.bf16.msra.mxu0 %v1727
      %1843 = vmatprep.subr.bf16.mxu0 %v1724
      %1844 = vmatpush2.bf16.msra.mxu0 %v1723
      %1845 = vmatprep.subr.bf16.mxu0 %v1720
      %1846 = vmatpush2.bf16.msra.mxu0 %v1719
      %1847 = vmatprep.mubr.bf16.mxu0 %v1480
      %1848 = vmatmul.mubr.bf16.gmra.mxu0 %v1479
      %v1849 = vpop.f32.mrf.mxu0
      %v1850 = vadd.f32 0.0, %v1849
      %v1851 = vpop.f32.mrf.mxu0
      %v1852 = vadd.f32 0.0, %v1851
      %v1853 = vpop.f32.mrf.mxu0
      %v1854 = vadd.f32 0.0, %v1853
      %v1855 = vpop.f32.mrf.mxu0
      %v1856 = vadd.f32 0.0, %v1855
      %1857 = vmatprep.mubr.bf16.mxu0 %v1482
      %1858 = vmatmul.mubr.bf16.gmra.mxu0 %v1481
      %v1859 = vpop.f32.mrf.mxu0
      %v1860 = vadd.f32 0.0, %v1859
      %v1861 = vpop.f32.mrf.mxu0
      %v1862 = vadd.f32 0.0, %v1861
      %v1863 = vpop.f32.mrf.mxu0
      %v1864 = vadd.f32 0.0, %v1863
      %v1865 = vpop.f32.mrf.mxu0
      %v1866 = vadd.f32 0.0, %v1865
      %1867 = vmatprep.mubr.bf16.mxu0 %v1484
      %1868 = vmatmul.mubr.bf16.gmra.mxu0 %v1483
      %v1869 = vpop.f32.mrf.mxu0
      %v1870 = vadd.f32 0.0, %v1869
      %v1871 = vpop.f32.mrf.mxu0
      %v1872 = vadd.f32 0.0, %v1871
      %v1873 = vpop.f32.mrf.mxu0
      %v1874 = vadd.f32 0.0, %v1873
      %v1875 = vpop.f32.mrf.mxu0
      %v1876 = vadd.f32 0.0, %v1875
      %1877 = vmatprep.mubr.bf16.mxu0 %v1486
      %1878 = vmatmul.mubr.bf16.gmra.mxu0 %v1485
      %v1879 = vpop.f32.mrf.mxu0
      %v1880 = vadd.f32 0.0, %v1879
      %v1881 = vpop.f32.mrf.mxu0
      %v1882 = vadd.f32 0.0, %v1881
      %v1883 = vpop.f32.mrf.mxu0
      %v1884 = vadd.f32 0.0, %v1883
      %v1885 = vpop.f32.mrf.mxu0
      %v1886 = vadd.f32 0.0, %v1885
      %1887 = vmatprep.mubr.bf16.mxu0 %v1488
      %1888 = vmatmul.mubr.bf16.gmra.mxu0 %v1487
      %v1889 = vpop.f32.mrf.mxu0
      %v1890 = vadd.f32 0.0, %v1889
      %v1891 = vpop.f32.mrf.mxu0
      %v1892 = vadd.f32 0.0, %v1891
      %v1893 = vpop.f32.mrf.mxu0
      %v1894 = vadd.f32 0.0, %v1893
      %v1895 = vpop.f32.mrf.mxu0
      %v1896 = vadd.f32 0.0, %v1895
      %1897 = vmatprep.mubr.bf16.mxu0 %v1490
      %1898 = vmatmul.mubr.bf16.gmra.mxu0 %v1489
      %v1899 = vpop.f32.mrf.mxu0
      %v1900 = vadd.f32 0.0, %v1899
      %v1901 = vpop.f32.mrf.mxu0
      %v1902 = vadd.f32 0.0, %v1901
      %v1903 = vpop.f32.mrf.mxu0
      %v1904 = vadd.f32 0.0, %v1903
      %v1905 = vpop.f32.mrf.mxu0
      %v1906 = vadd.f32 0.0, %v1905
      %1907 = vmatprep.mubr.bf16.mxu0 %v1492
      %1908 = vmatmul.mubr.bf16.gmra.mxu0 %v1491
      %v1909 = vpop.f32.mrf.mxu0
      %v1910 = vadd.f32 0.0, %v1909
      %v1911 = vpop.f32.mrf.mxu0
      %v1912 = vadd.f32 0.0, %v1911
      %v1913 = vpop.f32.mrf.mxu0
      %v1914 = vadd.f32 0.0, %v1913
      %v1915 = vpop.f32.mrf.mxu0
      %v1916 = vadd.f32 0.0, %v1915
      %1917 = vmatprep.mubr.bf16.mxu0 %v1494
      %1918 = vmatmul.mubr.bf16.gmra.mxu0 %v1493
      %v1919 = vpop.f32.mrf.mxu0
      %v1920 = vadd.f32 0.0, %v1919
      %v1921 = vpop.f32.mrf.mxu0
      %v1922 = vadd.f32 0.0, %v1921
      %v1923 = vpop.f32.mrf.mxu0
      %v1924 = vadd.f32 0.0, %v1923
      %v1925 = vpop.f32.mrf.mxu0
      %v1926 = vadd.f32 0.0, %v1925
      %1927 = vdwg.mxu0
      %1928 = vmatprep.subr.bf16.mxu0 %v1718
      %1929 = vmatpush1.bf16.msra.mxu0 %v1717
      %1930 = vmatprep.subr.bf16.mxu0 %v1714
      %1931 = vmatpush1.bf16.msra.mxu0 %v1713
      %1932 = vmatprep.subr.bf16.mxu0 %v1710
      %1933 = vmatpush1.bf16.msra.mxu0 %v1709
      %1934 = vmatprep.subr.bf16.mxu0 %v1706
      %1935 = vmatpush1.bf16.msra.mxu0 %v1705
      %1936 = vmatprep.subr.bf16.mxu0 %v1702
      %1937 = vmatpush1.bf16.msra.mxu0 %v1701
      %1938 = vmatprep.subr.bf16.mxu0 %v1698
      %1939 = vmatpush1.bf16.msra.mxu0 %v1697
      %1940 = vmatprep.subr.bf16.mxu0 %v1694
      %1941 = vmatpush1.bf16.msra.mxu0 %v1693
      %1942 = vmatprep.subr.bf16.mxu0 %v1690
      %1943 = vmatpush1.bf16.msra.mxu0 %v1689
      %1944 = vmatprep.subr.bf16.mxu0 %v1750
      %1945 = vmatpush2.bf16.msra.mxu0 %v1749
      %1946 = vmatprep.subr.bf16.mxu0 %v1746
      %1947 = vmatpush2.bf16.msra.mxu0 %v1745
      %1948 = vmatprep.subr.bf16.mxu0 %v1742
      %1949 = vmatpush2.bf16.msra.mxu0 %v1741
      %1950 = vmatprep.subr.bf16.mxu0 %v1738
      %1951 = vmatpush2.bf16.msra.mxu0 %v1737
      %1952 = vmatprep.subr.bf16.mxu0 %v1734
      %1953 = vmatpush2.bf16.msra.mxu0 %v1733
      %1954 = vmatprep.subr.bf16.mxu0 %v1730
      %1955 = vmatpush2.bf16.msra.mxu0 %v1729
      %1956 = vmatprep.subr.bf16.mxu0 %v1726
      %1957 = vmatpush2.bf16.msra.mxu0 %v1725
      %1958 = vmatprep.subr.bf16.mxu0 %v1722
      %1959 = vmatpush2.bf16.msra.mxu0 %v1721
      %1960 = vmatprep.mubr.bf16.mxu0 %v1480
      %1961 = vmatmul.mubr.bf16.gmra.mxu0 %v1479
      %v1962 = vpop.f32.mrf.mxu0
      %v1963 = vadd.f32 0.0, %v1962
      %v1964 = vpop.f32.mrf.mxu0
      %v1965 = vadd.f32 0.0, %v1964
      %v1966 = vpop.f32.mrf.mxu0
      %v1967 = vadd.f32 0.0, %v1966
      %v1968 = vpop.f32.mrf.mxu0
      %v1969 = vadd.f32 0.0, %v1968
      %1970 = vmatprep.mubr.bf16.mxu0 %v1482
      %1971 = vmatmul.mubr.bf16.gmra.mxu0 %v1481
      %v1972 = vpop.f32.mrf.mxu0
      %v1973 = vadd.f32 0.0, %v1972
      %v1974 = vpop.f32.mrf.mxu0
      %v1975 = vadd.f32 0.0, %v1974
      %v1976 = vpop.f32.mrf.mxu0
      %v1977 = vadd.f32 0.0, %v1976
      %v1978 = vpop.f32.mrf.mxu0
      %v1979 = vadd.f32 0.0, %v1978
      %1980 = vmatprep.mubr.bf16.mxu0 %v1484
      %1981 = vmatmul.mubr.bf16.gmra.mxu0 %v1483
      %v1982 = vpop.f32.mrf.mxu0
      %v1983 = vadd.f32 0.0, %v1982
      %v1984 = vpop.f32.mrf.mxu0
      %v1985 = vadd.f32 0.0, %v1984
      %v1986 = vpop.f32.mrf.mxu0
      %v1987 = vadd.f32 0.0, %v1986
      %v1988 = vpop.f32.mrf.mxu0
      %v1989 = vadd.f32 0.0, %v1988
      %1990 = vmatprep.mubr.bf16.mxu0 %v1486
      %1991 = vmatmul.mubr.bf16.gmra.mxu0 %v1485
      %v1992 = vpop.f32.mrf.mxu0
      %v1993 = vadd.f32 0.0, %v1992
      %v1994 = vpop.f32.mrf.mxu0
      %v1995 = vadd.f32 0.0, %v1994
      %v1996 = vpop.f32.mrf.mxu0
      %v1997 = vadd.f32 0.0, %v1996
      %v1998 = vpop.f32.mrf.mxu0
      %v1999 = vadd.f32 0.0, %v1998
      %2000 = vmatprep.mubr.bf16.mxu0 %v1488
      %2001 = vmatmul.mubr.bf16.gmra.mxu0 %v1487
      %v2002 = vpop.f32.mrf.mxu0
      %v2003 = vadd.f32 0.0, %v2002
      %v2004 = vpop.f32.mrf.mxu0
      %v2005 = vadd.f32 0.0, %v2004
      %v2006 = vpop.f32.mrf.mxu0
      %v2007 = vadd.f32 0.0, %v2006
      %v2008 = vpop.f32.mrf.mxu0
      %v2009 = vadd.f32 0.0, %v2008
      %2010 = vmatprep.mubr.bf16.mxu0 %v1490
      %2011 = vmatmul.mubr.bf16.gmra.mxu0 %v1489
      %v2012 = vpop.f32.mrf.mxu0
      %v2013 = vadd.f32 0.0, %v2012
      %v2014 = vpop.f32.mrf.mxu0
      %v2015 = vadd.f32 0.0, %v2014
      %v2016 = vpop.f32.mrf.mxu0
      %v2017 = vadd.f32 0.0, %v2016
      %v2018 = vpop.f32.mrf.mxu0
      %v2019 = vadd.f32 0.0, %v2018
      %2020 = vmatprep.mubr.bf16.mxu0 %v1492
      %2021 = vmatmul.mubr.bf16.gmra.mxu0 %v1491
      %v2022 = vpop.f32.mrf.mxu0
      %v2023 = vadd.f32 0.0, %v2022
      %v2024 = vpop.f32.mrf.mxu0
      %v2025 = vadd.f32 0.0, %v2024
      %v2026 = vpop.f32.mrf.mxu0
      %v2027 = vadd.f32 0.0, %v2026
      %v2028 = vpop.f32.mrf.mxu0
      %v2029 = vadd.f32 0.0, %v2028
      %2030 = vmatprep.mubr.bf16.mxu0 %v1494
      %2031 = vmatmul.mubr.bf16.gmra.mxu0 %v1493
      %v2032 = vpop.f32.mrf.mxu0
      %v2033 = vadd.f32 0.0, %v2032
      %v2034 = vpop.f32.mrf.mxu0
      %v2035 = vadd.f32 0.0, %v2034
      %v2036 = vpop.f32.mrf.mxu0
      %v2037 = vadd.f32 0.0, %v2036
      %v2038 = vpop.f32.mrf.mxu0
      %v2039 = vadd.f32 0.0, %v2038
      %2040 = vdwg.mxu0
      %v2045 = vcombine.low %v1368, %v1370
      %v2046 = vcombine.high %v1368, %v1370
      %v2047 = vcombine.low %v1409, %v1411
      %v2048 = vcombine.high %v1409, %v1411
      %v2050 = vunpack.c.l.s4 1966171168
      %v2051 = vunpack.c.0.s8 %v2050
      %v2052 = vlaneseq
      %v2053 = vshrl.u32 %v2052, 7
      %v2054 = vsub.s32 %v2051, %v2053
      %v2055 = vrot.slane %v2045, %v2054
      %v2057 = vunpack.c.l.s4 1966171168
      %v2058 = vunpack.c.0.s8 %v2057
      %v2059 = vlaneseq
      %v2060 = vshrl.u32 %v2059, 7
      %v2061 = vsub.s32 %v2058, %v2060
      %v2062 = vrot.slane %v2046, %v2061
      %v2064 = vunpack.c.l.s4 1966171168
      %v2065 = vunpack.c.0.s8 %v2064
      %v2066 = vlaneseq
      %v2067 = vshrl.u32 %v2066, 7
      %v2068 = vsub.s32 %v2065, %v2067
      %v2069 = vrot.slane %v2047, %v2068
      %v2071 = vunpack.c.l.s4 1966171168
      %v2072 = vunpack.c.0.s8 %v2071
      %v2073 = vlaneseq
      %v2074 = vshrl.u32 %v2073, 7
      %v2075 = vsub.s32 %v2072, %v2074
      %v2076 = vrot.slane %v2048, %v2075
      %v2077 = vcombine.low %v2055, %v2069
      %v2078 = vcombine.high %v2055, %v2069
      %v2079 = vcombine.low %v2062, %v2076
      %v2080 = vcombine.high %v2062, %v2076
      %v2082 = vunpack.c.l.s4 1966171168
      %v2083 = vunpack.c.0.s8 %v2082
      %v2084 = vlaneseq
      %v2085 = vshrl.u32 %v2084, 7
      %v2086 = vsub.s32 %v2083, %v2085
      %v2087 = vrot.slane %v2077, %v2086
      %v2089 = vunpack.c.l.s4 1966171168
      %v2090 = vunpack.c.0.s8 %v2089
      %v2091 = vlaneseq
      %v2092 = vshrl.u32 %v2091, 7
      %v2093 = vsub.s32 %v2090, %v2092
      %v2094 = vrot.slane %v2079, %v2093
      %v2096 = vunpack.c.l.s4 1966171168
      %v2097 = vunpack.c.0.s8 %v2096
      %v2098 = vlaneseq
      %v2099 = vshrl.u32 %v2098, 7
      %v2100 = vsub.s32 %v2097, %v2099
      %v2101 = vrot.slane %v2078, %v2100
      %v2103 = vunpack.c.l.s4 1966171168
      %v2104 = vunpack.c.0.s8 %v2103
      %v2105 = vlaneseq
      %v2106 = vshrl.u32 %v2105, 7
      %v2107 = vsub.s32 %v2104, %v2106
      %v2108 = vrot.slane %v2080, %v2107
      %v2109 = vcombine.high %v2087, %v2087
      %v2110 = vcombine.high %v2094, %v2094
      %v2111 = vcombine.high %v2101, %v2101
      %v2112 = vcombine.high %v2108, %v2108
      %v2113 = vlaneseq
      %v2114 = vshrl.u32 %v2113, 7
      %v2115 = vsub.s32 0, %v2114
      %v2116 = vrot.slane %v2087, %v2115
      %v2117 = vlaneseq
      %v2118 = vshrl.u32 %v2117, 7
      %v2119 = vsub.s32 1, %v2118
      %v2120 = vrot.slane %v2087, %v2119
      %v2121 = vlaneseq
      %v2122 = vshrl.u32 %v2121, 7
      %v2123 = vsub.s32 2, %v2122
      %v2124 = vrot.slane %v2087, %v2123
      %v2125 = vlaneseq
      %v2126 = vshrl.u32 %v2125, 7
      %v2127 = vsub.s32 3, %v2126
      %v2128 = vrot.slane %v2087, %v2127
      %v2129 = vlaneseq
      %v2130 = vshrl.u32 %v2129, 7
      %v2131 = vsub.s32 0, %v2130
      %v2132 = vrot.slane %v2101, %v2131
      %v2133 = vlaneseq
      %v2134 = vshrl.u32 %v2133, 7
      %v2135 = vsub.s32 1, %v2134
      %v2136 = vrot.slane %v2101, %v2135
      %v2137 = vlaneseq
      %v2138 = vshrl.u32 %v2137, 7
      %v2139 = vsub.s32 2, %v2138
      %v2140 = vrot.slane %v2101, %v2139
      %v2141 = vlaneseq
      %v2142 = vshrl.u32 %v2141, 7
      %v2143 = vsub.s32 3, %v2142
      %v2144 = vrot.slane %v2101, %v2143
      %v2145 = vlaneseq
      %v2146 = vshrl.u32 %v2145, 7
      %v2147 = vsub.s32 0, %v2146
      %v2148 = vrot.slane %v2109, %v2147
      %v2149 = vlaneseq
      %v2150 = vshrl.u32 %v2149, 7
      %v2151 = vsub.s32 1, %v2150
      %v2152 = vrot.slane %v2109, %v2151
      %v2153 = vlaneseq
      %v2154 = vshrl.u32 %v2153, 7
      %v2155 = vsub.s32 2, %v2154
      %v2156 = vrot.slane %v2109, %v2155
      %v2157 = vlaneseq
      %v2158 = vshrl.u32 %v2157, 7
      %v2159 = vsub.s32 3, %v2158
      %v2160 = vrot.slane %v2109, %v2159
      %v2161 = vlaneseq
      %v2162 = vshrl.u32 %v2161, 7
      %v2163 = vsub.s32 0, %v2162
      %v2164 = vrot.slane %v2111, %v2163
      %v2165 = vlaneseq
      %v2166 = vshrl.u32 %v2165, 7
      %v2167 = vsub.s32 1, %v2166
      %v2168 = vrot.slane %v2111, %v2167
      %v2169 = vlaneseq
      %v2170 = vshrl.u32 %v2169, 7
      %v2171 = vsub.s32 2, %v2170
      %v2172 = vrot.slane %v2111, %v2171
      %v2173 = vlaneseq
      %v2174 = vshrl.u32 %v2173, 7
      %v2175 = vsub.s32 3, %v2174
      %v2176 = vrot.slane %v2111, %v2175
      %v2177 = vlaneseq
      %v2178 = vshrl.u32 %v2177, 7
      %v2179 = vsub.s32 0, %v2178
      %v2180 = vrot.slane %v2094, %v2179
      %v2181 = vlaneseq
      %v2182 = vshrl.u32 %v2181, 7
      %v2183 = vsub.s32 1, %v2182
      %v2184 = vrot.slane %v2094, %v2183
      %v2185 = vlaneseq
      %v2186 = vshrl.u32 %v2185, 7
      %v2187 = vsub.s32 2, %v2186
      %v2188 = vrot.slane %v2094, %v2187
      %v2189 = vlaneseq
      %v2190 = vshrl.u32 %v2189, 7
      %v2191 = vsub.s32 3, %v2190
      %v2192 = vrot.slane %v2094, %v2191
      %v2193 = vlaneseq
      %v2194 = vshrl.u32 %v2193, 7
      %v2195 = vsub.s32 0, %v2194
      %v2196 = vrot.slane %v2108, %v2195
      %v2197 = vlaneseq
      %v2198 = vshrl.u32 %v2197, 7
      %v2199 = vsub.s32 1, %v2198
      %v2200 = vrot.slane %v2108, %v2199
      %v2201 = vlaneseq
      %v2202 = vshrl.u32 %v2201, 7
      %v2203 = vsub.s32 2, %v2202
      %v2204 = vrot.slane %v2108, %v2203
      %v2205 = vlaneseq
      %v2206 = vshrl.u32 %v2205, 7
      %v2207 = vsub.s32 3, %v2206
      %v2208 = vrot.slane %v2108, %v2207
      %v2209 = vlaneseq
      %v2210 = vshrl.u32 %v2209, 7
      %v2211 = vsub.s32 0, %v2210
      %v2212 = vrot.slane %v2110, %v2211
      %v2213 = vlaneseq
      %v2214 = vshrl.u32 %v2213, 7
      %v2215 = vsub.s32 1, %v2214
      %v2216 = vrot.slane %v2110, %v2215
      %v2217 = vlaneseq
      %v2218 = vshrl.u32 %v2217, 7
      %v2219 = vsub.s32 2, %v2218
      %v2220 = vrot.slane %v2110, %v2219
      %v2221 = vlaneseq
      %v2222 = vshrl.u32 %v2221, 7
      %v2223 = vsub.s32 3, %v2222
      %v2224 = vrot.slane %v2110, %v2223
      %v2225 = vlaneseq
      %v2226 = vshrl.u32 %v2225, 7
      %v2227 = vsub.s32 0, %v2226
      %v2228 = vrot.slane %v2112, %v2227
      %v2229 = vlaneseq
      %v2230 = vshrl.u32 %v2229, 7
      %v2231 = vsub.s32 1, %v2230
      %v2232 = vrot.slane %v2112, %v2231
      %v2233 = vlaneseq
      %v2234 = vshrl.u32 %v2233, 7
      %v2235 = vsub.s32 2, %v2234
      %v2236 = vrot.slane %v2112, %v2235
      %v2237 = vlaneseq
      %v2238 = vshrl.u32 %v2237, 7
      %v2239 = vsub.s32 3, %v2238
      %v2240 = vrot.slane %v2112, %v2239
      %v2273 = vadd.f32 %v1850, %v2116
      %v2274 = vadd.f32 %v1852, %v2120
      %v2275 = vadd.f32 %v1963, %v2124
      %v2276 = vadd.f32 %v1965, %v2128
      %v2277 = vadd.f32 %v1854, %v2116
      %v2278 = vadd.f32 %v1856, %v2120
      %v2279 = vadd.f32 %v1967, %v2124
      %v2280 = vadd.f32 %v1969, %v2128
      %v2281 = vadd.f32 %v1860, %v2132
      %v2282 = vadd.f32 %v1862, %v2136
      %v2283 = vadd.f32 %v1973, %v2140
      %v2284 = vadd.f32 %v1975, %v2144
      %v2285 = vadd.f32 %v1864, %v2132
      %v2286 = vadd.f32 %v1866, %v2136
      %v2287 = vadd.f32 %v1977, %v2140
      %v2288 = vadd.f32 %v1979, %v2144
      %v2289 = vadd.f32 %v1870, %v2148
      %v2290 = vadd.f32 %v1872, %v2152
      %v2291 = vadd.f32 %v1983, %v2156
      %v2292 = vadd.f32 %v1985, %v2160
      %v2293 = vadd.f32 %v1874, %v2148
      %v2294 = vadd.f32 %v1876, %v2152
      %v2295 = vadd.f32 %v1987, %v2156
      %v2296 = vadd.f32 %v1989, %v2160
      %v2297 = vadd.f32 %v1880, %v2164
      %v2298 = vadd.f32 %v1882, %v2168
      %v2299 = vadd.f32 %v1993, %v2172
      %v2300 = vadd.f32 %v1995, %v2176
      %v2301 = vadd.f32 %v1884, %v2164
      %v2302 = vadd.f32 %v1886, %v2168
      %v2303 = vadd.f32 %v1997, %v2172
      %v2304 = vadd.f32 %v1999, %v2176
      %v2305 = vadd.f32 %v1890, %v2180
      %v2306 = vadd.f32 %v1892, %v2184
      %v2307 = vadd.f32 %v2003, %v2188
      %v2308 = vadd.f32 %v2005, %v2192
      %v2309 = vadd.f32 %v1894, %v2180
      %v2310 = vadd.f32 %v1896, %v2184
      %v2311 = vadd.f32 %v2007, %v2188
      %v2312 = vadd.f32 %v2009, %v2192
      %v2313 = vadd.f32 %v1900, %v2196
      %v2314 = vadd.f32 %v1902, %v2200
      %v2315 = vadd.f32 %v2013, %v2204
      %v2316 = vadd.f32 %v2015, %v2208
      %v2317 = vadd.f32 %v1904, %v2196
      %v2318 = vadd.f32 %v1906, %v2200
      %v2319 = vadd.f32 %v2017, %v2204
      %v2320 = vadd.f32 %v2019, %v2208
      %v2321 = vadd.f32 %v1910, %v2212
      %v2322 = vadd.f32 %v1912, %v2216
      %v2323 = vadd.f32 %v2023, %v2220
      %v2324 = vadd.f32 %v2025, %v2224
      %v2325 = vadd.f32 %v1914, %v2212
      %v2326 = vadd.f32 %v1916, %v2216
      %v2327 = vadd.f32 %v2027, %v2220
      %v2328 = vadd.f32 %v2029, %v2224
      %v2329 = vadd.f32 %v1920, %v2228
      %v2330 = vadd.f32 %v1922, %v2232
      %v2331 = vadd.f32 %v2033, %v2236
      %v2332 = vadd.f32 %v2035, %v2240
      %v2333 = vadd.f32 %v1924, %v2228
      %v2334 = vadd.f32 %v1926, %v2232
      %v2335 = vadd.f32 %v2037, %v2236
      %v2336 = vadd.f32 %v2039, %v2240
      %v2337 = vld [vmem:[%s7] sm:$0xf]
      %v2339 = vlaneseq
      %v2340 = vshrl.u32 %v2339, 7
      %v2341 = vsub.s32 0, %v2340
      %v2342 = vrot.slane %v2337, %v2341
      %v2343 = vlaneseq
      %v2344 = vshrl.u32 %v2343, 7
      %v2345 = vsub.s32 1, %v2344
      %v2346 = vrot.slane %v2337, %v2345
      %v2347 = vlaneseq
      %v2348 = vshrl.u32 %v2347, 7
      %v2349 = vsub.s32 2, %v2348
      %v2350 = vrot.slane %v2337, %v2349
      %v2351 = vlaneseq
      %v2352 = vshrl.u32 %v2351, 7
      %v2353 = vsub.s32 3, %v2352
      %v2354 = vrot.slane %v2337, %v2353
      %v2359 = vadd.f32 %v2273, %v2342
      %v2360 = vadd.f32 %v2274, %v2346
      %v2361 = vadd.f32 %v2275, %v2350
      %v2362 = vadd.f32 %v2276, %v2354
      %v2363 = vadd.f32 %v2277, %v2342
      %v2364 = vadd.f32 %v2278, %v2346
      %v2365 = vadd.f32 %v2279, %v2350
      %v2366 = vadd.f32 %v2280, %v2354
      %v2367 = vadd.f32 %v2281, %v2342
      %v2368 = vadd.f32 %v2282, %v2346
      %v2369 = vadd.f32 %v2283, %v2350
      %v2370 = vadd.f32 %v2284, %v2354
      %v2371 = vadd.f32 %v2285, %v2342
      %v2372 = vadd.f32 %v2286, %v2346
      %v2373 = vadd.f32 %v2287, %v2350
      %v2374 = vadd.f32 %v2288, %v2354
      %v2375 = vadd.f32 %v2289, %v2342
      %v2376 = vadd.f32 %v2290, %v2346
      %v2377 = vadd.f32 %v2291, %v2350
      %v2378 = vadd.f32 %v2292, %v2354
      %v2379 = vadd.f32 %v2293, %v2342
      %v2380 = vadd.f32 %v2294, %v2346
      %v2381 = vadd.f32 %v2295, %v2350
      %v2382 = vadd.f32 %v2296, %v2354
      %v2383 = vadd.f32 %v2297, %v2342
      %v2384 = vadd.f32 %v2298, %v2346
      %v2385 = vadd.f32 %v2299, %v2350
      %v2386 = vadd.f32 %v2300, %v2354
      %v2387 = vadd.f32 %v2301, %v2342
      %v2388 = vadd.f32 %v2302, %v2346
      %v2389 = vadd.f32 %v2303, %v2350
      %v2390 = vadd.f32 %v2304, %v2354
      %v2391 = vadd.f32 %v2305, %v2342
      %v2392 = vadd.f32 %v2306, %v2346
      %v2393 = vadd.f32 %v2307, %v2350
      %v2394 = vadd.f32 %v2308, %v2354
      %v2395 = vadd.f32 %v2309, %v2342
      %v2396 = vadd.f32 %v2310, %v2346
      %v2397 = vadd.f32 %v2311, %v2350
      %v2398 = vadd.f32 %v2312, %v2354
      %v2399 = vadd.f32 %v2313, %v2342
      %v2400 = vadd.f32 %v2314, %v2346
      %v2401 = vadd.f32 %v2315, %v2350
      %v2402 = vadd.f32 %v2316, %v2354
      %v2403 = vadd.f32 %v2317, %v2342
      %v2404 = vadd.f32 %v2318, %v2346
      %v2405 = vadd.f32 %v2319, %v2350
      %v2406 = vadd.f32 %v2320, %v2354
      %v2407 = vadd.f32 %v2321, %v2342
      %v2408 = vadd.f32 %v2322, %v2346
      %v2409 = vadd.f32 %v2323, %v2350
      %v2410 = vadd.f32 %v2324, %v2354
      %v2411 = vadd.f32 %v2325, %v2342
      %v2412 = vadd.f32 %v2326, %v2346
      %v2413 = vadd.f32 %v2327, %v2350
      %v2414 = vadd.f32 %v2328, %v2354
      %v2415 = vadd.f32 %v2329, %v2342
      %v2416 = vadd.f32 %v2330, %v2346
      %v2417 = vadd.f32 %v2331, %v2350
      %v2418 = vadd.f32 %v2332, %v2354
      %v2419 = vadd.f32 %v2333, %v2342
      %v2420 = vadd.f32 %v2334, %v2346
      %v2421 = vadd.f32 %v2335, %v2350
      %v2422 = vadd.f32 %v2336, %v2354
      %v2423 = vmax.f32 %v2359, 0.0
      %v2424 = vmax.f32 %v2360, 0.0
      %v2425 = vmax.f32 %v2361, 0.0
      %v2426 = vmax.f32 %v2362, 0.0
      %v2427 = vmax.f32 %v2363, 0.0
      %v2428 = vmax.f32 %v2364, 0.0
      %v2429 = vmax.f32 %v2365, 0.0
      %v2430 = vmax.f32 %v2366, 0.0
      %v2431 = vmax.f32 %v2367, 0.0
      %v2432 = vmax.f32 %v2368, 0.0
      %v2433 = vmax.f32 %v2369, 0.0
      %v2434 = vmax.f32 %v2370, 0.0
      %v2435 = vmax.f32 %v2371, 0.0
      %v2436 = vmax.f32 %v2372, 0.0
      %v2437 = vmax.f32 %v2373, 0.0
      %v2438 = vmax.f32 %v2374, 0.0
      %v2439 = vmax.f32 %v2375, 0.0
      %v2440 = vmax.f32 %v2376, 0.0
      %v2441 = vmax.f32 %v2377, 0.0
      %v2442 = vmax.f32 %v2378, 0.0
      %v2443 = vmax.f32 %v2379, 0.0
      %v2444 = vmax.f32 %v2380, 0.0
      %v2445 = vmax.f32 %v2381, 0.0
      %v2446 = vmax.f32 %v2382, 0.0
      %v2447 = vmax.f32 %v2383, 0.0
      %v2448 = vmax.f32 %v2384, 0.0
      %v2449 = vmax.f32 %v2385, 0.0
      %v2450 = vmax.f32 %v2386, 0.0
      %v2451 = vmax.f32 %v2387, 0.0
      %v2452 = vmax.f32 %v2388, 0.0
      %v2453 = vmax.f32 %v2389, 0.0
      %v2454 = vmax.f32 %v2390, 0.0
      %v2455 = vmax.f32 %v2391, 0.0
      %v2456 = vmax.f32 %v2392, 0.0
      %v2457 = vmax.f32 %v2393, 0.0
      %v2458 = vmax.f32 %v2394, 0.0
      %v2459 = vmax.f32 %v2395, 0.0
      %v2460 = vmax.f32 %v2396, 0.0
      %v2461 = vmax.f32 %v2397, 0.0
      %v2462 = vmax.f32 %v2398, 0.0
      %v2463 = vmax.f32 %v2399, 0.0
      %v2464 = vmax.f32 %v2400, 0.0
      %v2465 = vmax.f32 %v2401, 0.0
      %v2466 = vmax.f32 %v2402, 0.0
      %v2467 = vmax.f32 %v2403, 0.0
      %v2468 = vmax.f32 %v2404, 0.0
      %v2469 = vmax.f32 %v2405, 0.0
      %v2470 = vmax.f32 %v2406, 0.0
      %v2471 = vmax.f32 %v2407, 0.0
      %v2472 = vmax.f32 %v2408, 0.0
      %v2473 = vmax.f32 %v2409, 0.0
      %v2474 = vmax.f32 %v2410, 0.0
      %v2475 = vmax.f32 %v2411, 0.0
      %v2476 = vmax.f32 %v2412, 0.0
      %v2477 = vmax.f32 %v2413, 0.0
      %v2478 = vmax.f32 %v2414, 0.0
      %v2479 = vmax.f32 %v2415, 0.0
      %v2480 = vmax.f32 %v2416, 0.0
      %v2481 = vmax.f32 %v2417, 0.0
      %v2482 = vmax.f32 %v2418, 0.0
      %v2483 = vmax.f32 %v2419, 0.0
      %v2484 = vmax.f32 %v2420, 0.0
      %v2485 = vmax.f32 %v2421, 0.0
      %v2486 = vmax.f32 %v2422, 0.0
      %v2487 = vld [vmem:[%s8] sm:$0xf]
      %v2488 = vld [vmem:[%s8 + $0x4] sm:$0xf]
      %v2489 = vld [vmem:[%s8 + $0x8] sm:$0xf]
      %v2490 = vld [vmem:[%s8 + $0xc] sm:$0xf]
      %v2491 = vld [vmem:[%s8 + $0x10] sm:$0xf]
      %v2492 = vld [vmem:[%s8 + $0x14] sm:$0xf]
      %v2493 = vld [vmem:[%s8 + $0x18] sm:$0xf]
      %v2494 = vld [vmem:[%s8 + $0x1c] sm:$0xf]
      %v2495 = vld [vmem:[%s8 + $0x20] sm:$0xf]
      %v2496 = vld [vmem:[%s8 + $0x24] sm:$0xf]
      %v2497 = vld [vmem:[%s8 + $0x28] sm:$0xf]
      %v2498 = vld [vmem:[%s8 + $0x2c] sm:$0xf]
      %v2499 = vld [vmem:[%s8 + $0x30] sm:$0xf]
      %v2500 = vld [vmem:[%s8 + $0x34] sm:$0xf]
      %v2501 = vld [vmem:[%s8 + $0x38] sm:$0xf]
      %v2502 = vld [vmem:[%s8 + $0x3c] sm:$0xf]
      %v2503 = vld [vmem:[%s8 + $0x40] sm:$0xf]
      %v2504 = vld [vmem:[%s8 + $0x44] sm:$0xf]
      %v2505 = vld [vmem:[%s8 + $0x48] sm:$0xf]
      %v2506 = vld [vmem:[%s8 + $0x4c] sm:$0xf]
      %v2507 = vld [vmem:[%s8 + $0x50] sm:$0xf]
      %v2508 = vld [vmem:[%s8 + $0x54] sm:$0xf]
      %v2509 = vld [vmem:[%s8 + $0x58] sm:$0xf]
      %v2510 = vld [vmem:[%s8 + $0x5c] sm:$0xf]
      %v2511 = vld [vmem:[%s8 + $0x60] sm:$0xf]
      %v2512 = vld [vmem:[%s8 + $0x64] sm:$0xf]
      %v2513 = vld [vmem:[%s8 + $0x68] sm:$0xf]
      %v2514 = vld [vmem:[%s8 + $0x6c] sm:$0xf]
      %v2515 = vld [vmem:[%s8 + $0x70] sm:$0xf]
      %v2516 = vld [vmem:[%s8 + $0x74] sm:$0xf]
      %v2517 = vld [vmem:[%s8 + $0x78] sm:$0xf]
      %v2518 = vld [vmem:[%s8 + $0x7c] sm:$0xf]
      %v2519 = vld [vmem:[%s8 + $0x80] sm:$0xf]
      %v2520 = vld [vmem:[%s8 + $0x84] sm:$0xf]
      %v2521 = vld [vmem:[%s8 + $0x88] sm:$0xf]
      %v2522 = vld [vmem:[%s8 + $0x8c] sm:$0xf]
      %v2523 = vld [vmem:[%s8 + $0x90] sm:$0xf]
      %v2524 = vld [vmem:[%s8 + $0x94] sm:$0xf]
      %v2525 = vld [vmem:[%s8 + $0x98] sm:$0xf]
      %v2526 = vld [vmem:[%s8 + $0x9c] sm:$0xf]
      %v2527 = vld [vmem:[%s8 + $0xa0] sm:$0xf]
      %v2528 = vld [vmem:[%s8 + $0xa4] sm:$0xf]
      %v2529 = vld [vmem:[%s8 + $0xa8] sm:$0xf]
      %v2530 = vld [vmem:[%s8 + $0xac] sm:$0xf]
      %v2531 = vld [vmem:[%s8 + $0xb0] sm:$0xf]
      %v2532 = vld [vmem:[%s8 + $0xb4] sm:$0xf]
      %v2533 = vld [vmem:[%s8 + $0xb8] sm:$0xf]
      %v2534 = vld [vmem:[%s8 + $0xbc] sm:$0xf]
      %v2535 = vld [vmem:[%s8 + $0xc0] sm:$0xf]
      %v2536 = vld [vmem:[%s8 + $0xc4] sm:$0xf]
      %v2537 = vld [vmem:[%s8 + $0xc8] sm:$0xf]
      %v2538 = vld [vmem:[%s8 + $0xcc] sm:$0xf]
      %v2539 = vld [vmem:[%s8 + $0xd0] sm:$0xf]
      %v2540 = vld [vmem:[%s8 + $0xd4] sm:$0xf]
      %v2541 = vld [vmem:[%s8 + $0xd8] sm:$0xf]
      %v2542 = vld [vmem:[%s8 + $0xdc] sm:$0xf]
      %v2543 = vld [vmem:[%s8 + $0xe0] sm:$0xf]
      %v2544 = vld [vmem:[%s8 + $0xe4] sm:$0xf]
      %v2545 = vld [vmem:[%s8 + $0xe8] sm:$0xf]
      %v2546 = vld [vmem:[%s8 + $0xec] sm:$0xf]
      %v2547 = vld [vmem:[%s8 + $0xf0] sm:$0xf]
      %v2548 = vld [vmem:[%s8 + $0xf4] sm:$0xf]
      %v2549 = vld [vmem:[%s8 + $0xf8] sm:$0xf]
      %v2550 = vld [vmem:[%s8 + $0xfc] sm:$0xf]
      %v2551 = vpack.c.bf16 %v2427, %v2423
      %v2552 = vpack.c.bf16 %v2428, %v2424
      %v2553 = vpack.c.bf16 %v2429, %v2425
      %v2554 = vpack.c.bf16 %v2430, %v2426
      %v2555 = vpack.c.bf16 %v2435, %v2431
      %v2556 = vpack.c.bf16 %v2436, %v2432
      %v2557 = vpack.c.bf16 %v2437, %v2433
      %v2558 = vpack.c.bf16 %v2438, %v2434
      %v2559 = vpack.c.bf16 %v2443, %v2439
      %v2560 = vpack.c.bf16 %v2444, %v2440
      %v2561 = vpack.c.bf16 %v2445, %v2441
      %v2562 = vpack.c.bf16 %v2446, %v2442
      %v2563 = vpack.c.bf16 %v2451, %v2447
      %v2564 = vpack.c.bf16 %v2452, %v2448
      %v2565 = vpack.c.bf16 %v2453, %v2449
      %v2566 = vpack.c.bf16 %v2454, %v2450
      %v2567 = vpack.c.bf16 %v2459, %v2455
      %v2568 = vpack.c.bf16 %v2460, %v2456
      %v2569 = vpack.c.bf16 %v2461, %v2457
      %v2570 = vpack.c.bf16 %v2462, %v2458
      %v2571 = vpack.c.bf16 %v2467, %v2463
      %v2572 = vpack.c.bf16 %v2468, %v2464
      %v2573 = vpack.c.bf16 %v2469, %v2465
      %v2574 = vpack.c.bf16 %v2470, %v2466
      %v2575 = vpack.c.bf16 %v2475, %v2471
      %v2576 = vpack.c.bf16 %v2476, %v2472
      %v2577 = vpack.c.bf16 %v2477, %v2473
      %v2578 = vpack.c.bf16 %v2478, %v2474
      %v2579 = vpack.c.bf16 %v2483, %v2479
      %v2580 = vpack.c.bf16 %v2484, %v2480
      %v2581 = vpack.c.bf16 %v2485, %v2481
      %v2582 = vpack.c.bf16 %v2486, %v2482
      %v2583 = vld [vmem:[%s9] sm:$0x1]
      %v2585 = vlaneseq
      %v2586 = vshrl.u32 %v2585, 7
      %v2587 = vsub.s32 0, %v2586
      %v2588 = vrot.slane %v2583, %v2587
      %v2654 = vunpack.c.l.b16 %v2487
      %v2655 = vunpack.c.l.b16 %v2488
      %v2656 = vunpack.c.l.b16 %v2489
      %v2657 = vunpack.c.l.b16 %v2490
      %v2658 = vunpack.c.l.b16 %v2491
      %v2659 = vunpack.c.l.b16 %v2492
      %v2660 = vunpack.c.l.b16 %v2493
      %v2661 = vunpack.c.l.b16 %v2494
      %v2662 = vunpack.c.l.b16 %v2495
      %v2663 = vunpack.c.l.b16 %v2496
      %v2664 = vunpack.c.l.b16 %v2497
      %v2665 = vunpack.c.l.b16 %v2498
      %v2666 = vunpack.c.l.b16 %v2499
      %v2667 = vunpack.c.l.b16 %v2500
      %v2668 = vunpack.c.l.b16 %v2501
      %v2669 = vunpack.c.l.b16 %v2502
      %v2670 = vunpack.c.l.b16 %v2503
      %v2671 = vunpack.c.l.b16 %v2504
      %v2672 = vunpack.c.l.b16 %v2505
      %v2673 = vunpack.c.l.b16 %v2506
      %v2674 = vunpack.c.l.b16 %v2507
      %v2675 = vunpack.c.l.b16 %v2508
      %v2676 = vunpack.c.l.b16 %v2509
      %v2677 = vunpack.c.l.b16 %v2510
      %v2678 = vunpack.c.l.b16 %v2511
      %v2679 = vunpack.c.l.b16 %v2512
      %v2680 = vunpack.c.l.b16 %v2513
      %v2681 = vunpack.c.l.b16 %v2514
      %v2682 = vunpack.c.l.b16 %v2515
      %v2683 = vunpack.c.l.b16 %v2516
      %v2684 = vunpack.c.l.b16 %v2517
      %v2685 = vunpack.c.l.b16 %v2518
      %v2686 = vunpack.c.l.b16 %v2519
      %v2687 = vunpack.c.l.b16 %v2520
      %v2688 = vunpack.c.l.b16 %v2521
      %v2689 = vunpack.c.l.b16 %v2522
      %v2690 = vunpack.c.l.b16 %v2523
      %v2691 = vunpack.c.l.b16 %v2524
      %v2692 = vunpack.c.l.b16 %v2525
      %v2693 = vunpack.c.l.b16 %v2526
      %v2694 = vunpack.c.l.b16 %v2527
      %v2695 = vunpack.c.l.b16 %v2528
      %v2696 = vunpack.c.l.b16 %v2529
      %v2697 = vunpack.c.l.b16 %v2530
      %v2698 = vunpack.c.l.b16 %v2531
      %v2699 = vunpack.c.l.b16 %v2532
      %v2700 = vunpack.c.l.b16 %v2533
      %v2701 = vunpack.c.l.b16 %v2534
      %v2702 = vunpack.c.l.b16 %v2535
      %v2703 = vunpack.c.l.b16 %v2536
      %v2704 = vunpack.c.l.b16 %v2537
      %v2705 = vunpack.c.l.b16 %v2538
      %v2706 = vunpack.c.l.b16 %v2539
      %v2707 = vunpack.c.l.b16 %v2540
      %v2708 = vunpack.c.l.b16 %v2541
      %v2709 = vunpack.c.l.b16 %v2542
      %v2710 = vunpack.c.l.b16 %v2543
      %v2711 = vunpack.c.l.b16 %v2544
      %v2712 = vunpack.c.l.b16 %v2545
      %v2713 = vunpack.c.l.b16 %v2546
      %v2714 = vunpack.c.l.b16 %v2547
      %v2715 = vunpack.c.l.b16 %v2548
      %v2716 = vunpack.c.l.b16 %v2549
      %v2717 = vunpack.c.l.b16 %v2550
      %v2718 = vpack.c.b16 %v2655, %v2654
      %v2719 = vpack.c.b16 %v2657, %v2656
      %v2720 = vpack.c.b16 %v2659, %v2658
      %v2721 = vpack.c.b16 %v2661, %v2660
      %v2722 = vpack.c.b16 %v2663, %v2662
      %v2723 = vpack.c.b16 %v2665, %v2664
      %v2724 = vpack.c.b16 %v2667, %v2666
      %v2725 = vpack.c.b16 %v2669, %v2668
      %v2726 = vpack.c.b16 %v2671, %v2670
      %v2727 = vpack.c.b16 %v2673, %v2672
      %v2728 = vpack.c.b16 %v2675, %v2674
      %v2729 = vpack.c.b16 %v2677, %v2676
      %v2730 = vpack.c.b16 %v2679, %v2678
      %v2731 = vpack.c.b16 %v2681, %v2680
      %v2732 = vpack.c.b16 %v2683, %v2682
      %v2733 = vpack.c.b16 %v2685, %v2684
      %v2734 = vpack.c.b16 %v2687, %v2686
      %v2735 = vpack.c.b16 %v2689, %v2688
      %v2736 = vpack.c.b16 %v2691, %v2690
      %v2737 = vpack.c.b16 %v2693, %v2692
      %v2738 = vpack.c.b16 %v2695, %v2694
      %v2739 = vpack.c.b16 %v2697, %v2696
      %v2740 = vpack.c.b16 %v2699, %v2698
      %v2741 = vpack.c.b16 %v2701, %v2700
      %v2742 = vpack.c.b16 %v2703, %v2702
      %v2743 = vpack.c.b16 %v2705, %v2704
      %v2744 = vpack.c.b16 %v2707, %v2706
      %v2745 = vpack.c.b16 %v2709, %v2708
      %v2746 = vpack.c.b16 %v2711, %v2710
      %v2747 = vpack.c.b16 %v2713, %v2712
      %v2748 = vpack.c.b16 %v2715, %v2714
      %v2749 = vpack.c.b16 %v2717, %v2716
      %2782 = vmatprep.subr.bf16.mxu0 0
      %2783 = vmatpush1.bf16.msra.mxu0 %v2725
      %2784 = vmatprep.subr.bf16.mxu0 0
      %2785 = vmatpush1.bf16.msra.mxu0 %v2724
      %2786 = vmatprep.subr.bf16.mxu0 0
      %2787 = vmatpush1.bf16.msra.mxu0 %v2723
      %2788 = vmatprep.subr.bf16.mxu0 0
      %2789 = vmatpush1.bf16.msra.mxu0 %v2722
      %2790 = vmatprep.subr.bf16.mxu0 0
      %2791 = vmatpush1.bf16.msra.mxu0 %v2721
      %2792 = vmatprep.subr.bf16.mxu0 0
      %2793 = vmatpush1.bf16.msra.mxu0 %v2720
      %2794 = vmatprep.subr.bf16.mxu0 0
      %2795 = vmatpush1.bf16.msra.mxu0 %v2719
      %2796 = vmatprep.subr.bf16.mxu0 0
      %2797 = vmatpush1.bf16.msra.mxu0 %v2718
      %2798 = vmatprep.subr.bf16.mxu0 0
      %2799 = vmatpush2.bf16.msra.mxu0 %v2733
      %2800 = vmatprep.subr.bf16.mxu0 0
      %2801 = vmatpush2.bf16.msra.mxu0 %v2732
      %2802 = vmatprep.subr.bf16.mxu0 0
      %2803 = vmatpush2.bf16.msra.mxu0 %v2731
      %2804 = vmatprep.subr.bf16.mxu0 0
      %2805 = vmatpush2.bf16.msra.mxu0 %v2730
      %2806 = vmatprep.subr.bf16.mxu0 0
      %2807 = vmatpush2.bf16.msra.mxu0 %v2729
      %2808 = vmatprep.subr.bf16.mxu0 0
      %2809 = vmatpush2.bf16.msra.mxu0 %v2728
      %2810 = vmatprep.subr.bf16.mxu0 0
      %2811 = vmatpush2.bf16.msra.mxu0 %v2727
      %2812 = vmatprep.subr.bf16.mxu0 0
      %2813 = vmatpush2.bf16.msra.mxu0 %v2726
      %2814 = vmatprep.mubr.bf16.mxu0 %v2552
      %2815 = vmatmul.mubr.bf16.gmra.mxu0 %v2551
      %v2816 = vpop.f32.mrf.mxu0
      %v2817 = vadd.f32 %v2588, %v2816
      %v2818 = vpop.f32.mrf.mxu0
      %v2819 = vpop.f32.mrf.mxu0
      %v2820 = vadd.f32 %v2588, %v2819
      %v2821 = vpop.f32.mrf.mxu0
      %2822 = vmatprep.mubr.bf16.mxu0 %v2556
      %2823 = vmatmul.mubr.bf16.gmra.mxu0 %v2555
      %v2824 = vpop.f32.mrf.mxu0
      %v2825 = vadd.f32 %v2588, %v2824
      %v2826 = vpop.f32.mrf.mxu0
      %v2827 = vpop.f32.mrf.mxu0
      %v2828 = vadd.f32 %v2588, %v2827
      %v2829 = vpop.f32.mrf.mxu0
      %2830 = vmatprep.mubr.bf16.mxu0 %v2560
      %2831 = vmatmul.mubr.bf16.gmra.mxu0 %v2559
      %v2832 = vpop.f32.mrf.mxu0
      %v2833 = vadd.f32 %v2588, %v2832
      %v2834 = vpop.f32.mrf.mxu0
      %v2835 = vpop.f32.mrf.mxu0
      %v2836 = vadd.f32 %v2588, %v2835
      %v2837 = vpop.f32.mrf.mxu0
      %2838 = vmatprep.mubr.bf16.mxu0 %v2564
      %2839 = vmatmul.mubr.bf16.gmra.mxu0 %v2563
      %v2840 = vpop.f32.mrf.mxu0
      %v2841 = vadd.f32 %v2588, %v2840
      %v2842 = vpop.f32.mrf.mxu0
      %v2843 = vpop.f32.mrf.mxu0
      %v2844 = vadd.f32 %v2588, %v2843
      %v2845 = vpop.f32.mrf.mxu0
      %2846 = vmatprep.mubr.bf16.mxu0 %v2568
      %2847 = vmatmul.mubr.bf16.gmra.mxu0 %v2567
      %v2848 = vpop.f32.mrf.mxu0
      %v2849 = vadd.f32 %v2588, %v2848
      %v2850 = vpop.f32.mrf.mxu0
      %v2851 = vpop.f32.mrf.mxu0
      %v2852 = vadd.f32 %v2588, %v2851
      %v2853 = vpop.f32.mrf.mxu0
      %2854 = vmatprep.mubr.bf16.mxu0 %v2572
      %2855 = vmatmul.mubr.bf16.gmra.mxu0 %v2571
      %v2856 = vpop.f32.mrf.mxu0
      %v2857 = vadd.f32 %v2588, %v2856
      %v2858 = vpop.f32.mrf.mxu0
      %v2859 = vpop.f32.mrf.mxu0
      %v2860 = vadd.f32 %v2588, %v2859
      %v2861 = vpop.f32.mrf.mxu0
      %2862 = vmatprep.mubr.bf16.mxu0 %v2576
      %2863 = vmatmul.mubr.bf16.gmra.mxu0 %v2575
      %v2864 = vpop.f32.mrf.mxu0
      %v2865 = vadd.f32 %v2588, %v2864
      %v2866 = vpop.f32.mrf.mxu0
      %v2867 = vpop.f32.mrf.mxu0
      %v2868 = vadd.f32 %v2588, %v2867
      %v2869 = vpop.f32.mrf.mxu0
      %2870 = vmatprep.mubr.bf16.mxu0 %v2580
      %2871 = vmatmul.mubr.bf16.gmra.mxu0 %v2579
      %v2872 = vpop.f32.mrf.mxu0
      %v2873 = vadd.f32 %v2588, %v2872
      %v2874 = vpop.f32.mrf.mxu0
      %v2875 = vpop.f32.mrf.mxu0
      %v2876 = vadd.f32 %v2588, %v2875
      %v2877 = vpop.f32.mrf.mxu0
      %2878 = vdwg.mxu0
      %2879 = vmatprep.subr.bf16.mxu0 0
      %2880 = vmatpush1.bf16.msra.mxu0 %v2741
      %2881 = vmatprep.subr.bf16.mxu0 0
      %2882 = vmatpush1.bf16.msra.mxu0 %v2740
      %2883 = vmatprep.subr.bf16.mxu0 0
      %2884 = vmatpush1.bf16.msra.mxu0 %v2739
      %2885 = vmatprep.subr.bf16.mxu0 0
      %2886 = vmatpush1.bf16.msra.mxu0 %v2738
      %2887 = vmatprep.subr.bf16.mxu0 0
      %2888 = vmatpush1.bf16.msra.mxu0 %v2737
      %2889 = vmatprep.subr.bf16.mxu0 0
      %2890 = vmatpush1.bf16.msra.mxu0 %v2736
      %2891 = vmatprep.subr.bf16.mxu0 0
      %2892 = vmatpush1.bf16.msra.mxu0 %v2735
      %2893 = vmatprep.subr.bf16.mxu0 0
      %2894 = vmatpush1.bf16.msra.mxu0 %v2734
      %2895 = vmatprep.subr.bf16.mxu0 0
      %2896 = vmatpush2.bf16.msra.mxu0 %v2749
      %2897 = vmatprep.subr.bf16.mxu0 0
      %2898 = vmatpush2.bf16.msra.mxu0 %v2748
      %2899 = vmatprep.subr.bf16.mxu0 0
      %2900 = vmatpush2.bf16.msra.mxu0 %v2747
      %2901 = vmatprep.subr.bf16.mxu0 0
      %2902 = vmatpush2.bf16.msra.mxu0 %v2746
      %2903 = vmatprep.subr.bf16.mxu0 0
      %2904 = vmatpush2.bf16.msra.mxu0 %v2745
      %2905 = vmatprep.subr.bf16.mxu0 0
      %2906 = vmatpush2.bf16.msra.mxu0 %v2744
      %2907 = vmatprep.subr.bf16.mxu0 0
      %2908 = vmatpush2.bf16.msra.mxu0 %v2743
      %2909 = vmatprep.subr.bf16.mxu0 0
      %2910 = vmatpush2.bf16.msra.mxu0 %v2742
      %2911 = vmatprep.mubr.bf16.mxu0 %v2554
      %2912 = vmatmul.mubr.bf16.gmra.mxu0 %v2553
      %v2913 = vpop.f32.mrf.mxu0
      %v2914 = vadd.f32 %v2817, %v2913
      %v2915 = vpop.f32.mrf.mxu0
      %v2916 = vpop.f32.mrf.mxu0
      %v2917 = vadd.f32 %v2820, %v2916
      %v2918 = vpop.f32.mrf.mxu0
      %2919 = vmatprep.mubr.bf16.mxu0 %v2558
      %2920 = vmatmul.mubr.bf16.gmra.mxu0 %v2557
      %v2921 = vpop.f32.mrf.mxu0
      %v2922 = vadd.f32 %v2825, %v2921
      %v2923 = vpop.f32.mrf.mxu0
      %v2924 = vpop.f32.mrf.mxu0
      %v2925 = vadd.f32 %v2828, %v2924
      %v2926 = vpop.f32.mrf.mxu0
      %2927 = vmatprep.mubr.bf16.mxu0 %v2562
      %2928 = vmatmul.mubr.bf16.gmra.mxu0 %v2561
      %v2929 = vpop.f32.mrf.mxu0
      %v2930 = vadd.f32 %v2833, %v2929
      %v2931 = vpop.f32.mrf.mxu0
      %v2932 = vpop.f32.mrf.mxu0
      %v2933 = vadd.f32 %v2836, %v2932
      %v2934 = vpop.f32.mrf.mxu0
      %2935 = vmatprep.mubr.bf16.mxu0 %v2566
      %2936 = vmatmul.mubr.bf16.gmra.mxu0 %v2565
      %v2937 = vpop.f32.mrf.mxu0
      %v2938 = vadd.f32 %v2841, %v2937
      %v2939 = vpop.f32.mrf.mxu0
      %v2940 = vpop.f32.mrf.mxu0
      %v2941 = vadd.f32 %v2844, %v2940
      %v2942 = vpop.f32.mrf.mxu0
      %2943 = vmatprep.mubr.bf16.mxu0 %v2570
      %2944 = vmatmul.mubr.bf16.gmra.mxu0 %v2569
      %v2945 = vpop.f32.mrf.mxu0
      %v2946 = vadd.f32 %v2849, %v2945
      %v2947 = vpop.f32.mrf.mxu0
      %v2948 = vpop.f32.mrf.mxu0
      %v2949 = vadd.f32 %v2852, %v2948
      %v2950 = vpop.f32.mrf.mxu0
      %2951 = vmatprep.mubr.bf16.mxu0 %v2574
      %2952 = vmatmul.mubr.bf16.gmra.mxu0 %v2573
      %v2953 = vpop.f32.mrf.mxu0
      %v2954 = vadd.f32 %v2857, %v2953
      %v2955 = vpop.f32.mrf.mxu0
      %v2956 = vpop.f32.mrf.mxu0
      %v2957 = vadd.f32 %v2860, %v2956
      %v2958 = vpop.f32.mrf.mxu0
      %2959 = vmatprep.mubr.bf16.mxu0 %v2578
      %2960 = vmatmul.mubr.bf16.gmra.mxu0 %v2577
      %v2961 = vpop.f32.mrf.mxu0
      %v2962 = vadd.f32 %v2865, %v2961
      %v2963 = vpop.f32.mrf.mxu0
      %v2964 = vpop.f32.mrf.mxu0
      %v2965 = vadd.f32 %v2868, %v2964
      %v2966 = vpop.f32.mrf.mxu0
      %2967 = vmatprep.mubr.bf16.mxu0 %v2582
      %2968 = vmatmul.mubr.bf16.gmra.mxu0 %v2581
      %v2969 = vpop.f32.mrf.mxu0
      %v2970 = vadd.f32 %v2873, %v2969
      %v2971 = vpop.f32.mrf.mxu0
      %v2972 = vpop.f32.mrf.mxu0
      %v2973 = vadd.f32 %v2876, %v2972
      %v2974 = vpop.f32.mrf.mxu0
      %2975 = vdwg.mxu0
      %vm2976 = vcmask 261120
      %v2977 = vsel %vm2976, %v2914, -inf
      %v2978 = vsel %vm2976, %v2917, -inf
      %v2979 = vmax.f32 %v2977, %v2978
      %v2980 = vrot.slane %v2979, 4
      %v2981 = vmax.f32 %v2979, %v2980
      %v2982 = vrot.slane %v2981, 2
      %v2983 = vmax.f32 %v2981, %v2982
      %v2984 = vrot.slane %v2983, 1
      %v2985 = vmax.f32 %v2983, %v2984
      %v2986 = vsel %vm2976, %v2922, -inf
      %v2987 = vsel %vm2976, %v2925, -inf
      %v2988 = vmax.f32 %v2986, %v2987
      %v2989 = vrot.slane %v2988, 4
      %v2990 = vmax.f32 %v2988, %v2989
      %v2991 = vrot.slane %v2990, 2
      %v2992 = vmax.f32 %v2990, %v2991
      %v2993 = vrot.slane %v2992, 1
      %v2994 = vmax.f32 %v2992, %v2993
      %v2995 = vsel %vm2976, %v2930, -inf
      %v2996 = vsel %vm2976, %v2933, -inf
      %v2997 = vmax.f32 %v2995, %v2996
      %v2998 = vrot.slane %v2997, 4
      %v2999 = vmax.f32 %v2997, %v2998
      %v3000 = vrot.slane %v2999, 2
      %v3001 = vmax.f32 %v2999, %v3000
      %v3002 = vrot.slane %v3001, 1
      %v3003 = vmax.f32 %v3001, %v3002
      %v3004 = vsel %vm2976, %v2938, -inf
      %v3005 = vsel %vm2976, %v2941, -inf
      %v3006 = vmax.f32 %v3004, %v3005
      %v3007 = vrot.slane %v3006, 4
      %v3008 = vmax.f32 %v3006, %v3007
      %v3009 = vrot.slane %v3008, 2
      %v3010 = vmax.f32 %v3008, %v3009
      %v3011 = vrot.slane %v3010, 1
      %v3012 = vmax.f32 %v3010, %v3011
      %v3013 = vsel %vm2976, %v2946, -inf
      %v3014 = vsel %vm2976, %v2949, -inf
      %v3015 = vmax.f32 %v3013, %v3014
      %v3016 = vrot.slane %v3015, 4
      %v3017 = vmax.f32 %v3015, %v3016
      %v3018 = vrot.slane %v3017, 2
      %v3019 = vmax.f32 %v3017, %v3018
      %v3020 = vrot.slane %v3019, 1
      %v3021 = vmax.f32 %v3019, %v3020
      %v3022 = vsel %vm2976, %v2954, -inf
      %v3023 = vsel %vm2976, %v2957, -inf
      %v3024 = vmax.f32 %v3022, %v3023
      %v3025 = vrot.slane %v3024, 4
      %v3026 = vmax.f32 %v3024, %v3025
      %v3027 = vrot.slane %v3026, 2
      %v3028 = vmax.f32 %v3026, %v3027
      %v3029 = vrot.slane %v3028, 1
      %v3030 = vmax.f32 %v3028, %v3029
      %v3031 = vsel %vm2976, %v2962, -inf
      %v3032 = vsel %vm2976, %v2965, -inf
      %v3033 = vmax.f32 %v3031, %v3032
      %v3034 = vrot.slane %v3033, 4
      %v3035 = vmax.f32 %v3033, %v3034
      %v3036 = vrot.slane %v3035, 2
      %v3037 = vmax.f32 %v3035, %v3036
      %v3038 = vrot.slane %v3037, 1
      %v3039 = vmax.f32 %v3037, %v3038
      %v3040 = vsel %vm2976, %v2970, -inf
      %v3041 = vsel %vm2976, %v2973, -inf
      %v3042 = vmax.f32 %v3040, %v3041
      %v3043 = vrot.slane %v3042, 4
      %v3044 = vmax.f32 %v3042, %v3043
      %v3045 = vrot.slane %v3044, 2
      %v3046 = vmax.f32 %v3044, %v3045
      %v3047 = vrot.slane %v3046, 1
      %v3048 = vmax.f32 %v3046, %v3047
      %v3057 = vsel %vm988, %v2994, %v2985
      %v3058 = vsel %vm990, %v3003, %v3057
      %v3059 = vsel %vm992, %v3012, %v3058
      %v3060 = vsel %vm994, %v3021, %v3059
      %v3061 = vsel %vm996, %v3030, %v3060
      %v3062 = vsel %vm998, %v3039, %v3061
      %v3063 = vsel %vm1000, %v3048, %v3062
      %3065 = vst.msk [vmem:[%s359] sm:$0xff] %vm2976, %v3063
      %p3066 = scmp.lt.s32.totalorder %s21, 1
      %s3067 = scalar_select %p3066, %s21, 1
      %s3068 = smul.addr %s3067, 8
      %s3069 = scalar_lea.vmem %s10, %s3068
      // Predicated region
      $region61: #{forward.4} parent=59 // pred_check
        %p3070 = pneg %p254
      $region62: #{forward.4} parent=59 // pred_check_branch
        %3072 = sbr.rel (%p3070) target = $region64
      $region63: #{forward.4} parent=59 // pred_region
        _
      $region64: #{forward.4} parent=59 // pred_fallthru
        _
    $region60: #{forward.4} parent=5 // pred_fallthru
      _
    %p3073 = scmp.le.s32.totalorder 2, %s16
    // Predicated region
    $region65: #{forward.4} parent=5 // pred_check
      %p3074 = pneg %p3073
    $region66: #{forward.4} parent=5 // pred_check_branch
      %3076 = sbr.rel (%p3074) target = $region68
    $region67: #{forward.4} parent=5 // pred_region
      %s3077 = ssub.s32 %s16, 2
      // Predicated region
      $region69: #{forward.4} parent=67 // pred_check
        %p3078 = pneg %p260
      $region70: #{forward.4} parent=67 // pred_check_branch
        %3080 = sbr.rel (%p3078) target = $region72
      $region71: #{forward.4} parent=67 // pred_region
        %p3081 = scmp.lt.s32.totalorder %s22, 1
        %s3082 = scalar_select %p3081, %s22, 1
        %s3083 = smul.addr %s3082, 8
        %s3084 = scalar_lea.vmem %s10, %s3083
      $region72: #{forward.4} parent=67 // pred_fallthru
        _
    $region68: #{forward.4} parent=5 // pred_fallthru
      _
  $region6: #{forward.4} parent=0 // loop_footer
    %s20 = sadd.s32 1, %s16
  $region7: #{forward.4} parent=0 // loop_footer_branch
    %15 = sbr.rel target = $region3
  $region8: #{forward.4} parent=0 // loop_exit
    _

// kernel: forward.6
$region0: #{forward.6}
  #allocation0 [shape = 'u32[]', space=smem, size = 0x4, offset = 0x4, fixed_abs, tag = 'smem constant byte address 0x4 - core index']
  #allocation1 [shape = 'u32[144,128]{1,0:T(1,128)}', space=vmem, size = 0x12000, scoped, tag = 'internal scratch']
  %s0 = inlined_call_operand.vmem [shape: f32[2,16,32], index: 0, kind: input, shape index: {}]
  %s1 = inlined_call_operand.vmem [shape: f32[2,16,32], index: 1, kind: input, shape index: {}]
  %s2 = inlined_call_operand.vmem [shape: f32[2,1,32], index: 2, kind: input, shape index: {}]
  %s3 = inlined_call_operand.vmem [shape: f32[2,1,32], index: 3, kind: input, shape index: {}]
  %s4 = inlined_call_operand.vmem [shape: bf16[2,32,96], index: 4, kind: input, shape index: {}]
  %s5 = inlined_call_operand.vmem [shape: bf16[2,32,32], index: 5, kind: input, shape index: {}]
  %s6 = inlined_call_operand.vmem [shape: f32[2,1,32], index: 6, kind: input, shape index: {}]
  %s7 = inlined_call_operand.vmem [shape: f32[2,1,32], index: 7, kind: input, shape index: {}]
  %s8 = inlined_call_operand.vmem [shape: f32[2,1,32], index: 8, kind: input, shape index: {}]
  %s9 = inlined_call_operand.vmem [shape: bf16[2,32,128], index: 9, kind: input, shape index: {}]
  %s10 = inlined_call_operand.vmem [shape: f32[2,1,128], index: 10, kind: input, shape index: {}]
  %s11 = inlined_call_operand.vmem [shape: bf16[2,128,32], index: 11, kind: input, shape index: {}]
  %s12 = inlined_call_operand.vmem [shape: f32[2,1,32], index: 12, kind: input, shape index: {}]
  %s13 = inlined_call_operand.vmem [shape: f32[2,16,32], index: 13, kind: output, shape index: {}]
  %s14 = sld [smem:[#allocation0]]
  $region89: #{forward.6} parent=0
    _
  %s16 = ssub.s32 1, %s14
  %s17 = scalar_select 0, %s16, %s14
  loop: start=0, step=1, limit=6
  $region2: #{forward.6} parent=0 // loop_pre_header
    _
  $region3: #{forward.6} parent=0 // loop_header
    %s19 = sphi 0, %s23
    %p20 = scmp.ge.s32.totalorder %s19, 6
    %s26 = sphi 0, %s38
    %s27 = sphi 0, %s34
    %s28 = sphi 0, %s26
    %s29 = sphi 0, %s27
    %s30 = sphi 0, %s28
    %s31 = sphi 0, %s29
    %s41 = sphi 0, %s43
    %s44 = sphi 0, %s41
    %s45 = sphi 0, %s44
    %s61 = sphi 0, %s45
    %s67 = sphi 0, %s69
    %s70 = sphi 0, %s67
    %s71 = sphi 0, %s70
    %s87 = sphi 0, %s71
    %s93 = sphi 0, %s95
    %s96 = sphi 0, %s93
    %s97 = sphi 0, %s96
    %s113 = sphi 0, %s97
    %s119 = sphi 0, %s121
    %s122 = sphi 0, %s119
    %s123 = sphi 0, %s122
    %s139 = sphi 0, %s123
    %s145 = sphi 0, %s147
    %s148 = sphi 0, %s145
    %s149 = sphi 0, %s148
    %s165 = sphi 0, %s149
    %s171 = sphi 0, %s173
    %s174 = sphi 0, %s171
    %s175 = sphi 0, %s174
    %s191 = sphi 0, %s175
    %s197 = sphi 0, %s199
    %s200 = sphi 0, %s197
    %s201 = sphi 0, %s200
    %s217 = sphi 0, %s201
    %s223 = sphi 0, %s225
    %s226 = sphi 0, %s223
    %s227 = sphi 0, %s226
    %s243 = sphi 0, %s227
    %s249 = sphi 0, %s251
    %s252 = sphi 0, %s249
    %s253 = sphi 0, %s252
    %s269 = sphi 0, %s253
    %s275 = sphi 0, %s277
    %s278 = sphi 0, %s275
    %s279 = sphi 0, %s278
    %s295 = sphi 0, %s279
    %s301 = sphi 0, %s303
    %s304 = sphi 0, %s301
    %s305 = sphi 0, %s304
    %s321 = sphi 0, %s305
    %s327 = sphi 0, %s329
    %s330 = sphi 0, %s327
    %s331 = sphi 0, %s330
    %s347 = sphi 0, %s331
    %s353 = sphi 0, %s355
    %s356 = sphi 0, %s353
    %s357 = sphi 0, %s356
    %s373 = sphi 0, %s357
    %s379 = sphi 0, %s381
    %s382 = sphi 0, %s379
    %s383 = sphi 0, %s382
    %s399 = sphi 0, %s383
  $region4: #{forward.6} parent=0 // loop_header_branch
    %22 = sbr.rel (%p20) target = $region8
  $region5: #{forward.6} parent=0 // loop_body
    %s24 = ssub.s32 %s19, 1
    %s25 = ssub.s32 %s19, 2
    %s32 = sadd.s32 1, %s27
    %p33 = scmp.ge.s32.totalorder %s32, 2
    %s34 = scalar_select %p33, 0, %s32
    %s35 = sadd.s32 1, %s26
    %s36 = scalar_select %p33, %s35, %s26
    %p37 = scmp.ge.s32.totalorder %s36, 2
    %s38 = scalar_select %p37, 0, %s36
    %s39 = ssub.s32 %s26, %s38
    %p40 = scmp.eq.s32.totalorder %s39, 0
    %s42 = sadd.s32 %s41, 1
    %s43 = scalar_select %p40, %s41, %s42
    %p46 = pneg %p40
    %p47 = scmp.eq.s32.totalorder %s19, 3
    %p48 = por %p46, %p47
    %p49 = scmp.ne.s32.totalorder %s41, %s44
    %p50 = scmp.eq.s32.totalorder %s19, 0
    %p51 = por %p49, %p50
    %p52 = scmp.ne.s32.totalorder %s41, %s44
    %p53 = scmp.eq.s32.totalorder %s24, 3
    %p54 = por %p52, %p53
    %p55 = scmp.ne.s32.totalorder %s44, %s45
    %p56 = scmp.eq.s32.totalorder %s24, 0
    %p57 = por %p55, %p56
    %p58 = scmp.ne.s32.totalorder %s44, %s45
    %p59 = scmp.eq.s32.totalorder %s25, 3
    %p60 = por %p58, %p59
    %p62 = scmp.ne.s32.totalorder %s45, %s61
    %p63 = scmp.eq.s32.totalorder %s25, 0
    %p64 = por %p62, %p63
    %s65 = ssub.s32 %s26, %s38
    %p66 = scmp.eq.s32.totalorder %s65, 0
    %s68 = sadd.s32 %s67, 1
    %s69 = scalar_select %p66, %s67, %s68
    %p72 = pneg %p66
    %p73 = scmp.eq.s32.totalorder %s19, 3
    %p74 = por %p72, %p73
    %p75 = scmp.ne.s32.totalorder %s67, %s70
    %p76 = scmp.eq.s32.totalorder %s19, 0
    %p77 = por %p75, %p76
    %p78 = scmp.ne.s32.totalorder %s67, %s70
    %p79 = scmp.eq.s32.totalorder %s24, 3
    %p80 = por %p78, %p79
    %p81 = scmp.ne.s32.totalorder %s70, %s71
    %p82 = scmp.eq.s32.totalorder %s24, 0
    %p83 = por %p81, %p82
    %p84 = scmp.ne.s32.totalorder %s70, %s71
    %p85 = scmp.eq.s32.totalorder %s25, 3
    %p86 = por %p84, %p85
    %p88 = scmp.ne.s32.totalorder %s71, %s87
    %p89 = scmp.eq.s32.totalorder %s25, 0
    %p90 = por %p88, %p89
    %s91 = ssub.s32 %s27, %s34
    %p92 = scmp.eq.s32.totalorder %s91, 0
    %s94 = sadd.s32 %s93, 1
    %s95 = scalar_select %p92, %s93, %s94
    %p98 = pneg %p92
    %p99 = scmp.eq.s32.totalorder %s19, 3
    %p100 = por %p98, %p99
    %p101 = scmp.ne.s32.totalorder %s93, %s96
    %p102 = scmp.eq.s32.totalorder %s19, 0
    %p103 = por %p101, %p102
    %p104 = scmp.ne.s32.totalorder %s93, %s96
    %p105 = scmp.eq.s32.totalorder %s24, 3
    %p106 = por %p104, %p105
    %p107 = scmp.ne.s32.totalorder %s96, %s97
    %p108 = scmp.eq.s32.totalorder %s24, 0
    %p109 = por %p107, %p108
    %p110 = scmp.ne.s32.totalorder %s96, %s97
    %p111 = scmp.eq.s32.totalorder %s25, 3
    %p112 = por %p110, %p111
    %p114 = scmp.ne.s32.totalorder %s97, %s113
    %p115 = scmp.eq.s32.totalorder %s25, 0
    %p116 = por %p114, %p115
    %s117 = ssub.s32 %s27, %s34
    %p118 = scmp.eq.s32.totalorder %s117, 0
    %s120 = sadd.s32 %s119, 1
    %s121 = scalar_select %p118, %s119, %s120
    %p124 = pneg %p118
    %p125 = scmp.eq.s32.totalorder %s19, 3
    %p126 = por %p124, %p125
    %p127 = scmp.ne.s32.totalorder %s119, %s122
    %p128 = scmp.eq.s32.totalorder %s19, 0
    %p129 = por %p127, %p128
    %p130 = scmp.ne.s32.totalorder %s119, %s122
    %p131 = scmp.eq.s32.totalorder %s24, 3
    %p132 = por %p130, %p131
    %p133 = scmp.ne.s32.totalorder %s122, %s123
    %p134 = scmp.eq.s32.totalorder %s24, 0
    %p135 = por %p133, %p134
    %p136 = scmp.ne.s32.totalorder %s122, %s123
    %p137 = scmp.eq.s32.totalorder %s25, 3
    %p138 = por %p136, %p137
    %p140 = scmp.ne.s32.totalorder %s123, %s139
    %p141 = scmp.eq.s32.totalorder %s25, 0
    %p142 = por %p140, %p141
    %s143 = ssub.s32 %s27, %s34
    %p144 = scmp.eq.s32.totalorder %s143, 0
    %s146 = sadd.s32 %s145, 1
    %s147 = scalar_select %p144, %s145, %s146
    %p150 = pneg %p144
    %p151 = scmp.eq.s32.totalorder %s19, 3
    %p152 = por %p150, %p151
    %p153 = scmp.ne.s32.totalorder %s145, %s148
    %p154 = scmp.eq.s32.totalorder %s19, 0
    %p155 = por %p153, %p154
    %p156 = scmp.ne.s32.totalorder %s145, %s148
    %p157 = scmp.eq.s32.totalorder %s24, 3
    %p158 = por %p156, %p157
    %p159 = scmp.ne.s32.totalorder %s148, %s149
    %p160 = scmp.eq.s32.totalorder %s24, 0
    %p161 = por %p159, %p160
    %p162 = scmp.ne.s32.totalorder %s148, %s149
    %p163 = scmp.eq.s32.totalorder %s25, 3
    %p164 = por %p162, %p163
    %p166 = scmp.ne.s32.totalorder %s149, %s165
    %p167 = scmp.eq.s32.totalorder %s25, 0
    %p168 = por %p166, %p167
    %s169 = ssub.s32 %s27, %s34
    %p170 = scmp.eq.s32.totalorder %s169, 0
    %s172 = sadd.s32 %s171, 1
    %s173 = scalar_select %p170, %s171, %s172
    %p176 = pneg %p170
    %p177 = scmp.eq.s32.totalorder %s19, 3
    %p178 = por %p176, %p177
    %p179 = scmp.ne.s32.totalorder %s171, %s174
    %p180 = scmp.eq.s32.totalorder %s19, 0
    %p181 = por %p179, %p180
    %p182 = scmp.ne.s32.totalorder %s171, %s174
    %p183 = scmp.eq.s32.totalorder %s24, 3
    %p184 = por %p182, %p183
    %p185 = scmp.ne.s32.totalorder %s174, %s175
    %p186 = scmp.eq.s32.totalorder %s24, 0
    %p187 = por %p185, %p186
    %p188 = scmp.ne.s32.totalorder %s174, %s175
    %p189 = scmp.eq.s32.totalorder %s25, 3
    %p190 = por %p188, %p189
    %p192 = scmp.ne.s32.totalorder %s175, %s191
    %p193 = scmp.eq.s32.totalorder %s25, 0
    %p194 = por %p192, %p193
    %s195 = ssub.s32 %s27, %s34
    %p196 = scmp.eq.s32.totalorder %s195, 0
    %s198 = sadd.s32 %s197, 1
    %s199 = scalar_select %p196, %s197, %s198
    %p202 = pneg %p196
    %p203 = scmp.eq.s32.totalorder %s19, 3
    %p204 = por %p202, %p203
    %p205 = scmp.ne.s32.totalorder %s197, %s200
    %p206 = scmp.eq.s32.totalorder %s19, 0
    %p207 = por %p205, %p206
    %p208 = scmp.ne.s32.totalorder %s197, %s200
    %p209 = scmp.eq.s32.totalorder %s24, 3
    %p210 = por %p208, %p209
    %p211 = scmp.ne.s32.totalorder %s200, %s201
    %p212 = scmp.eq.s32.totalorder %s24, 0
    %p213 = por %p211, %p212
    %p214 = scmp.ne.s32.totalorder %s200, %s201
    %p215 = scmp.eq.s32.totalorder %s25, 3
    %p216 = por %p214, %p215
    %p218 = scmp.ne.s32.totalorder %s201, %s217
    %p219 = scmp.eq.s32.totalorder %s25, 0
    %p220 = por %p218, %p219
    %s221 = ssub.s32 %s27, %s34
    %p222 = scmp.eq.s32.totalorder %s221, 0
    %s224 = sadd.s32 %s223, 1
    %s225 = scalar_select %p222, %s223, %s224
    %p228 = pneg %p222
    %p229 = scmp.eq.s32.totalorder %s19, 3
    %p230 = por %p228, %p229
    %p231 = scmp.ne.s32.totalorder %s223, %s226
    %p232 = scmp.eq.s32.totalorder %s19, 0
    %p233 = por %p231, %p232
    %p234 = scmp.ne.s32.totalorder %s223, %s226
    %p235 = scmp.eq.s32.totalorder %s24, 3
    %p236 = por %p234, %p235
    %p237 = scmp.ne.s32.totalorder %s226, %s227
    %p238 = scmp.eq.s32.totalorder %s24, 0
    %p239 = por %p237, %p238
    %p240 = scmp.ne.s32.totalorder %s226, %s227
    %p241 = scmp.eq.s32.totalorder %s25, 3
    %p242 = por %p240, %p241
    %p244 = scmp.ne.s32.totalorder %s227, %s243
    %p245 = scmp.eq.s32.totalorder %s25, 0
    %p246 = por %p244, %p245
    %s247 = ssub.s32 %s27, %s34
    %p248 = scmp.eq.s32.totalorder %s247, 0
    %s250 = sadd.s32 %s249, 1
    %s251 = scalar_select %p248, %s249, %s250
    %p254 = pneg %p248
    %p255 = scmp.eq.s32.totalorder %s19, 3
    %p256 = por %p254, %p255
    %p257 = scmp.ne.s32.totalorder %s249, %s252
    %p258 = scmp.eq.s32.totalorder %s19, 0
    %p259 = por %p257, %p258
    %p260 = scmp.ne.s32.totalorder %s249, %s252
    %p261 = scmp.eq.s32.totalorder %s24, 3
    %p262 = por %p260, %p261
    %p263 = scmp.ne.s32.totalorder %s252, %s253
    %p264 = scmp.eq.s32.totalorder %s24, 0
    %p265 = por %p263, %p264
    %p266 = scmp.ne.s32.totalorder %s252, %s253
    %p267 = scmp.eq.s32.totalorder %s25, 3
    %p268 = por %p266, %p267
    %p270 = scmp.ne.s32.totalorder %s253, %s269
    %p271 = scmp.eq.s32.totalorder %s25, 0
    %p272 = por %p270, %p271
    %s273 = ssub.s32 %s27, %s34
    %p274 = scmp.eq.s32.totalorder %s273, 0
    %s276 = sadd.s32 %s275, 1
    %s277 = scalar_select %p274, %s275, %s276
    %p280 = pneg %p274
    %p281 = scmp.eq.s32.totalorder %s19, 3
    %p282 = por %p280, %p281
    %p283 = scmp.ne.s32.totalorder %s275, %s278
    %p284 = scmp.eq.s32.totalorder %s19, 0
    %p285 = por %p283, %p284
    %p286 = scmp.ne.s32.totalorder %s275, %s278
    %p287 = scmp.eq.s32.totalorder %s24, 3
    %p288 = por %p286, %p287
    %p289 = scmp.ne.s32.totalorder %s278, %s279
    %p290 = scmp.eq.s32.totalorder %s24, 0
    %p291 = por %p289, %p290
    %p292 = scmp.ne.s32.totalorder %s278, %s279
    %p293 = scmp.eq.s32.totalorder %s25, 3
    %p294 = por %p292, %p293
    %p296 = scmp.ne.s32.totalorder %s279, %s295
    %p297 = scmp.eq.s32.totalorder %s25, 0
    %p298 = por %p296, %p297
    %s299 = ssub.s32 %s27, %s34
    %p300 = scmp.eq.s32.totalorder %s299, 0
    %s302 = sadd.s32 %s301, 1
    %s303 = scalar_select %p300, %s301, %s302
    %p306 = pneg %p300
    %p307 = scmp.eq.s32.totalorder %s19, 3
    %p308 = por %p306, %p307
    %p309 = scmp.ne.s32.totalorder %s301, %s304
    %p310 = scmp.eq.s32.totalorder %s19, 0
    %p311 = por %p309, %p310
    %p312 = scmp.ne.s32.totalorder %s301, %s304
    %p313 = scmp.eq.s32.totalorder %s24, 3
    %p314 = por %p312, %p313
    %p315 = scmp.ne.s32.totalorder %s304, %s305
    %p316 = scmp.eq.s32.totalorder %s24, 0
    %p317 = por %p315, %p316
    %p318 = scmp.ne.s32.totalorder %s304, %s305
    %p319 = scmp.eq.s32.totalorder %s25, 3
    %p320 = por %p318, %p319
    %p322 = scmp.ne.s32.totalorder %s305, %s321
    %p323 = scmp.eq.s32.totalorder %s25, 0
    %p324 = por %p322, %p323
    %s325 = ssub.s32 %s27, %s34
    %p326 = scmp.eq.s32.totalorder %s325, 0
    %s328 = sadd.s32 %s327, 1
    %s329 = scalar_select %p326, %s327, %s328
    %p332 = pneg %p326
    %p333 = scmp.eq.s32.totalorder %s19, 3
    %p334 = por %p332, %p333
    %p335 = scmp.ne.s32.totalorder %s327, %s330
    %p336 = scmp.eq.s32.totalorder %s19, 0
    %p337 = por %p335, %p336
    %p338 = scmp.ne.s32.totalorder %s327, %s330
    %p339 = scmp.eq.s32.totalorder %s24, 3
    %p340 = por %p338, %p339
    %p341 = scmp.ne.s32.totalorder %s330, %s331
    %p342 = scmp.eq.s32.totalorder %s24, 0
    %p343 = por %p341, %p342
    %p344 = scmp.ne.s32.totalorder %s330, %s331
    %p345 = scmp.eq.s32.totalorder %s25, 3
    %p346 = por %p344, %p345
    %p348 = scmp.ne.s32.totalorder %s331, %s347
    %p349 = scmp.eq.s32.totalorder %s25, 0
    %p350 = por %p348, %p349
    %s351 = ssub.s32 %s27, %s34
    %p352 = scmp.eq.s32.totalorder %s351, 0
    %s354 = sadd.s32 %s353, 1
    %s355 = scalar_select %p352, %s353, %s354
    %p358 = pneg %p352
    %p359 = scmp.eq.s32.totalorder %s19, 3
    %p360 = por %p358, %p359
    %p361 = scmp.ne.s32.totalorder %s353, %s356
    %p362 = scmp.eq.s32.totalorder %s19, 0
    %p363 = por %p361, %p362
    %p364 = scmp.ne.s32.totalorder %s353, %s356
    %p365 = scmp.eq.s32.totalorder %s24, 3
    %p366 = por %p364, %p365
    %p367 = scmp.ne.s32.totalorder %s356, %s357
    %p368 = scmp.eq.s32.totalorder %s24, 0
    %p369 = por %p367, %p368
    %p370 = scmp.ne.s32.totalorder %s356, %s357
    %p371 = scmp.eq.s32.totalorder %s25, 3
    %p372 = por %p370, %p371
    %p374 = scmp.ne.s32.totalorder %s357, %s373
    %p375 = scmp.eq.s32.totalorder %s25, 0
    %p376 = por %p374, %p375
    %s377 = ssub.s32 %s26, %s38
    %p378 = scmp.eq.s32.totalorder %s377, 0
    %s380 = sadd.s32 %s379, 1
    %s381 = scalar_select %p378, %s379, %s380
    %p384 = pneg %p378
    %p385 = scmp.eq.s32.totalorder %s19, 3
    %p386 = por %p384, %p385
    %p387 = scmp.ne.s32.totalorder %s379, %s382
    %p388 = scmp.eq.s32.totalorder %s19, 0
    %p389 = por %p387, %p388
    %p390 = scmp.ne.s32.totalorder %s379, %s382
    %p391 = scmp.eq.s32.totalorder %s24, 3
    %p392 = por %p390, %p391
    %p393 = scmp.ne.s32.totalorder %s382, %s383
    %p394 = scmp.eq.s32.totalorder %s24, 0
    %p395 = por %p393, %p394
    %p396 = scmp.ne.s32.totalorder %s382, %s383
    %p397 = scmp.eq.s32.totalorder %s25, 3
    %p398 = por %p396, %p397
    %p400 = scmp.ne.s32.totalorder %s383, %s399
    %p401 = scmp.eq.s32.totalorder %s25, 0
    %p402 = por %p400, %p401
    %p403 = scmp.le.s32.totalorder 1, %s19
    %p404 = scmp.lt.s32.totalorder %s19, 5
    %p405 = pnand %p403, %p404
    %p406 = pneg %p405
    // Predicated region
    $region9: #{forward.6} parent=5 // pred_check
      _
    $region10: #{forward.6} parent=5 // pred_check_branch
      %408 = sbr.rel (%p405) target = $region12
    $region11: #{forward.6} parent=5 // pred_region
      %s409 = ssub.s32 %s19, 1
    $region12: #{forward.6} parent=5 // pred_fallthru
      _
    %p410 = scmp.lt.s32.totalorder %s19, 4
    // Predicated region
    $region13: #{forward.6} parent=5 // pred_check
      %p411 = pneg %p410
    $region14: #{forward.6} parent=5 // pred_check_branch
      %413 = sbr.rel (%p411) target = $region16
    $region15: #{forward.6} parent=5 // pred_region
      // Predicated region
      $region17: #{forward.6} parent=15 // pred_check
        %p414 = pneg %p51
      $region18: #{forward.6} parent=15 // pred_check_branch
        %416 = sbr.rel (%p414) target = $region20
      $region19: #{forward.6} parent=15 // pred_region
        %p417 = scmp.lt.s32.totalorder %s26, 1
        %s418 = scalar_select %p417, %s26, 1
        %s419 = smul.addr %s418, 2
        %s420 = smul.addr %s419, 8
        %s421 = scalar_lea.vmem %s0, %s420
      $region20: #{forward.6} parent=15 // pred_fallthru
        _
      // Predicated region
      $region21: #{forward.6} parent=15 // pred_check
        %p422 = pneg %p77
      $region22: #{forward.6} parent=15 // pred_check_branch
        %424 = sbr.rel (%p422) target = $region24
      $region23: #{forward.6} parent=15 // pred_region
        %p425 = scmp.lt.s32.totalorder %s26, 1
        %s426 = scalar_select %p425, %s26, 1
        %s427 = smul.addr %s426, 2
        %s428 = smul.addr %s427, 8
        %s429 = scalar_lea.vmem %s1, %s428
      $region24: #{forward.6} parent=15 // pred_fallthru
        _
      // Predicated region
      $region25: #{forward.6} parent=15 // pred_check
        %p430 = pneg %p103
      $region26: #{forward.6} parent=15 // pred_check_branch
        %432 = sbr.rel (%p430) target = $region28
      $region27: #{forward.6} parent=15 // pred_region
        %p433 = scmp.lt.s32.totalorder %s27, 1
        %s434 = scalar_select %p433, %s27, 1
        %s435 = scalar_lea.vmem %s2, %s434
      $region28: #{forward.6} parent=15 // pred_fallthru
        _
      // Predicated region
      $region29: #{forward.6} parent=15 // pred_check
        %p436 = pneg %p129
      $region30: #{forward.6} parent=15 // pred_check_branch
        %438 = sbr.rel (%p436) target = $region32
      $region31: #{forward.6} parent=15 // pred_region
        %p439 = scmp.lt.s32.totalorder %s27, 1
        %s440 = scalar_select %p439, %s27, 1
        %s441 = scalar_lea.vmem %s3, %s440
      $region32: #{forward.6} parent=15 // pred_fallthru
        _
      // Predicated region
      $region33: #{forward.6} parent=15 // pred_check
        %p442 = pneg %p155
      $region34: #{forward.6} parent=15 // pred_check_branch
        %444 = sbr.rel (%p442) target = $region36
      $region35: #{forward.6} parent=15 // pred_region
        %p445 = scmp.lt.s32.totalorder %s27, 1
        %s446 = scalar_select %p445, %s27, 1
        %s447 = smul.addr %s446, 4
        %s448 = smul.addr %s447, 4
        %s449 = scalar_lea.vmem %s4, %s448
      $region36: #{forward.6} parent=15 // pred_fallthru
        _
      // Predicated region
      $region37: #{forward.6} parent=15 // pred_check
        %p450 = pneg %p181
      $region38: #{forward.6} parent=15 // pred_check_branch
        %452 = sbr.rel (%p450) target = $region40
      $region39: #{forward.6} parent=15 // pred_region
        %p453 = scmp.lt.s32.totalorder %s27, 1
        %s454 = scalar_select %p453, %s27, 1
        %s455 = smul.addr %s454, 4
        %s456 = smul.addr %s455, 4
        %s457 = scalar_lea.vmem %s5, %s456
      $region40: #{forward.6} parent=15 // pred_fallthru
        _
      // Predicated region
      $region41: #{forward.6} parent=15 // pred_check
        %p458 = pneg %p207
      $region42: #{forward.6} parent=15 // pred_check_branch
        %460 = sbr.rel (%p458) target = $region44
      $region43: #{forward.6} parent=15 // pred_region
        %p461 = scmp.lt.s32.totalorder %s27, 1
        %s462 = scalar_select %p461, %s27, 1
        %s463 = scalar_lea.vmem %s6, %s462
      $region44: #{forward.6} parent=15 // pred_fallthru
        _
      // Predicated region
      $region45: #{forward.6} parent=15 // pred_check
        %p464 = pneg %p233
      $region46: #{forward.6} parent=15 // pred_check_branch
        %466 = sbr.rel (%p464) target = $region48
      $region47: #{forward.6} parent=15 // pred_region
        %p467 = scmp.lt.s32.totalorder %s27, 1
        %s468 = scalar_select %p467, %s27, 1
        %s469 = scalar_lea.vmem %s7, %s468
      $region48: #{forward.6} parent=15 // pred_fallthru
        _
      // Predicated region
      $region49: #{forward.6} parent=15 // pred_check
        %p470 = pneg %p259
      $region50: #{forward.6} parent=15 // pred_check_branch
        %472 = sbr.rel (%p470) target = $region52
      $region51: #{forward.6} parent=15 // pred_region
        %p473 = scmp.lt.s32.totalorder %s27, 1
        %s474 = scalar_select %p473, %s27, 1
        %s475 = scalar_lea.vmem %s8, %s474
      $region52: #{forward.6} parent=15 // pred_fallthru
        _
      // Predicated region
      $region53: #{forward.6} parent=15 // pred_check
        %p476 = pneg %p285
      $region54: #{forward.6} parent=15 // pred_check_branch
        %478 = sbr.rel (%p476) target = $region56
      $region55: #{forward.6} parent=15 // pred_region
        %p479 = scmp.lt.s32.totalorder %s27, 1
        %s480 = scalar_select %p479, %s27, 1
        %s481 = smul.addr %s480, 4
        %s482 = smul.addr %s481, 4
        %s483 = scalar_lea.vmem %s9, %s482
      $region56: #{forward.6} parent=15 // pred_fallthru
        _
      // Predicated region
      $region57: #{forward.6} parent=15 // pred_check
        %p484 = pneg %p311
      $region58: #{forward.6} parent=15 // pred_check_branch
        %486 = sbr.rel (%p484) target = $region60
      $region59: #{forward.6} parent=15 // pred_region
        %p487 = scmp.lt.s32.totalorder %s27, 1
        %s488 = scalar_select %p487, %s27, 1
        %s489 = scalar_lea.vmem %s10, %s488
      $region60: #{forward.6} parent=15 // pred_fallthru
        _
      // Predicated region
      $region61: #{forward.6} parent=15 // pred_check
        %p490 = pneg %p337
      $region62: #{forward.6} parent=15 // pred_check_branch
        %492 = sbr.rel (%p490) target = $region64
      $region63: #{forward.6} parent=15 // pred_region
        %p493 = scmp.lt.s32.totalorder %s27, 1
        %s494 = scalar_select %p493, %s27, 1
        %s495 = smul.addr %s494, 16
        %s496 = smul.addr %s495, 4
        %s497 = scalar_lea.vmem %s11, %s496
      $region64: #{forward.6} parent=15 // pred_fallthru
        _
      // Predicated region
      $region65: #{forward.6} parent=15 // pred_check
        %p498 = pneg %p363
      $region66: #{forward.6} parent=15 // pred_check_branch
        %500 = sbr.rel (%p498) target = $region68
      $region67: #{forward.6} parent=15 // pred_region
        %p501 = scmp.lt.s32.totalorder %s27, 1
        %s502 = scalar_select %p501, %s27, 1
        %s503 = scalar_lea.vmem %s12, %s502
      $region68: #{forward.6} parent=15 // pred_fallthru
        _
    $region16: #{forward.6} parent=5 // pred_fallthru
      _
    %p504 = scmp.le.s32.totalorder 1, %s19
    %p505 = scmp.lt.s32.totalorder %s19, 5
    %p506 = pnand %p504, %p505
    %p507 = pneg %p506
    // Predicated region
    $region69: #{forward.6} parent=5 // pred_check
      _
    $region70: #{forward.6} parent=5 // pred_check_branch
      %509 = sbr.rel (%p506) target = $region72
    $region71: #{forward.6} parent=5 // pred_region
      %s510 = ssub.s32 %s19, 1
      %p511 = scmp.lt.s32.totalorder %s28, 1
      %s512 = scalar_select %p511, %s28, 1
      %s513 = smul.addr %s512, 2
      %s514 = smul.addr %s513, 8
      %s515 = scalar_lea.vmem %s0, %s514
      %p516 = pneg %p57
      %p517 = pneg %p54
      %p518 = scmp.lt.s32.totalorder %s28, 1
      %s519 = scalar_select %p518, %s28, 1
      %s520 = smul.addr %s519, 2
      %s521 = smul.addr %s520, 8
      %s522 = scalar_lea.vmem %s1, %s521
      %p523 = pneg %p83
      %p524 = pneg %p80
      %p525 = scmp.lt.s32.totalorder %s29, 1
      %s526 = scalar_select %p525, %s29, 1
      %s527 = scalar_lea.vmem %s2, %s526
      %p528 = pneg %p109
      %p529 = pneg %p106
      %p530 = scmp.lt.s32.totalorder %s29, 1
      %s531 = scalar_select %p530, %s29, 1
      %s532 = scalar_lea.vmem %s3, %s531
      %p533 = pneg %p135
      %p534 = pneg %p132
      %p535 = scmp.lt.s32.totalorder %s29, 1
      %s536 = scalar_select %p535, %s29, 1
      %s537 = smul.addr %s536, 4
      %s538 = smul.addr %s537, 4
      %s539 = scalar_lea.vmem %s4, %s538
      %p540 = pneg %p161
      %p541 = pneg %p158
      %p542 = scmp.lt.s32.totalorder %s29, 1
      %s543 = scalar_select %p542, %s29, 1
      %s544 = smul.addr %s543, 4
      %s545 = smul.addr %s544, 4
      %s546 = scalar_lea.vmem %s5, %s545
      %p547 = pneg %p187
      %p548 = pneg %p184
      %p549 = scmp.lt.s32.totalorder %s29, 1
      %s550 = scalar_select %p549, %s29, 1
      %s551 = scalar_lea.vmem %s6, %s550
      %p552 = pneg %p213
      %p553 = pneg %p210
      %p554 = scmp.lt.s32.totalorder %s29, 1
      %s555 = scalar_select %p554, %s29, 1
      %s556 = scalar_lea.vmem %s7, %s555
      %p557 = pneg %p239
      %p558 = pneg %p236
      %p559 = scmp.lt.s32.totalorder %s29, 1
      %s560 = scalar_select %p559, %s29, 1
      %s561 = scalar_lea.vmem %s8, %s560
      %p562 = pneg %p265
      %p563 = pneg %p262
      %p564 = scmp.lt.s32.totalorder %s29, 1
      %s565 = scalar_select %p564, %s29, 1
      %s566 = smul.addr %s565, 4
      %s567 = smul.addr %s566, 4
      %s568 = scalar_lea.vmem %s9, %s567
      %p569 = pneg %p291
      %p570 = pneg %p288
      %p571 = scmp.lt.s32.totalorder %s29, 1
      %s572 = scalar_select %p571, %s29, 1
      %s573 = scalar_lea.vmem %s10, %s572
      %p574 = pneg %p317
      %p575 = pneg %p314
      %p576 = scmp.lt.s32.totalorder %s29, 1
      %s577 = scalar_select %p576, %s29, 1
      %s578 = smul.addr %s577, 16
      %s579 = smul.addr %s578, 4
      %s580 = scalar_lea.vmem %s11, %s579
      %p581 = pneg %p343
      %p582 = pneg %p340
      %p583 = scmp.lt.s32.totalorder %s29, 1
      %s584 = scalar_select %p583, %s29, 1
      %s585 = scalar_lea.vmem %s12, %s584
      %p586 = pneg %p369
      %p587 = pneg %p366
      %p588 = pneg %p395
      %p589 = pneg %p392
      %p590 = scmp.lt.s32.totalorder %s28, 1
      %s591 = scalar_select %p590, %s28, 1
      %s592 = smul.addr %s591, 2
      %s593 = smul.addr %s592, 8
      %s594 = scalar_lea.vmem %s13, %s593
      %p595 = scmp.lt.s32.totalorder %s28, 1
      %s596 = scalar_select %p595, %s28, 1
      %s597 = smul.addr %s596, 2
      %s598 = smul.addr %s597, 8
      %s599 = scalar_lea.vmem %s0, %s598
      %p600 = scmp.lt.s32.totalorder %s28, 1
      %s601 = scalar_select %p600, %s28, 1
      %s602 = smul.addr %s601, 2
      %s603 = smul.addr %s602, 8
      %s604 = scalar_lea.vmem %s1, %s603
      %p605 = scmp.lt.s32.totalorder %s29, 1
      %s606 = scalar_select %p605, %s29, 1
      %s607 = scalar_lea.vmem %s2, %s606
      %p608 = scmp.lt.s32.totalorder %s29, 1
      %s609 = scalar_select %p608, %s29, 1
      %s610 = scalar_lea.vmem %s3, %s609
      %p611 = scmp.lt.s32.totalorder %s29, 1
      %s612 = scalar_select %p611, %s29, 1
      %s613 = smul.addr %s612, 4
      %s614 = smul.addr %s613, 4
      %s615 = scalar_lea.vmem %s4, %s614
      %p616 = scmp.lt.s32.totalorder %s29, 1
      %s617 = scalar_select %p616, %s29, 1
      %s618 = smul.addr %s617, 4
      %s619 = smul.addr %s618, 4
      %s620 = scalar_lea.vmem %s5, %s619
      %p621 = scmp.lt.s32.totalorder %s29, 1
      %s622 = scalar_select %p621, %s29, 1
      %s623 = scalar_lea.vmem %s6, %s622
      %p624 = scmp.lt.s32.totalorder %s29, 1
      %s625 = scalar_select %p624, %s29, 1
      %s626 = scalar_lea.vmem %s7, %s625
      %p627 = scmp.lt.s32.totalorder %s29, 1
      %s628 = scalar_select %p627, %s29, 1
      %s629 = scalar_lea.vmem %s8, %s628
      %p630 = scmp.lt.s32.totalorder %s29, 1
      %s631 = scalar_select %p630, %s29, 1
      %s632 = smul.addr %s631, 4
      %s633 = smul.addr %s632, 4
      %s634 = scalar_lea.vmem %s9, %s633
      %p635 = scmp.lt.s32.totalorder %s29, 1
      %s636 = scalar_select %p635, %s29, 1
      %s637 = scalar_lea.vmem %s10, %s636
      %p638 = scmp.lt.s32.totalorder %s29, 1
      %s639 = scalar_select %p638, %s29, 1
      %s640 = smul.addr %s639, 16
      %s641 = smul.addr %s640, 4
      %s642 = scalar_lea.vmem %s11, %s641
      %p643 = scmp.lt.s32.totalorder %s29, 1
      %s644 = scalar_select %p643, %s29, 1
      %s645 = scalar_lea.vmem %s12, %s644
      %p646 = scmp.lt.s32.totalorder %s28, 1
      %s647 = scalar_select %p646, %s28, 1
      %s648 = smul.addr %s647, 2
      %s649 = smul.addr %s648, 8
      %s650 = scalar_lea.vmem %s13, %s649
      %p652 = scmp.eq.s32.totalorder %s29, 0
      // Predicated region
      $region73: #{forward.6} parent=71 // pred_check
        %p653 = pneg %p652
      $region74: #{forward.6} parent=71 // pred_check_branch
        %655 = sbr.rel (%p653) target = $region76
      $region75: #{forward.6} parent=71 // pred_region
        %v656 = vld [vmem:[%s599] sm:$0xff]
        %v657 = vld [vmem:[%s599 + $0x8] sm:$0xff]
        %vm658 = vcmask 261120
        %659 = vst.msk [vmem:[%s650] sm:$0xff] %vm658, %v656
        %660 = vst.msk [vmem:[%s650 + $0x8] sm:$0xff] %vm658, %v657
      $region76: #{forward.6} parent=71 // pred_fallthru
        _
      %v661 = vld [vmem:[%s650] sm:$0xff]
      %v662 = vld [vmem:[%s650 + $0x8] sm:$0xff]
      %v663 = vld [vmem:[%s604] sm:$0xff]
      %v664 = vld [vmem:[%s604 + $0x8] sm:$0xff]
      %v665 = vadd.f32 %v661, %v663
      %v666 = vadd.f32 %v662, %v664
      %v667 = vld [vmem:[%s607] sm:$0x1]
      %v668 = vld [vmem:[%s610] sm:$0x1]
      %vm669 = vcmask 261120
      %v670 = vsel %vm669, %v665, 0.0
      %671 = vadd.xlane.f32.xlu0 %v670
      %v672 = vpop.xlane.xlu0 %671
      %v673 = vsel %vm669, %v666, 0.0
      %674 = vadd.xlane.f32.xlu0 %v673
      %v675 = vpop.xlane.xlu0 %674
      %v676 = vrcp.pop 32.0
      %v677 = vmul.f32 %v672, %v676
      %v678 = vmul.f32 %v675, %v676
      %v679 = vsub.f32 %v665, %v677
      %v680 = vsub.f32 %v666, %v678
      %v681 = vmul.f32 %v679, %v679
      %v682 = vmul.f32 %v680, %v680
      %v683 = vsel %vm669, %v681, 0.0
      %684 = vadd.xlane.f32.xlu0 %v683
      %v685 = vpop.xlane.xlu0 %684
      %v686 = vsel %vm669, %v682, 0.0
      %687 = vadd.xlane.f32.xlu0 %v686
      %v688 = vpop.xlane.xlu0 %687
      %v689 = vmul.f32 %v685, %v676
      %v690 = vmul.f32 %v688, %v676
      %v691 = vadd.f32 %v689, 1e-05
      %v692 = vadd.f32 %v690, 1e-05
      %v693 = vrsqrt.pop %v691
      %v694 = vrsqrt.pop %v692
      %v695 = vmul.f32 %v679, %v693
      %v696 = vmul.f32 %v680, %v694
      %v698 = vlaneseq
      %v699 = vshrl.u32 %v698, 7
      %v700 = vsub.s32 0, %v699
      %v701 = vrot.slane %v667, %v700
      %v703 = vmul.f32 %v695, %v701
      %v704 = vmul.f32 %v696, %v701
      %v706 = vlaneseq
      %v707 = vshrl.u32 %v706, 7
      %v708 = vsub.s32 0, %v707
      %v709 = vrot.slane %v668, %v708
      %v711 = vadd.f32 %v703, %v709
      %v712 = vadd.f32 %v704, %v709
      %v713 = vld [vmem:[%s615] sm:$0xf]
      %v714 = vld [vmem:[%s615 + $0x4] sm:$0xf]
      %v715 = vld [vmem:[%s615 + $0x8] sm:$0xf]
      %v716 = vld [vmem:[%s615 + $0xc] sm:$0xf]
      %v717 = vpack.c.bf16 %v712, %v711
      %v722 = vunpack.c.l.b16 %v713
      %v723 = vunpack.c.l.b16 %v714
      %v724 = vunpack.c.l.b16 %v715
      %v725 = vunpack.c.l.b16 %v716
      %v726 = vpack.c.b16 %v723, %v722
      %v727 = vpack.c.b16 %v725, %v724
      %v731 = vsel %vm669, %v717, 0
      %733 = vmatprep.subr.bf16.mxu0 0
      %734 = vmatpush1.bf16.msra.mxu0 0
      %735 = vmatprep.subr.bf16.mxu0 0
      %736 = vmatpush1.bf16.msra.mxu0 0
      %737 = vmatprep.subr.bf16.mxu0 0
      %738 = vmatpush1.bf16.msra.mxu0 0
      %739 = vmatprep.subr.bf16.mxu0 0
      %740 = vmatpush1.bf16.msra.mxu0 0
      %741 = vmatprep.subr.bf16.mxu0 0
      %742 = vmatpush1.bf16.msra.mxu0 0
      %743 = vmatprep.subr.bf16.mxu0 0
      %744 = vmatpush1.bf16.msra.mxu0 0
      %745 = vmatprep.subr.bf16.mxu0 0
      %746 = vmatpush1.bf16.msra.mxu0 %v727
      %747 = vmatprep.subr.bf16.mxu0 0
      %748 = vmatpush1.bf16.msra.mxu0 %v726
      %749 = vmatprep.subr.bf16.mxu0 0
      %750 = vmatpush2.bf16.msra.mxu0 0
      %751 = vmatprep.subr.bf16.mxu0 0
      %752 = vmatpush2.bf16.msra.mxu0 0
      %753 = vmatprep.subr.bf16.mxu0 0
      %754 = vmatpush2.bf16.msra.mxu0 0
      %755 = vmatprep.subr.bf16.mxu0 0
      %756 = vmatpush2.bf16.msra.mxu0 0
      %757 = vmatprep.subr.bf16.mxu0 0
      %758 = vmatpush2.bf16.msra.mxu0 0
      %759 = vmatprep.subr.bf16.mxu0 0
      %760 = vmatpush2.bf16.msra.mxu0 0
      %761 = vmatprep.subr.bf16.mxu0 0
      %762 = vmatpush2.bf16.msra.mxu0 0
      %763 = vmatprep.subr.bf16.mxu0 0
      %764 = vmatpush2.bf16.msra.mxu0 0
      %765 = vmatprep.mubr.bf16.mxu0 0
      %766 = vmatmul.mubr.bf16.gmra.mxu0 %v731
      %v767 = vpop.f32.mrf.mxu0
      %v768 = vadd.f32 0.0, %v767
      %v769 = vpop.f32.mrf.mxu0
      %v770 = vpop.f32.mrf.mxu0
      %v771 = vadd.f32 0.0, %v770
      %v772 = vpop.f32.mrf.mxu0
      %773 = vdwg.mxu0
      %v774 = vlaneseq
      %v775 = vand.u32 %v774, 127
      %vm776 = vcmp.ge.s32.totalorder %v775, 11
      %v777 = vpack.c.bf16 %v771, %v768
      %779 = vrot.lane.b32.xlu0 %v777, 96
      %v780 = vpop.permute.xlu0 %779
      %vm781 = vcmask 64512
      %v783 = vsel %vm781, %v777, 0
      %v786 = vsel %vm781, %v780, 0
      %788 = vmatprep.subr.bf16.mxu0 0
      %789 = vmatpush1.bf16.xpose.msra.mxu0 0
      %790 = vmatprep.subr.bf16.mxu0 0
      %791 = vmatpush1.bf16.xpose.msra.mxu0 0
      %792 = vmatprep.subr.bf16.mxu0 0
      %793 = vmatpush1.bf16.xpose.msra.mxu0 0
      %794 = vmatprep.subr.bf16.mxu0 0
      %795 = vmatpush1.bf16.xpose.msra.mxu0 0
      %796 = vmatprep.subr.bf16.mxu0 0
      %797 = vmatpush1.bf16.xpose.msra.mxu0 0
      %798 = vmatprep.subr.bf16.mxu0 0
      %799 = vmatpush1.bf16.xpose.msra.mxu0 0
      %800 = vmatprep.subr.bf16.mxu0 0
      %801 = vmatpush1.bf16.xpose.msra.mxu0 0
      %802 = vmatprep.subr.bf16.mxu0 0
      %803 = vmatpush1.bf16.xpose.msra.mxu0 %v786
      %804 = vmatprep.subr.bf16.mxu0 0
      %805 = vmatpush2.bf16.xpose.msra.mxu0 0
      %806 = vmatprep.subr.bf16.mxu0 0
      %807 = vmatpush2.bf16.xpose.msra.mxu0 0
      %808 = vmatprep.subr.bf16.mxu0 0
      %809 = vmatpush2.bf16.xpose.msra.mxu0 0
      %810 = vmatprep.subr.bf16.mxu0 0
      %811 = vmatpush2.bf16.xpose.msra.mxu0 0
      %812 = vmatprep.subr.bf16.mxu0 0
      %813 = vmatpush2.bf16.xpose.msra.mxu0 0
      %814 = vmatprep.subr.bf16.mxu0 0
      %815 = vmatpush2.bf16.xpose.msra.mxu0 0
      %816 = vmatprep.subr.bf16.mxu0 0
      %817 = vmatpush2.bf16.xpose.msra.mxu0 0
      %818 = vmatprep.subr.bf16.mxu0 0
      %819 = vmatpush2.bf16.xpose.msra.mxu0 0
      %820 = vmatprep.mubr.bf16.mxu0 0
      %821 = vmatmul.mubr.bf16.gmra.mxu0 %v783
      %v822 = vpop.f32.mrf.mxu0
      %v823 = vadd.f32 0.0, %v822
      %v824 = vpop.f32.mrf.mxu0
      %v825 = vpop.f32.mrf.mxu0
      %v826 = vadd.f32 0.0, %v825
      %v827 = vpop.f32.mrf.mxu0
      %828 = vdwg.mxu0
      %v829 = vmul.f32 %v823, 0.35355338
      %v830 = vmul.f32 %v826, 0.35355338
      %v831 = vsel %vm776, -1e+30, %v829
      %v832 = vsel %vm776, -1e+30, %v830
      %vm833 = vcmask 130048
      %v834 = vsel %vm833, %v831, -inf
      %835 = vmax.xlane.f32.xlu0 %v834
      %v836 = vpop.xlane.xlu0 %835
      %v837 = vsel %vm833, %v832, -inf
      %838 = vmax.xlane.f32.xlu0 %v837
      %v839 = vpop.xlane.xlu0 %838
      %v840 = vsub.f32 %v831, %v836
      %v841 = vsub.f32 %v832, %v839
      %v842 = vmul.f32 %v840, 1.442695
      %v843 = vpow.pop %v842
      %v844 = vmul.f32 %v841, 1.442695
      %v845 = vpow.pop %v844
      %v846 = vsel %vm833, %v843, 0.0
      %847 = vadd.xlane.f32.xlu0 %v846
      %v848 = vpop.xlane.xlu0 %847
      %v849 = vsel %vm833, %v845, 0.0
      %850 = vadd.xlane.f32.xlu0 %v849
      %v851 = vpop.xlane.xlu0 %850
      %v852 = vrcp.pop %v848
      %v853 = vrcp.pop %v851
      %v854 = vmul.f32 %v843, %v852
      %v855 = vmul.f32 %v845, %v853
      %v856 = vpack.c.bf16 %v855, %v854
      %857 = vrot.lane.b32.xlu0 %v777, 64
      %v858 = vpop.permute.xlu0 %857
      %v861 = vsel %vm833, %v856, 0
      %863 = vmatprep.subr.bf16.mxu0 0
      %864 = vmatpush1.bf16.msra.mxu0 0
      %865 = vmatprep.subr.bf16.mxu0 0
      %866 = vmatpush1.bf16.msra.mxu0 0
      %867 = vmatprep.subr.bf16.mxu0 0
      %868 = vmatpush1.bf16.msra.mxu0 0
      %869 = vmatprep.subr.bf16.mxu0 0
      %870 = vmatpush1.bf16.msra.mxu0 0
      %871 = vmatprep.subr.bf16.mxu0 0
      %872 = vmatpush1.bf16.msra.mxu0 0
      %873 = vmatprep.subr.bf16.mxu0 0
      %874 = vmatpush1.bf16.msra.mxu0 0
      %875 = vmatprep.subr.bf16.mxu0 0
      %876 = vmatpush1.bf16.msra.mxu0 0
      %877 = vmatprep.subr.bf16.mxu0 0
      %878 = vmatpush1.bf16.msra.mxu0 %v858
      %879 = vmatprep.subr.bf16.mxu0 0
      %880 = vmatpush2.bf16.msra.mxu0 0
      %881 = vmatprep.subr.bf16.mxu0 0
      %882 = vmatpush2.bf16.msra.mxu0 0
      %883 = vmatprep.subr.bf16.mxu0 0
      %884 = vmatpush2.bf16.msra.mxu0 0
      %885 = vmatprep.subr.bf16.mxu0 0
      %886 = vmatpush2.bf16.msra.mxu0 0
      %887 = vmatprep.subr.bf16.mxu0 0
      %888 = vmatpush2.bf16.msra.mxu0 0
      %889 = vmatprep.subr.bf16.mxu0 0
      %890 = vmatpush2.bf16.msra.mxu0 0
      %891 = vmatprep.subr.bf16.mxu0 0
      %892 = vmatpush2.bf16.msra.mxu0 0
      %893 = vmatprep.subr.bf16.mxu0 0
      %894 = vmatpush2.bf16.msra.mxu0 0
      %895 = vmatprep.mubr.bf16.mxu0 0
      %896 = vmatmul.mubr.bf16.gmra.mxu0 %v861
      %v897 = vpop.f32.mrf.mxu0
      %v898 = vadd.f32 0.0, %v897
      %v899 = vpop.f32.mrf.mxu0
      %v900 = vpop.f32.mrf.mxu0
      %v901 = vadd.f32 0.0, %v900
      %v902 = vpop.f32.mrf.mxu0
      %903 = vdwg.mxu0
      %904 = vrot.lane.b32.xlu0 %v777, 120
      %v905 = vpop.permute.xlu0 %904
      %906 = vrot.lane.b32.xlu0 %v777, 88
      %v907 = vpop.permute.xlu0 %906
      %v909 = vsel %vm781, %v905, 0
      %v912 = vsel %vm781, %v907, 0
      %914 = vmatprep.subr.bf16.mxu0 0
      %915 = vmatpush1.bf16.xpose.msra.mxu0 0
      %916 = vmatprep.subr.bf16.mxu0 0
      %917 = vmatpush1.bf16.xpose.msra.mxu0 0
      %918 = vmatprep.subr.bf16.mxu0 0
      %919 = vmatpush1.bf16.xpose.msra.mxu0 0
      %920 = vmatprep.subr.bf16.mxu0 0
      %921 = vmatpush1.bf16.xpose.msra.mxu0 0
      %922 = vmatprep.subr.bf16.mxu0 0
      %923 = vmatpush1.bf16.xpose.msra.mxu0 0
      %924 = vmatprep.subr.bf16.mxu0 0
      %925 = vmatpush1.bf16.xpose.msra.mxu0 0
      %926 = vmatprep.subr.bf16.mxu0 0
      %927 = vmatpush1.bf16.xpose.msra.mxu0 0
      %928 = vmatprep.subr.bf16.mxu0 0
      %929 = vmatpush1.bf16.xpose.msra.mxu0 %v912
      %930 = vmatprep.subr.bf16.mxu0 0
      %931 = vmatpush2.bf16.xpose.msra.mxu0 0
      %932 = vmatprep.subr.bf16.mxu0 0
      %933 = vmatpush2.bf16.xpose.msra.mxu0 0
      %934 = vmatprep.subr.bf16.mxu0 0
      %935 = vmatpush2.bf16.xpose.msra.mxu0 0
      %936 = vmatprep.subr.bf16.mxu0 0
      %937 = vmatpush2.bf16.xpose.msra.mxu0 0
      %938 = vmatprep.subr.bf16.mxu0 0
      %939 = vmatpush2.bf16.xpose.msra.mxu0 0
      %940 = vmatprep.subr.bf16.mxu0 0
      %941 = vmatpush2.bf16.xpose.msra.mxu0 0
      %942 = vmatprep.subr.bf16.mxu0 0
      %943 = vmatpush2.bf16.xpose.msra.mxu0 0
      %944 = vmatprep.subr.bf16.mxu0 0
      %945 = vmatpush2.bf16.xpose.msra.mxu0 0
      %946 = vmatprep.mubr.bf16.mxu0 0
      %947 = vmatmul.mubr.bf16.gmra.mxu0 %v909
      %v948 = vpop.f32.mrf.mxu0
      %v949 = vadd.f32 0.0, %v948
      %v950 = vpop.f32.mrf.mxu0
      %v951 = vpop.f32.mrf.mxu0
      %v952 = vadd.f32 0.0, %v951
      %v953 = vpop.f32.mrf.mxu0
      %954 = vdwg.mxu0
      %v955 = vmul.f32 %v949, 0.35355338
      %v956 = vmul.f32 %v952, 0.35355338
      %v957 = vsel %vm776, -1e+30, %v955
      %v958 = vsel %vm776, -1e+30, %v956
      %v959 = vsel %vm833, %v957, -inf
      %960 = vmax.xlane.f32.xlu0 %v959
      %v961 = vpop.xlane.xlu0 %960
      %v962 = vsel %vm833, %v958, -inf
      %963 = vmax.xlane.f32.xlu0 %v962
      %v964 = vpop.xlane.xlu0 %963
      %v965 = vsub.f32 %v957, %v961
      %v966 = vsub.f32 %v958, %v964
      %v967 = vmul.f32 %v965, 1.442695
      %v968 = vpow.pop %v967
      %v969 = vmul.f32 %v966, 1.442695
      %v970 = vpow.pop %v969
      %v971 = vsel %vm833, %v968, 0.0
      %972 = vadd.xlane.f32.xlu0 %v971
      %v973 = vpop.xlane.xlu0 %972
      %v974 = vsel %vm833, %v970, 0.0
      %975 = vadd.xlane.f32.xlu0 %v974
      %v976 = vpop.xlane.xlu0 %975
      %v977 = vrcp.pop %v973
      %v978 = vrcp.pop %v976
      %v979 = vmul.f32 %v968, %v977
      %v980 = vmul.f32 %v970, %v978
      %v981 = vpack.c.bf16 %v980, %v979
      %982 = vrot.lane.b32.xlu0 %v777, 56
      %v983 = vpop.permute.xlu0 %982
      %v986 = vsel %vm833, %v981, 0
      %988 = vmatprep.subr.bf16.mxu0 0
      %989 = vmatpush1.bf16.msra.mxu0 0
      %990 = vmatprep.subr.bf16.mxu0 0
      %991 = vmatpush1.bf16.msra.mxu0 0
      %992 = vmatprep.subr.bf16.mxu0 0
      %993 = vmatpush1.bf16.msra.mxu0 0
      %994 = vmatprep.subr.bf16.mxu0 0
      %995 = vmatpush1.bf16.msra.mxu0 0
      %996 = vmatprep.subr.bf16.mxu0 0
      %997 = vmatpush1.bf16.msra.mxu0 0
      %998 = vmatprep.subr.bf16.mxu0 0
      %999 = vmatpush1.bf16.msra.mxu0 0
      %1000 = vmatprep.subr.bf16.mxu0 0
      %1001 = vmatpush1.bf16.msra.mxu0 0
      %1002 = vmatprep.subr.bf16.mxu0 0
      %1003 = vmatpush1.bf16.msra.mxu0 %v983
      %1004 = vmatprep.subr.bf16.mxu0 0
      %1005 = vmatpush2.bf16.msra.mxu0 0
      %1006 = vmatprep.subr.bf16.mxu0 0
      %1007 = vmatpush2.bf16.msra.mxu0 0
      %1008 = vmatprep.subr.bf16.mxu0 0
      %1009 = vmatpush2.bf16.msra.mxu0 0
      %1010 = vmatprep.subr.bf16.mxu0 0
      %1011 = vmatpush2.bf16.msra.mxu0 0
      %1012 = vmatprep.subr.bf16.mxu0 0
      %1013 = vmatpush2.bf16.msra.mxu0 0
      %1014 = vmatprep.subr.bf16.mxu0 0
      %1015 = vmatpush2.bf16.msra.mxu0 0
      %1016 = vmatprep.subr.bf16.mxu0 0
      %1017 = vmatpush2.bf16.msra.mxu0 0
      %1018 = vmatprep.subr.bf16.mxu0 0
      %1019 = vmatpush2.bf16.msra.mxu0 0
      %1020 = vmatprep.mubr.bf16.mxu0 0
      %1021 = vmatmul.mubr.bf16.gmra.mxu0 %v986
      %v1022 = vpop.f32.mrf.mxu0
      %v1023 = vadd.f32 0.0, %v1022
      %v1024 = vpop.f32.mrf.mxu0
      %v1025 = vpop.f32.mrf.mxu0
      %v1026 = vadd.f32 0.0, %v1025
      %v1027 = vpop.f32.mrf.mxu0
      %1028 = vdwg.mxu0
      %1029 = vrot.lane.b32.xlu0 %v777, 112
      %v1030 = vpop.permute.xlu0 %1029
      %1031 = vrot.lane.b32.xlu0 %v777, 80
      %v1032 = vpop.permute.xlu0 %1031
      %v1034 = vsel %vm781, %v1030, 0
      %v1037 = vsel %vm781, %v1032, 0
      %1039 = vmatprep.subr.bf16.mxu0 0
      %1040 = vmatpush1.bf16.xpose.msra.mxu0 0
      %1041 = vmatprep.subr.bf16.mxu0 0
      %1042 = vmatpush1.bf16.xpose.msra.mxu0 0
      %1043 = vmatprep.subr.bf16.mxu0 0
      %1044 = vmatpush1.bf16.xpose.msra.mxu0 0
      %1045 = vmatprep.subr.bf16.mxu0 0
      %1046 = vmatpush1.bf16.xpose.msra.mxu0 0
      %1047 = vmatprep.subr.bf16.mxu0 0
      %1048 = vmatpush1.bf16.xpose.msra.mxu0 0
      %1049 = vmatprep.subr.bf16.mxu0 0
      %1050 = vmatpush1.bf16.xpose.msra.mxu0 0
      %1051 = vmatprep.subr.bf16.mxu0 0
      %1052 = vmatpush1.bf16.xpose.msra.mxu0 0
      %1053 = vmatprep.subr.bf16.mxu0 0
      %1054 = vmatpush1.bf16.xpose.msra.mxu0 %v1037
      %1055 = vmatprep.subr.bf16.mxu0 0
      %1056 = vmatpush2.bf16.xpose.msra.mxu0 0
      %1057 = vmatprep.subr.bf16.mxu0 0
      %1058 = vmatpush2.bf16.xpose.msra.mxu0 0
      %1059 = vmatprep.subr.bf16.mxu0 0
      %1060 = vmatpush2.bf16.xpose.msra.mxu0 0
      %1061 = vmatprep.subr.bf16.mxu0 0
      %1062 = vmatpush2.bf16.xpose.msra.mxu0 0
      %1063 = vmatprep.subr.bf16.mxu0 0
      %1064 = vmatpush2.bf16.xpose.msra.mxu0 0
      %1065 = vmatprep.subr.bf16.mxu0 0
      %1066 = vmatpush2.bf16.xpose.msra.mxu0 0
      %1067 = vmatprep.subr.bf16.mxu0 0
      %1068 = vmatpush2.bf16.xpose.msra.mxu0 0
      %1069 = vmatprep.subr.bf16.mxu0 0
      %1070 = vmatpush2.bf16.xpose.msra.mxu0 0
      %1071 = vmatprep.mubr.bf16.mxu0 0
      %1072 = vmatmul.mubr.bf16.gmra.mxu0 %v1034
      %v1073 = vpop.f32.mrf.mxu0
      %v1074 = vadd.f32 0.0, %v1073
      %v1075 = vpop.f32.mrf.mxu0
      %v1076 = vpop.f32.mrf.mxu0
      %v1077 = vadd.f32 0.0, %v1076
      %v1078 = vpop.f32.mrf.mxu0
      %1079 = vdwg.mxu0
      %v1080 = vmul.f32 %v1074, 0.35355338
      %v1081 = vmul.f32 %v1077, 0.35355338
      %v1082 = vsel %vm776, -1e+30, %v1080
      %v1083 = vsel %vm776, -1e+30, %v1081
      %v1084 = vsel %vm833, %v1082, -inf
      %1085 = vmax.xlane.f32.xlu0 %v1084
      %v1086 = vpop.xlane.xlu0 %1085
      %v1087 = vsel %vm833, %v1083, -inf
      %1088 = vmax.xlane.f32.xlu0 %v1087
      %v1089 = vpop.xlane.xlu0 %1088
      %v1090 = vsub.f32 %v1082, %v1086
      %v1091 = vsub.f32 %v1083, %v1089
      %v1092 = vmul.f32 %v1090, 1.442695
      %v1093 = vpow.pop %v1092
      %v1094 = vmul.f32 %v1091, 1.442695
      %v1095 = vpow.pop %v1094
      %v1096 = vsel %vm833, %v1093, 0.0
      %1097 = vadd.xlane.f32.xlu0 %v1096
      %v1098 = vpop.xlane.xlu0 %1097
      %v1099 = vsel %vm833, %v1095, 0.0
      %1100 = vadd.xlane.f32.xlu0 %v1099
      %v1101 = vpop.xlane.xlu0 %1100
      %v1102 = vrcp.pop %v1098
      %v1103 = vrcp.pop %v1101
      %v1104 = vmul.f32 %v1093, %v1102
      %v1105 = vmul.f32 %v1095, %v1103
      %v1106 = vpack.c.bf16 %v1105, %v1104
      %1107 = vrot.lane.b32.xlu0 %v777, 48
      %v1108 = vpop.permute.xlu0 %1107
      %v1111 = vsel %vm833, %v1106, 0
      %1113 = vmatprep.subr.bf16.mxu0 0
      %1114 = vmatpush1.bf16.msra.mxu0 0
      %1115 = vmatprep.subr.bf16.mxu0 0
      %1116 = vmatpush1.bf16.msra.mxu0 0
      %1117 = vmatprep.subr.bf16.mxu0 0
      %1118 = vmatpush1.bf16.msra.mxu0 0
      %1119 = vmatprep.subr.bf16.mxu0 0
      %1120 = vmatpush1.bf16.msra.mxu0 0
      %1121 = vmatprep.subr.bf16.mxu0 0
      %1122 = vmatpush1.bf16.msra.mxu0 0
      %1123 = vmatprep.subr.bf16.mxu0 0
      %1124 = vmatpush1.bf16.msra.mxu0 0
      %1125 = vmatprep.subr.bf16.mxu0 0
      %1126 = vmatpush1.bf16.msra.mxu0 0
      %1127 = vmatprep.subr.bf16.mxu0 0
      %1128 = vmatpush1.bf16.msra.mxu0 %v1108
      %1129 = vmatprep.subr.bf16.mxu0 0
      %1130 = vmatpush2.bf16.msra.mxu0 0
      %1131 = vmatprep.subr.bf16.mxu0 0
      %1132 = vmatpush2.bf16.msra.mxu0 0
      %1133 = vmatprep.subr.bf16.mxu0 0
      %1134 = vmatpush2.bf16.msra.mxu0 0
      %1135 = vmatprep.subr.bf16.mxu0 0
      %1136 = vmatpush2.bf16.msra.mxu0 0
      %1137 = vmatprep.subr.bf16.mxu0 0
      %1138 = vmatpush2.bf16.msra.mxu0 0
      %1139 = vmatprep.subr.bf16.mxu0 0
      %1140 = vmatpush2.bf16.msra.mxu0 0
      %1141 = vmatprep.subr.bf16.mxu0 0
      %1142 = vmatpush2.bf16.msra.mxu0 0
      %1143 = vmatprep.subr.bf16.mxu0 0
      %1144 = vmatpush2.bf16.msra.mxu0 0
      %1145 = vmatprep.mubr.bf16.mxu0 0
      %1146 = vmatmul.mubr.bf16.gmra.mxu0 %v1111
      %v1147 = vpop.f32.mrf.mxu0
      %v1148 = vadd.f32 0.0, %v1147
      %v1149 = vpop.f32.mrf.mxu0
      %v1150 = vpop.f32.mrf.mxu0
      %v1151 = vadd.f32 0.0, %v1150
      %v1152 = vpop.f32.mrf.mxu0
      %1153 = vdwg.mxu0
      %1154 = vrot.lane.b32.xlu0 %v777, 104
      %v1155 = vpop.permute.xlu0 %1154
      %1156 = vrot.lane.b32.xlu0 %v777, 72
      %v1157 = vpop.permute.xlu0 %1156
      %v1159 = vsel %vm781, %v1155, 0
      %v1162 = vsel %vm781, %v1157, 0
      %1164 = vmatprep.subr.bf16.mxu0 0
      %1165 = vmatpush1.bf16.xpose.msra.mxu0 0
      %1166 = vmatprep.subr.bf16.mxu0 0
      %1167 = vmatpush1.bf16.xpose.msra.mxu0 0
      %1168 = vmatprep.subr.bf16.mxu0 0
      %1169 = vmatpush1.bf16.xpose.msra.mxu0 0
      %1170 = vmatprep.subr.bf16.mxu0 0
      %1171 = vmatpush1.bf16.xpose.msra.mxu0 0
      %1172 = vmatprep.subr.bf16.mxu0 0
      %1173 = vmatpush1.bf16.xpose.msra.mxu0 0
      %1174 = vmatprep.subr.bf16.mxu0 0
      %1175 = vmatpush1.bf16.xpose.msra.mxu0 0
      %1176 = vmatprep.subr.bf16.mxu0 0
      %1177 = vmatpush1.bf16.xpose.msra.mxu0 0
      %1178 = vmatprep.subr.bf16.mxu0 0
      %1179 = vmatpush1.bf16.xpose.msra.mxu0 %v1162
      %1180 = vmatprep.subr.bf16.mxu0 0
      %1181 = vmatpush2.bf16.xpose.msra.mxu0 0
      %1182 = vmatprep.subr.bf16.mxu0 0
      %1183 = vmatpush2.bf16.xpose.msra.mxu0 0
      %1184 = vmatprep.subr.bf16.mxu0 0
      %1185 = vmatpush2.bf16.xpose.msra.mxu0 0
      %1186 = vmatprep.subr.bf16.mxu0 0
      %1187 = vmatpush2.bf16.xpose.msra.mxu0 0
      %1188 = vmatprep.subr.bf16.mxu0 0
      %1189 = vmatpush2.bf16.xpose.msra.mxu0 0
      %1190 = vmatprep.subr.bf16.mxu0 0
      %1191 = vmatpush2.bf16.xpose.msra.mxu0 0
      %1192 = vmatprep.subr.bf16.mxu0 0
      %1193 = vmatpush2.bf16.xpose.msra.mxu0 0
      %1194 = vmatprep.subr.bf16.mxu0 0
      %1195 = vmatpush2.bf16.xpose.msra.mxu0 0
      %1196 = vmatprep.mubr.bf16.mxu0 0
      %1197 = vmatmul.mubr.bf16.gmra.mxu0 %v1159
      %v1198 = vpop.f32.mrf.mxu0
      %v1199 = vadd.f32 0.0, %v1198
      %v1200 = vpop.f32.mrf.mxu0
      %v1201 = vpop.f32.mrf.mxu0
      %v1202 = vadd.f32 0.0, %v1201
      %v1203 = vpop.f32.mrf.mxu0
      %1204 = vdwg.mxu0
      %v1205 = vmul.f32 %v1199, 0.35355338
      %v1206 = vmul.f32 %v1202, 0.35355338
      %v1207 = vsel %vm776, -1e+30, %v1205
      %v1208 = vsel %vm776, -1e+30, %v1206
      %v1209 = vsel %vm833, %v1207, -inf
      %1210 = vmax.xlane.f32.xlu0 %v1209
      %v1211 = vpop.xlane.xlu0 %1210
      %v1212 = vsel %vm833, %v1208, -inf
      %1213 = vmax.xlane.f32.xlu0 %v1212
      %v1214 = vpop.xlane.xlu0 %1213
      %v1215 = vsub.f32 %v1207, %v1211
      %v1216 = vsub.f32 %v1208, %v1214
      %v1217 = vmul.f32 %v1215, 1.442695
      %v1218 = vpow.pop %v1217
      %v1219 = vmul.f32 %v1216, 1.442695
      %v1220 = vpow.pop %v1219
      %v1221 = vsel %vm833, %v1218, 0.0
      %1222 = vadd.xlane.f32.xlu0 %v1221
      %v1223 = vpop.xlane.xlu0 %1222
      %v1224 = vsel %vm833, %v1220, 0.0
      %1225 = vadd.xlane.f32.xlu0 %v1224
      %v1226 = vpop.xlane.xlu0 %1225
      %v1227 = vrcp.pop %v1223
      %v1228 = vrcp.pop %v1226
      %v1229 = vmul.f32 %v1218, %v1227
      %v1230 = vmul.f32 %v1220, %v1228
      %v1231 = vpack.c.bf16 %v1230, %v1229
      %1232 = vrot.lane.b32.xlu0 %v777, 40
      %v1233 = vpop.permute.xlu0 %1232
      %v1236 = vsel %vm833, %v1231, 0
      %1238 = vmatprep.subr.bf16.mxu0 0
      %1239 = vmatpush1.bf16.msra.mxu0 0
      %1240 = vmatprep.subr.bf16.mxu0 0
      %1241 = vmatpush1.bf16.msra.mxu0 0
      %1242 = vmatprep.subr.bf16.mxu0 0
      %1243 = vmatpush1.bf16.msra.mxu0 0
      %1244 = vmatprep.subr.bf16.mxu0 0
      %1245 = vmatpush1.bf16.msra.mxu0 0
      %1246 = vmatprep.subr.bf16.mxu0 0
      %1247 = vmatpush1.bf16.msra.mxu0 0
      %1248 = vmatprep.subr.bf16.mxu0 0
      %1249 = vmatpush1.bf16.msra.mxu0 0
      %1250 = vmatprep.subr.bf16.mxu0 0
      %1251 = vmatpush1.bf16.msra.mxu0 0
      %1252 = vmatprep.subr.bf16.mxu0 0
      %1253 = vmatpush1.bf16.msra.mxu0 %v1233
      %1254 = vmatprep.subr.bf16.mxu0 0
      %1255 = vmatpush2.bf16.msra.mxu0 0
      %1256 = vmatprep.subr.bf16.mxu0 0
      %1257 = vmatpush2.bf16.msra.mxu0 0
      %1258 = vmatprep.subr.bf16.mxu0 0
      %1259 = vmatpush2.bf16.msra.mxu0 0
      %1260 = vmatprep.subr.bf16.mxu0 0
      %1261 = vmatpush2.bf16.msra.mxu0 0
      %1262 = vmatprep.subr.bf16.mxu0 0
      %1263 = vmatpush2.bf16.msra.mxu0 0
      %1264 = vmatprep.subr.bf16.mxu0 0
      %1265 = vmatpush2.bf16.msra.mxu0 0
      %1266 = vmatprep.subr.bf16.mxu0 0
      %1267 = vmatpush2.bf16.msra.mxu0 0
      %1268 = vmatprep.subr.bf16.mxu0 0
      %1269 = vmatpush2.bf16.msra.mxu0 0
      %1270 = vmatprep.mubr.bf16.mxu0 0
      %1271 = vmatmul.mubr.bf16.gmra.mxu0 %v1236
      %v1272 = vpop.f32.mrf.mxu0
      %v1273 = vadd.f32 0.0, %v1272
      %v1274 = vpop.f32.mrf.mxu0
      %v1275 = vpop.f32.mrf.mxu0
      %v1276 = vadd.f32 0.0, %v1275
      %v1277 = vpop.f32.mrf.mxu0
      %1278 = vdwg.mxu0
      %1281 = vrot.lane.b32.xlu0 %v1023, 8
      %v1282 = vpop.permute.xlu0 %1281
      %1283 = vrot.lane.b32.xlu0 %v1026, 8
      %v1284 = vpop.permute.xlu0 %1283
      %1289 = vrot.lane.b32.xlu0 %v1148, 16
      %v1290 = vpop.permute.xlu0 %1289
      %1291 = vrot.lane.b32.xlu0 %v1151, 16
      %v1292 = vpop.permute.xlu0 %1291
      %1297 = vrot.lane.b32.xlu0 %v1273, 24
      %v1298 = vpop.permute.xlu0 %1297
      %1299 = vrot.lane.b32.xlu0 %v1276, 24
      %v1300 = vpop.permute.xlu0 %1299
      %v1303 = vsel %vm781, %v898, %v1282
      %v1304 = vsel %vm781, %v901, %v1284
      %v1305 = vsel %vm833, %v1303, %v1290
      %v1306 = vsel %vm833, %v1304, %v1292
      %vm1307 = vcmask 195584
      %v1308 = vsel %vm1307, %v1305, %v1298
      %v1309 = vsel %vm1307, %v1306, %v1300
      %v1310 = vld [vmem:[%s620] sm:$0xf]
      %v1311 = vld [vmem:[%s620 + $0x4] sm:$0xf]
      %v1312 = vld [vmem:[%s620 + $0x8] sm:$0xf]
      %v1313 = vld [vmem:[%s620 + $0xc] sm:$0xf]
      %v1314 = vpack.c.bf16 %v1309, %v1308
      %v1315 = vld [vmem:[%s623] sm:$0x1]
      %v1317 = vlaneseq
      %v1318 = vshrl.u32 %v1317, 7
      %v1319 = vsub.s32 0, %v1318
      %v1320 = vrot.slane %v1315, %v1319
      %v1326 = vunpack.c.l.b16 %v1310
      %v1327 = vunpack.c.l.b16 %v1311
      %v1328 = vunpack.c.l.b16 %v1312
      %v1329 = vunpack.c.l.b16 %v1313
      %v1330 = vpack.c.b16 %v1327, %v1326
      %v1331 = vpack.c.b16 %v1329, %v1328
      %v1335 = vsel %vm669, %v1314, 0
      %1337 = vmatprep.subr.bf16.mxu0 0
      %1338 = vmatpush1.bf16.msra.mxu0 0
      %1339 = vmatprep.subr.bf16.mxu0 0
      %1340 = vmatpush1.bf16.msra.mxu0 0
      %1341 = vmatprep.subr.bf16.mxu0 0
      %1342 = vmatpush1.bf16.msra.mxu0 0
      %1343 = vmatprep.subr.bf16.mxu0 0
      %1344 = vmatpush1.bf16.msra.mxu0 0
      %1345 = vmatprep.subr.bf16.mxu0 0
      %1346 = vmatpush1.bf16.msra.mxu0 0
      %1347 = vmatprep.subr.bf16.mxu0 0
      %1348 = vmatpush1.bf16.msra.mxu0 0
      %1349 = vmatprep.subr.bf16.mxu0 0
      %1350 = vmatpush1.bf16.msra.mxu0 %v1331
      %1351 = vmatprep.subr.bf16.mxu0 0
      %1352 = vmatpush1.bf16.msra.mxu0 %v1330
      %1353 = vmatprep.subr.bf16.mxu0 0
      %1354 = vmatpush2.bf16.msra.mxu0 0
      %1355 = vmatprep.subr.bf16.mxu0 0
      %1356 = vmatpush2.bf16.msra.mxu0 0
      %1357 = vmatprep.subr.bf16.mxu0 0
      %1358 = vmatpush2.bf16.msra.mxu0 0
      %1359 = vmatprep.subr.bf16.mxu0 0
      %1360 = vmatpush2.bf16.msra.mxu0 0
      %1361 = vmatprep.subr.bf16.mxu0 0
      %1362 = vmatpush2.bf16.msra.mxu0 0
      %1363 = vmatprep.subr.bf16.mxu0 0
      %1364 = vmatpush2.bf16.msra.mxu0 0
      %1365 = vmatprep.subr.bf16.mxu0 0
      %1366 = vmatpush2.bf16.msra.mxu0 0
      %1367 = vmatprep.subr.bf16.mxu0 0
      %1368 = vmatpush2.bf16.msra.mxu0 0
      %1369 = vmatprep.mubr.bf16.mxu0 0
      %1370 = vmatmul.mubr.bf16.gmra.mxu0 %v1335
      %v1371 = vpop.f32.mrf.mxu0
      %v1372 = vadd.f32 %v1320, %v1371
      %v1373 = vpop.f32.mrf.mxu0
      %v1374 = vpop.f32.mrf.mxu0
      %v1375 = vadd.f32 %v1320, %v1374
      %v1376 = vpop.f32.mrf.mxu0
      %1377 = vdwg.mxu0
      %v1378 = vadd.f32 %v665, %v1372
      %v1379 = vadd.f32 %v666, %v1375
      %v1380 = vld [vmem:[%s626] sm:$0x1]
      %v1381 = vld [vmem:[%s629] sm:$0x1]
      %v1382 = vsel %vm669, %v1378, 0.0
      %1383 = vadd.xlane.f32.xlu0 %v1382
      %v1384 = vpop.xlane.xlu0 %1383
      %v1385 = vsel %vm669, %v1379, 0.0
      %1386 = vadd.xlane.f32.xlu0 %v1385
      %v1387 = vpop.xlane.xlu0 %1386
      %v1388 = vmul.f32 %v1384, %v676
      %v1389 = vmul.f32 %v1387, %v676
      %v1390 = vsub.f32 %v1378, %v1388
      %v1391 = vsub.f32 %v1379, %v1389
      %v1392 = vmul.f32 %v1390, %v1390
      %v1393 = vmul.f32 %v1391, %v1391
      %v1394 = vsel %vm669, %v1392, 0.0
      %1395 = vadd.xlane.f32.xlu0 %v1394
      %v1396 = vpop.xlane.xlu0 %1395
      %v1397 = vsel %vm669, %v1393, 0.0
      %1398 = vadd.xlane.f32.xlu0 %v1397
      %v1399 = vpop.xlane.xlu0 %1398
      %v1400 = vmul.f32 %v1396, %v676
      %v1401 = vmul.f32 %v1399, %v676
      %v1402 = vadd.f32 %v1400, 1e-05
      %v1403 = vadd.f32 %v1401, 1e-05
      %v1404 = vrsqrt.pop %v1402
      %v1405 = vrsqrt.pop %v1403
      %v1406 = vmul.f32 %v1390, %v1404
      %v1407 = vmul.f32 %v1391, %v1405
      %v1409 = vlaneseq
      %v1410 = vshrl.u32 %v1409, 7
      %v1411 = vsub.s32 0, %v1410
      %v1412 = vrot.slane %v1380, %v1411
      %v1414 = vmul.f32 %v1406, %v1412
      %v1415 = vmul.f32 %v1407, %v1412
      %v1417 = vlaneseq
      %v1418 = vshrl.u32 %v1417, 7
      %v1419 = vsub.s32 0, %v1418
      %v1420 = vrot.slane %v1381, %v1419
      %v1422 = vadd.f32 %v1414, %v1420
      %v1423 = vadd.f32 %v1415, %v1420
      %v1424 = vld [vmem:[%s634] sm:$0xf]
      %v1425 = vld [vmem:[%s634 + $0x4] sm:$0xf]
      %v1426 = vld [vmem:[%s634 + $0x8] sm:$0xf]
      %v1427 = vld [vmem:[%s634 + $0xc] sm:$0xf]
      %v1428 = vpack.c.bf16 %v1423, %v1422
      %v1429 = vld [vmem:[%s637] sm:$0x1]
      %v1431 = vlaneseq
      %v1432 = vshrl.u32 %v1431, 7
      %v1433 = vsub.s32 0, %v1432
      %v1434 = vrot.slane %v1429, %v1433
      %v1440 = vunpack.c.l.b16 %v1424
      %v1441 = vunpack.c.l.b16 %v1425
      %v1442 = vunpack.c.l.b16 %v1426
      %v1443 = vunpack.c.l.b16 %v1427
      %v1444 = vpack.c.b16 %v1441, %v1440
      %v1445 = vpack.c.b16 %v1443, %v1442
      %v1449 = vsel %vm669, %v1428, 0
      %1451 = vmatprep.subr.bf16.mxu0 0
      %1452 = vmatpush1.bf16.msra.mxu0 0
      %1453 = vmatprep.subr.bf16.mxu0 0
      %1454 = vmatpush1.bf16.msra.mxu0 0
      %1455 = vmatprep.subr.bf16.mxu0 0
      %1456 = vmatpush1.bf16.msra.mxu0 0
      %1457 = vmatprep.subr.bf16.mxu0 0
      %1458 = vmatpush1.bf16.msra.mxu0 0
      %1459 = vmatprep.subr.bf16.mxu0 0
      %1460 = vmatpush1.bf16.msra.mxu0 0
      %1461 = vmatprep.subr.bf16.mxu0 0
      %1462 = vmatpush1.bf16.msra.mxu0 0
      %1463 = vmatprep.subr.bf16.mxu0 0
      %1464 = vmatpush1.bf16.msra.mxu0 %v1445
      %1465 = vmatprep.subr.bf16.mxu0 0
      %1466 = vmatpush1.bf16.msra.mxu0 %v1444
      %1467 = vmatprep.subr.bf16.mxu0 0
      %1468 = vmatpush2.bf16.msra.mxu0 0
      %1469 = vmatprep.subr.bf16.mxu0 0
      %1470 = vmatpush2.bf16.msra.mxu0 0
      %1471 = vmatprep.subr.bf16.mxu0 0
      %1472 = vmatpush2.bf16.msra.mxu0 0
      %1473 = vmatprep.subr.bf16.mxu0 0
      %1474 = vmatpush2.bf16.msra.mxu0 0
      %1475 = vmatprep.subr.bf16.mxu0 0
      %1476 = vmatpush2.bf16.msra.mxu0 0
      %1477 = vmatprep.subr.bf16.mxu0 0
      %1478 = vmatpush2.bf16.msra.mxu0 0
      %1479 = vmatprep.subr.bf16.mxu0 0
      %1480 = vmatpush2.bf16.msra.mxu0 0
      %1481 = vmatprep.subr.bf16.mxu0 0
      %1482 = vmatpush2.bf16.msra.mxu0 0
      %1483 = vmatprep.mubr.bf16.mxu0 0
      %1484 = vmatmul.mubr.bf16.gmra.mxu0 %v1449
      %v1485 = vpop.f32.mrf.mxu0
      %v1486 = vadd.f32 %v1434, %v1485
      %v1487 = vpop.f32.mrf.mxu0
      %v1488 = vpop.f32.mrf.mxu0
      %v1489 = vadd.f32 %v1434, %v1488
      %v1490 = vpop.f32.mrf.mxu0
      %1491 = vdwg.mxu0
      %v1492 = vmul.f32 %v1486, %v1486
      %v1493 = vmul.f32 %v1489, %v1489
      %v1494 = vmul.f32 %v1486, %v1492
      %v1495 = vmul.f32 %v1489, %v1493
      %v1496 = vmul.f32 %v1494, 0.044715
      %v1497 = vmul.f32 %v1495, 0.044715
      %v1498 = vadd.f32 %v1486, %v1496
      %v1499 = vadd.f32 %v1489, %v1497
      %v1500 = vmul.f32 %v1498, 0.7978846
      %v1501 = vmul.f32 %v1499, 0.7978846
      %v1502 = vtanh.pop %v1500
      %v1503 = vtanh.pop %v1501
      %v1504 = vadd.f32 %v1502, 1.0
      %v1505 = vadd.f32 %v1503, 1.0
      %v1506 = vmul.f32 %v1504, 0.5
      %v1507 = vmul.f32 %v1505, 0.5
      %v1508 = vmul.f32 %v1486, %v1506
      %v1509 = vmul.f32 %v1489, %v1507
      %v1510 = vld [vmem:[%s642] sm:$0xf]
      %v1511 = vld [vmem:[%s642 + $0x4] sm:$0xf]
      %v1512 = vld [vmem:[%s642 + $0x8] sm:$0xf]
      %v1513 = vld [vmem:[%s642 + $0xc] sm:$0xf]
      %v1514 = vld [vmem:[%s642 + $0x10] sm:$0xf]
      %v1515 = vld [vmem:[%s642 + $0x14] sm:$0xf]
      %v1516 = vld [vmem:[%s642 + $0x18] sm:$0xf]
      %v1517 = vld [vmem:[%s642 + $0x1c] sm:$0xf]
      %v1518 = vld [vmem:[%s642 + $0x20] sm:$0xf]
      %v1519 = vld [vmem:[%s642 + $0x24] sm:$0xf]
      %v1520 = vld [vmem:[%s642 + $0x28] sm:$0xf]
      %v1521 = vld [vmem:[%s642 + $0x2c] sm:$0xf]
      %v1522 = vld [vmem:[%s642 + $0x30] sm:$0xf]
      %v1523 = vld [vmem:[%s642 + $0x34] sm:$0xf]
      %v1524 = vld [vmem:[%s642 + $0x38] sm:$0xf]
      %v1525 = vld [vmem:[%s642 + $0x3c] sm:$0xf]
      %v1526 = vpack.c.bf16 %v1509, %v1508
      %v1527 = vld [vmem:[%s645] sm:$0x1]
      %v1529 = vlaneseq
      %v1530 = vshrl.u32 %v1529, 7
      %v1531 = vsub.s32 0, %v1530
      %v1532 = vrot.slane %v1527, %v1531
      %v1550 = vunpack.c.l.b16 %v1510
      %v1551 = vunpack.c.l.b16 %v1511
      %v1552 = vunpack.c.l.b16 %v1512
      %v1553 = vunpack.c.l.b16 %v1513
      %v1554 = vunpack.c.l.b16 %v1514
      %v1555 = vunpack.c.l.b16 %v1515
      %v1556 = vunpack.c.l.b16 %v1516
      %v1557 = vunpack.c.l.b16 %v1517
      %v1558 = vunpack.c.l.b16 %v1518
      %v1559 = vunpack.c.l.b16 %v1519
      %v1560 = vunpack.c.l.b16 %v1520
      %v1561 = vunpack.c.l.b16 %v1521
      %v1562 = vunpack.c.l.b16 %v1522
      %v1563 = vunpack.c.l.b16 %v1523
      %v1564 = vunpack.c.l.b16 %v1524
      %v1565 = vunpack.c.l.b16 %v1525
      %v1566 = vpack.c.b16 %v1551, %v1550
      %v1567 = vpack.c.b16 %v1553, %v1552
      %v1568 = vpack.c.b16 %v1555, %v1554
      %v1569 = vpack.c.b16 %v1557, %v1556
      %v1570 = vpack.c.b16 %v1559, %v1558
      %v1571 = vpack.c.b16 %v1561, %v1560
      %v1572 = vpack.c.b16 %v1563, %v1562
      %v1573 = vpack.c.b16 %v1565, %v1564
      %1582 = vmatprep.subr.bf16.mxu0 0
      %1583 = vmatpush1.bf16.msra.mxu0 %v1573
      %1584 = vmatprep.subr.bf16.mxu0 0
      %1585 = vmatpush1.bf16.msra.mxu0 %v1572
      %1586 = vmatprep.subr.bf16.mxu0 0
      %1587 = vmatpush1.bf16.msra.mxu0 %v1571
      %1588 = vmatprep.subr.bf16.mxu0 0
      %1589 = vmatpush1.bf16.msra.mxu0 %v1570
      %1590 = vmatprep.subr.bf16.mxu0 0
      %1591 = vmatpush1.bf16.msra.mxu0 %v1569
      %1592 = vmatprep.subr.bf16.mxu0 0
      %1593 = vmatpush1.bf16.msra.mxu0 %v1568
      %1594 = vmatprep.subr.bf16.mxu0 0
      %1595 = vmatpush1.bf16.msra.mxu0 %v1567
      %1596 = vmatprep.subr.bf16.mxu0 0
      %1597 = vmatpush1.bf16.msra.mxu0 %v1566
      %1598 = vmatprep.subr.bf16.mxu0 0
      %1599 = vmatpush2.bf16.msra.mxu0 0
      %1600 = vmatprep.subr.bf16.mxu0 0
      %1601 = vmatpush2.bf16.msra.mxu0 0
      %1602 = vmatprep.subr.bf16.mxu0 0
      %1603 = vmatpush2.bf16.msra.mxu0 0
      %1604 = vmatprep.subr.bf16.mxu0 0
      %1605 = vmatpush2.bf16.msra.mxu0 0
      %1606 = vmatprep.subr.bf16.mxu0 0
      %1607 = vmatpush2.bf16.msra.mxu0 0
      %1608 = vmatprep.subr.bf16.mxu0 0
      %1609 = vmatpush2.bf16.msra.mxu0 0
      %1610 = vmatprep.subr.bf16.mxu0 0
      %1611 = vmatpush2.bf16.msra.mxu0 0
      %1612 = vmatprep.subr.bf16.mxu0 0
      %1613 = vmatpush2.bf16.msra.mxu0 0
      %1614 = vmatprep.mubr.bf16.mxu0 0
      %1615 = vmatmul.mubr.bf16.gmra.mxu0 %v1526
      %v1616 = vpop.f32.mrf.mxu0
      %v1617 = vadd.f32 %v1532, %v1616
      %v1618 = vpop.f32.mrf.mxu0
      %v1619 = vpop.f32.mrf.mxu0
      %v1620 = vadd.f32 %v1532, %v1619
      %v1621 = vpop.f32.mrf.mxu0
      %1622 = vdwg.mxu0
      %v1623 = vadd.f32 %v1378, %v1617
      %v1624 = vadd.f32 %v1379, %v1620
      %1625 = vst.msk [vmem:[%s650] sm:$0xff] %vm669, %v1623
      %1626 = vst.msk [vmem:[%s650 + $0x8] sm:$0xff] %vm669, %v1624
      %p1627 = scmp.lt.s32.totalorder %s28, 1
      %s1628 = scalar_select %p1627, %s28, 1
      %s1629 = smul.addr %s1628, 2
      %s1630 = smul.addr %s1629, 8
      %s1631 = scalar_lea.vmem %s13, %s1630
      // Predicated region
      $region77: #{forward.6} parent=71 // pred_check
        %p1632 = pneg %p392
      $region78: #{forward.6} parent=71 // pred_check_branch
        %1634 = sbr.rel (%p1632) target = $region80
      $region79: #{forward.6} parent=71 // pred_region
        _
      $region80: #{forward.6} parent=71 // pred_fallthru
        _
    $region72: #{forward.6} parent=5 // pred_fallthru
      _
    %p1635 = scmp.le.s32.totalorder 2, %s19
    // Predicated region
    $region81: #{forward.6} parent=5 // pred_check
      %p1636 = pneg %p1635
    $region82: #{forward.6} parent=5 // pred_check_branch
      %1638 = sbr.rel (%p1636) target = $region84
    $region83: #{forward.6} parent=5 // pred_region
      %s1639 = ssub.s32 %s19, 2
      // Predicated region
      $region85: #{forward.6} parent=83 // pred_check
        %p1640 = pneg %p398
      $region86: #{forward.6} parent=83 // pred_check_branch
        %1642 = sbr.rel (%p1640) target = $region88
      $region87: #{forward.6} parent=83 // pred_region
        %p1643 = scmp.lt.s32.totalorder %s30, 1
        %s1644 = scalar_select %p1643, %s30, 1
        %s1645 = smul.addr %s1644, 2
        %s1646 = smul.addr %s1645, 8
        %s1647 = scalar_lea.vmem %s13, %s1646
      $region88: #{forward.6} parent=83 // pred_fallthru
        _
    $region84: #{forward.6} parent=5 // pred_fallthru
      _
  $region6: #{forward.6} parent=0 // loop_footer
    %s23 = sadd.s32 1, %s19
  $region7: #{forward.6} parent=0 // loop_footer_branch
    %18 = sbr.rel target = $region3
  $region8: #{forward.6} parent=0 // loop_exit
    _

</llo_original>
